<compile_context>
chip_gen: v6e
topology: v6e:2x2x1
jax: 0.10.0
libtpu: 0.0.40
codegen_flags: <defaults>
</compile_context>

<pallas_src>
from functools import partial

import jax
import jax.numpy as jnp
from jax.experimental import pallas as pl
from jax.experimental.pallas import tpu as pltpu


# ----------------------------------------------------------------------------
# Pallas kernel: one pre-LN transformer block for one sequence per grid step.
# ----------------------------------------------------------------------------
def _transformer_block_kernel(x_ref, ln1w_ref, ln1b_ref, wqkv_ref, bqkv_ref,
                              wo_ref, bo_ref, ln2w_ref, ln2b_ref, wfc_ref,
                              bfc_ref, wproj_ref, bproj_ref, o_ref,
                              *, n_head, eps):
    x = x_ref[0]                               # (L, D) tokens of one sequence
    L, D = x.shape
    hd = D // n_head

    def layer_norm(t, w, b):
        mu = jnp.mean(t, axis=-1, keepdims=True)
        var = jnp.mean(jnp.square(t - mu), axis=-1, keepdims=True)
        return (t - mu) * jax.lax.rsqrt(var + eps) * w + b

    # ---- attention branch ---------------------------------------------------
    h = layer_norm(x, ln1w_ref[...], ln1b_ref[...])
    # fused QKV projection; q already scaled by head_dim**-0.5 (folded on host)
    qkv = jnp.dot(h, wqkv_ref[...], preferred_element_type=jnp.float32) + bqkv_ref[...]
    q = qkv[:, :D]
    k = qkv[:, D:2 * D]
    v = qkv[:, 2 * D:]

    # head-major stacks: (H, L, hd)
    qh = jnp.stack([q[:, i * hd:(i + 1) * hd] for i in range(n_head)], axis=0)
    kh = jnp.stack([k[:, i * hd:(i + 1) * hd] for i in range(n_head)], axis=0)
    vh = jnp.stack([v[:, i * hd:(i + 1) * hd] for i in range(n_head)], axis=0)

    # batched scores + stable softmax + batched context (all heads at once)
    s = jnp.einsum('hqd,hkd->hqk', qh, kh, preferred_element_type=jnp.float32)
    s = s - jnp.max(s, axis=-1, keepdims=True)
    p = jnp.exp(s)
    p = p * (1.0 / jnp.sum(p, axis=-1, keepdims=True))
    ctx = jnp.einsum('hqk,hkd->hqd', p, vh, preferred_element_type=jnp.float32)
    ctx = jnp.concatenate([ctx[i] for i in range(n_head)], axis=-1)   # (L, D)

    # out-projection; the residual gate tanh(alpha_attn) is folded into wo/bo
    x1 = x + jnp.dot(ctx, wo_ref[...], preferred_element_type=jnp.float32) + bo_ref[...]

    # ---- MLP branch ----------------------------------------------------------
    h2 = layer_norm(x1, ln2w_ref[...], ln2b_ref[...])
    ff = jnp.dot(h2, wfc_ref[...], preferred_element_type=jnp.float32) + bfc_ref[...]
    ff = ff * jax.nn.sigmoid(1.702 * ff)        # QuickGELU
    out = x1 + jnp.dot(ff, wproj_ref[...], preferred_element_type=jnp.float32) + bproj_ref[...]

    o_ref[0] = out


def _run_block(x_lnd, bp, n_head, gate_attn=None, gate_mlp=None, eps=1e-12):
    """Apply one (optionally gated) pre-LN transformer block. x_lnd: (L, N, D)."""
    L, N, D = x_lnd.shape
    Dff = bp["fc_w"].shape[0]
    hd = D // n_head
    scale = hd ** -0.5

    # (L, N, D) -> (N, L, D): batch-major so the grid parallelizes over sequences.
    x_nld = jnp.transpose(x_lnd, (1, 0, 2)).astype(jnp.float32)

    ga = jnp.float32(1.0) if gate_attn is None else jnp.asarray(gate_attn, jnp.float32)
    gm = jnp.float32(1.0) if gate_mlp is None else jnp.asarray(gate_mlp, jnp.float32)

    # One-time host-side weight prep: pre-transpose, fold q-scale, fold gates.
    w_in = bp["in_proj_weight"].astype(jnp.float32)            # (3D, D)
    b_in = bp["in_proj_bias"].astype(jnp.float32)              # (3D,)
    qscale = jnp.concatenate([jnp.full((D,), scale, jnp.float32),
                              jnp.ones((2 * D,), jnp.float32)])
    wqkv_t = (w_in * qscale[:, None]).T                        # (D, 3D)
    bqkv = (b_in * qscale).reshape(1, 3 * D)
    wo_t = (ga * bp["out_proj_weight"].astype(jnp.float32)).T  # (D, D)
    bo = (ga * bp["out_proj_bias"].astype(jnp.float32)).reshape(1, D)
    wfc_t = bp["fc_w"].astype(jnp.float32).T                   # (D, Dff)
    bfc = bp["fc_b"].astype(jnp.float32).reshape(1, Dff)
    wproj_t = (gm * bp["proj_w"].astype(jnp.float32)).T        # (Dff, D)
    bproj = (gm * bp["proj_b"].astype(jnp.float32)).reshape(1, D)
    ln1w = bp["ln1_w"].astype(jnp.float32).reshape(1, D)
    ln1b = bp["ln1_b"].astype(jnp.float32).reshape(1, D)
    ln2w = bp["ln2_w"].astype(jnp.float32).reshape(1, D)
    ln2b = bp["ln2_b"].astype(jnp.float32).reshape(1, D)

    args = (x_nld, ln1w, ln1b, wqkv_t, bqkv, wo_t, bo, ln2w, ln2b,
            wfc_t, bfc, wproj_t, bproj)

    flops = int(2 * N * L * (3 * D * D + 2 * L * D + D * D + 2 * D * Dff))
    transcendentals = int(N * (n_head * L * L + L * Dff + 2 * L))
    bytes_accessed = int(sum(a.size for a in args) * 4 + N * L * D * 4)

    full2d = lambda n: (0, 0)
    out = pl.pallas_call(
        partial(_transformer_block_kernel, n_head=n_head, eps=eps),
        out_shape=jax.ShapeDtypeStruct((N, L, D), jnp.float32),
        grid=(N,),
        in_specs=[
            pl.BlockSpec((1, L, D), lambda n: (n, 0, 0)),   # tokens of one sequence
            pl.BlockSpec((1, D), full2d),                   # ln1 weight
            pl.BlockSpec((1, D), full2d),                   # ln1 bias
            pl.BlockSpec((D, 3 * D), full2d),               # fused QKV weight (pre-T)
            pl.BlockSpec((1, 3 * D), full2d),               # fused QKV bias
            pl.BlockSpec((D, D), full2d),                   # out_proj weight (pre-T, gated)
            pl.BlockSpec((1, D), full2d),                   # out_proj bias (gated)
            pl.BlockSpec((1, D), full2d),                   # ln2 weight
            pl.BlockSpec((1, D), full2d),                   # ln2 bias
            pl.BlockSpec((D, Dff), full2d),                 # c_fc weight (pre-T)
            pl.BlockSpec((1, Dff), full2d),                 # c_fc bias
            pl.BlockSpec((Dff, D), full2d),                 # c_proj weight (pre-T, gated)
            pl.BlockSpec((1, D), full2d),                   # c_proj bias (gated)
        ],
        out_specs=pl.BlockSpec((1, L, D), lambda n: (n, 0, 0)),
        compiler_params=pltpu.CompilerParams(
            dimension_semantics=("parallel",),
            vmem_limit_bytes=32 * 1024 * 1024),
        cost_estimate=pl.CostEstimate(flops=flops, transcendentals=transcendentals,
                                      bytes_accessed=bytes_accessed),
    )(*args)
    return jnp.transpose(out, (1, 0, 2))                    # back to (L, N, D)


# ----------------------------------------------------------------------------
# Module-level wrapper: ResidualAttentionRCPBlock.forward
# ----------------------------------------------------------------------------
def residual_attention_rcp_block(x, params, n_head, mode, num_prompt_tokens=0):
    """x: (L, N, d_model) float32, sequence-first (PyTorch MultiheadAttention layout)."""
    if mode == "gated_attn":
        gp = params["gated"]
        # GatedResidualAttentionBlock with the default cfg: d_block == d_model,
        # USE_FFN=True, GUMBEL_SAMPLE=False (prob_gate == 1), DropPath == identity.
        x = _run_block(x, gp, n_head,
                       gate_attn=jnp.tanh(gp["alpha_attn"]),
                       gate_mlp=jnp.tanh(gp["alpha_dense"]))
    elif mode == "prompt_tuning":
        P = num_prompt_tokens
        prompts = jnp.broadcast_to(params["prompt_embeddings"].astype(jnp.float32),
                                   (P, x.shape[1], x.shape[2]))
        x = jnp.concatenate([x[:1], prompts, x[1:]], axis=0)
    else:
        raise ValueError(f"Unknown rcp block mode: {mode}")
    x = _run_block(x, params["main"], n_head)
    if mode == "prompt_tuning":
        x = jnp.concatenate([x[:1], x[1 + num_prompt_tokens:]], axis=0)
    return x


# ----------------------------------------------------------------------------
# Pure-JAX reference mirroring the PyTorch module
# ----------------------------------------------------------------------------
def _ln_ref(x, w, b, eps=1e-12):
    u = x.mean(-1, keepdims=True)
    s = ((x - u) ** 2).mean(-1, keepdims=True)
    return w * ((x - u) / jnp.sqrt(s + eps)) + b


def _mha_ref(x, p, n_head):
    L, N, D = x.shape
    hd = D // n_head
    qkv = x @ p["in_proj_weight"].T + p["in_proj_bias"]
    q, k, v = qkv[..., :D], qkv[..., D:2 * D], qkv[..., 2 * D:]
    q = q * (hd ** -0.5)
    def split(t):  # (L, N, D) -> (N, H, L, hd)
        return t.reshape(L, N, n_head, hd).transpose(1, 2, 0, 3)
    qh, kh, vh = split(q), split(k), split(v)
    a = jax.nn.softmax(jnp.einsum("nhqd,nhkd->nhqk", qh, kh), axis=-1)
    o = jnp.einsum("nhqk,nhkd->nhqd", a, vh).transpose(2, 0, 1, 3).reshape(L, N, D)
    return o @ p["out_proj_weight"].T + p["out_proj_bias"]


def _block_ref(x, p, n_head, gate_attn=1.0, gate_mlp=1.0):
    x = x + gate_attn * _mha_ref(_ln_ref(x, p["ln1_w"], p["ln1_b"]), p, n_head)
    h2 = _ln_ref(x, p["ln2_w"], p["ln2_b"])
    ff = h2 @ p["fc_w"].T + p["fc_b"]
    ff = ff * jax.nn.sigmoid(1.702 * ff)
    return x + gate_mlp * (ff @ p["proj_w"].T + p["proj_b"])


def residual_attention_rcp_block_reference(x, params, n_head, mode, num_prompt_tokens=0):
    if mode == "gated_attn":
        gp = params["gated"]
        x = _block_ref(x, gp, n_head,
                       jnp.tanh(gp["alpha_attn"]), jnp.tanh(gp["alpha_dense"]))
    elif mode == "prompt_tuning":
        P = num_prompt_tokens
        prompts = jnp.broadcast_to(params["prompt_embeddings"], (P, x.shape[1], x.shape[2]))
        x = jnp.concatenate([x[:1], prompts, x[1:]], axis=0)
    x = _block_ref(x, params["main"], n_head)
    if mode == "prompt_tuning":
        x = jnp.concatenate([x[:1], x[1 + num_prompt_tokens:]], axis=0)
    return x


# ----------------------------------------------------------------------------
if __name__ == "__main__":
    # Small shapes consistent with the module: seq L=8, batch N=2, d_model=256,
    # n_head=2 (head_dim=128), mlp_ratio=4, 4 prompt tokens for prompt_tuning.
    L, N, D, H, P = 8, 2, 256, 2, 4
    Dff = 4 * D

    key = jax.random.PRNGKey(0)
    k_main, k_gated, k_prompt, k_x = jax.random.split(key, 4)

    def block_params(k):
        ks = jax.random.split(k, 12)
        return {
            "ln1_w": 1.0 + 0.1 * jax.random.normal(ks[0], (D,), jnp.float32),
            "ln1_b": 0.05 * jax.random.normal(ks[1], (D,), jnp.float32),
            "in_proj_weight": jax.random.normal(ks[2], (3 * D, D), jnp.float32) * D ** -0.5,
            "in_proj_bias": 0.02 * jax.random.normal(ks[3], (3 * D,), jnp.float32),
            "out_proj_weight": jax.random.normal(ks[4], (D, D), jnp.float32) * D ** -0.5,
            "out_proj_bias": 0.02 * jax.random.normal(ks[5], (D,), jnp.float32),
            "ln2_w": 1.0 + 0.1 * jax.random.normal(ks[6], (D,), jnp.float32),
            "ln2_b": 0.05 * jax.random.normal(ks[7], (D,), jnp.float32),
            "fc_w": jax.random.normal(ks[8], (Dff, D), jnp.float32) * D ** -0.5,
            "fc_b": 0.02 * jax.random.normal(ks[9], (Dff,), jnp.float32),
            "proj_w": jax.random.normal(ks[10], (D, Dff), jnp.float32) * Dff ** -0.5,
            "proj_b": 0.02 * jax.random.normal(ks[11], (D,), jnp.float32),
        }

    params = {
        "main": block_params(k_main),
        "gated": dict(block_params(k_gated),
                      alpha_attn=jnp.float32(0.7),
                      alpha_dense=jnp.float32(-0.4)),
        "prompt_embeddings": 0.1 * jax.random.normal(k_prompt, (P, 1, D), jnp.float32),
    }
    x = jax.random.normal(k_x, (L, N, D), jnp.float32)

    for mode in ("gated_attn", "prompt_tuning"):
        out = residual_attention_rcp_block(x, params, H, mode, num_prompt_tokens=P)
        out = jax.block_until_ready(out)
        with jax.default_matmul_precision("highest"):
            ref = residual_attention_rcp_block_reference(x, params, H, mode,
                                                         num_prompt_tokens=P)
        assert out.shape == x.shape, f"bad output shape {out.shape} ({mode})"
        assert jnp.allclose(out, ref, rtol=1e-3, atol=1e-3), f"mismatch vs reference ({mode})"

    print("KERNEL_OK")
</pallas_src>

<mosaic_0001>
module attributes {stable_mosaic.version = 11 : i64} {
  func.func @_transformer_block_kernel(%arg0: i32, %arg1: memref<1x8x256xf32, #tpu.memory_space<vmem>>, %arg2: memref<1x256xf32, #tpu.memory_space<vmem>>, %arg3: memref<1x256xf32, #tpu.memory_space<vmem>>, %arg4: memref<256x768xf32, #tpu.memory_space<vmem>>, %arg5: memref<1x768xf32, #tpu.memory_space<vmem>>, %arg6: memref<256x256xf32, #tpu.memory_space<vmem>>, %arg7: memref<1x256xf32, #tpu.memory_space<vmem>>, %arg8: memref<1x256xf32, #tpu.memory_space<vmem>>, %arg9: memref<1x256xf32, #tpu.memory_space<vmem>>, %arg10: memref<256x1024xf32, #tpu.memory_space<vmem>>, %arg11: memref<1x1024xf32, #tpu.memory_space<vmem>>, %arg12: memref<1024x256xf32, #tpu.memory_space<vmem>>, %arg13: memref<1x256xf32, #tpu.memory_space<vmem>>, %arg14: memref<1x8x256xf32, #tpu.memory_space<vmem>>) attributes {dimension_semantics = [#tpu.dimension_semantics<parallel>], iteration_bounds = array<i64: 2>, scalar_prefetch = 0 : i64, scratch_operands = 0 : i64, tpu.core_type = #tpu.core_type<tc>, window_params = [{transform_indices = @transform_0, window_bounds = array<i64: 1, 8, 256>}, {pipeline_mode = #tpu.pipeline_mode<synchronous>, transform_indices = @transform_1, window_bounds = array<i64: 1, 256>}, {pipeline_mode = #tpu.pipeline_mode<synchronous>, transform_indices = @transform_2, window_bounds = array<i64: 1, 256>}, {pipeline_mode = #tpu.pipeline_mode<synchronous>, transform_indices = @transform_3, window_bounds = array<i64: 256, 768>}, {pipeline_mode = #tpu.pipeline_mode<synchronous>, transform_indices = @transform_4, window_bounds = array<i64: 1, 768>}, {pipeline_mode = #tpu.pipeline_mode<synchronous>, transform_indices = @transform_5, window_bounds = array<i64: 256, 256>}, {pipeline_mode = #tpu.pipeline_mode<synchronous>, transform_indices = @transform_6, window_bounds = array<i64: 1, 256>}, {pipeline_mode = #tpu.pipeline_mode<synchronous>, transform_indices = @transform_7, window_bounds = array<i64: 1, 256>}, {pipeline_mode = #tpu.pipeline_mode<synchronous>, transform_indices = @transform_8, window_bounds = array<i64: 1, 256>}, {pipeline_mode = #tpu.pipeline_mode<synchronous>, transform_indices = @transform_9, window_bounds = array<i64: 256, 1024>}, {pipeline_mode = #tpu.pipeline_mode<synchronous>, transform_indices = @transform_10, window_bounds = array<i64: 1, 1024>}, {pipeline_mode = #tpu.pipeline_mode<synchronous>, transform_indices = @transform_11, window_bounds = array<i64: 1024, 256>}, {pipeline_mode = #tpu.pipeline_mode<synchronous>, transform_indices = @transform_12, window_bounds = array<i64: 1, 256>}, {transform_indices = @transform_13, window_bounds = array<i64: 1, 8, 256>}]} {
    %c0 = arith.constant 0 : index
    %c0_0 = arith.constant 0 : index
    %c0_1 = arith.constant 0 : index
    %0 = vector.load %arg1[%c0, %c0_0, %c0_1] : memref<1x8x256xf32, #tpu.memory_space<vmem>>, vector<1x8x256xf32>
    %1 = vector.shape_cast %0 : vector<1x8x256xf32> to vector<8x256xf32>
    %c0_2 = arith.constant 0 : index
    %c0_3 = arith.constant 0 : index
    %2 = vector.load %arg2[%c0_2, %c0_3] : memref<1x256xf32, #tpu.memory_space<vmem>>, vector<1x256xf32>
    %c0_4 = arith.constant 0 : index
    %c0_5 = arith.constant 0 : index
    %3 = vector.load %arg3[%c0_4, %c0_5] : memref<1x256xf32, #tpu.memory_space<vmem>>, vector<1x256xf32>
    %cst = arith.constant dense<0.000000e+00> : vector<8xf32>
    %4 = vector.multi_reduction <add>, %1, %cst [1] : vector<8x256xf32> to vector<8xf32>
    %5 = vector.shape_cast %4 : vector<8xf32> to vector<8x1xf32>
    %cst_6 = arith.constant 2.560000e+02 : f32
    %6 = vector.broadcast %cst_6 : f32 to vector<8x1xf32>
    %7 = arith.divf %5, %6 : vector<8x1xf32>
    %8 = vector.broadcast %7 : vector<8x1xf32> to vector<8x256xf32>
    %9 = arith.subf %1, %8 : vector<8x256xf32>
    %10 = arith.mulf %9, %9 : vector<8x256xf32>
    %cst_7 = arith.constant dense<0.000000e+00> : vector<8xf32>
    %11 = vector.multi_reduction <add>, %10, %cst_7 [1] : vector<8x256xf32> to vector<8xf32>
    %12 = vector.shape_cast %11 : vector<8xf32> to vector<8x1xf32>
    %cst_8 = arith.constant 2.560000e+02 : f32
    %13 = vector.broadcast %cst_8 : f32 to vector<8x1xf32>
    %14 = arith.divf %12, %13 : vector<8x1xf32>
    %15 = vector.broadcast %7 : vector<8x1xf32> to vector<8x256xf32>
    %16 = arith.subf %1, %15 : vector<8x256xf32>
    %cst_9 = arith.constant 9.99999996E-13 : f32
    %17 = vector.broadcast %cst_9 : f32 to vector<8x1xf32>
    %18 = arith.addf %14, %17 : vector<8x1xf32>
    %19 = math.rsqrt %18 : vector<8x1xf32>
    %20 = vector.broadcast %19 : vector<8x1xf32> to vector<8x256xf32>
    %21 = arith.mulf %16, %20 : vector<8x256xf32>
    %22 = vector.broadcast %2 : vector<1x256xf32> to vector<8x256xf32>
    %23 = arith.mulf %21, %22 : vector<8x256xf32>
    %24 = vector.broadcast %3 : vector<1x256xf32> to vector<8x256xf32>
    %25 = arith.addf %23, %24 : vector<8x256xf32>
    %c0_10 = arith.constant 0 : index
    %c0_11 = arith.constant 0 : index
    %26 = vector.load %arg4[%c0_10, %c0_11] : memref<256x768xf32, #tpu.memory_space<vmem>>, vector<256x768xf32>
    %cst_12 = arith.constant dense<0.000000e+00> : vector<8x768xf32>
    %27 = tpu.matmul %25, %26, %cst_12 {dimension_numbers = #tpu.dot_dimension_numbers<[1], [0], [0], [1], [0, 0, 1, 1], [], []>} : vector<8x256xf32>, vector<256x768xf32>, vector<8x768xf32> -> vector<8x768xf32>
    %c0_13 = arith.constant 0 : index
    %c0_14 = arith.constant 0 : index
    %28 = vector.load %arg5[%c0_13, %c0_14] : memref<1x768xf32, #tpu.memory_space<vmem>>, vector<1x768xf32>
    %29 = vector.broadcast %28 : vector<1x768xf32> to vector<8x768xf32>
    %30 = arith.addf %27, %29 : vector<8x768xf32>
    %31 = vector.extract_strided_slice %30 {offsets = [0, 0], sizes = [8, 256], strides = [1, 1]} : vector<8x768xf32> to vector<8x256xf32>
    %32 = vector.extract_strided_slice %30 {offsets = [0, 256], sizes = [8, 256], strides = [1, 1]} : vector<8x768xf32> to vector<8x256xf32>
    %33 = vector.extract_strided_slice %30 {offsets = [0, 512], sizes = [8, 256], strides = [1, 1]} : vector<8x768xf32> to vector<8x256xf32>
    %34 = vector.extract_strided_slice %31 {offsets = [0, 0], sizes = [8, 128], strides = [1, 1]} : vector<8x256xf32> to vector<8x128xf32>
    %35 = vector.extract_strided_slice %31 {offsets = [0, 128], sizes = [8, 128], strides = [1, 1]} : vector<8x256xf32> to vector<8x128xf32>
    %36 = vector.shape_cast %34 : vector<8x128xf32> to vector<1x8x128xf32>
    %37 = vector.shape_cast %35 : vector<8x128xf32> to vector<1x8x128xf32>
    %38 = tpu.concatenate %36, %37 in 0 : vector<1x8x128xf32>, vector<1x8x128xf32> -> vector<2x8x128xf32>
    %39 = vector.extract_strided_slice %32 {offsets = [0, 0], sizes = [8, 128], strides = [1, 1]} : vector<8x256xf32> to vector<8x128xf32>
    %40 = vector.extract_strided_slice %32 {offsets = [0, 128], sizes = [8, 128], strides = [1, 1]} : vector<8x256xf32> to vector<8x128xf32>
    %41 = vector.shape_cast %39 : vector<8x128xf32> to vector<1x8x128xf32>
    %42 = vector.shape_cast %40 : vector<8x128xf32> to vector<1x8x128xf32>
    %43 = tpu.concatenate %41, %42 in 0 : vector<1x8x128xf32>, vector<1x8x128xf32> -> vector<2x8x128xf32>
    %44 = vector.extract_strided_slice %33 {offsets = [0, 0], sizes = [8, 128], strides = [1, 1]} : vector<8x256xf32> to vector<8x128xf32>
    %45 = vector.extract_strided_slice %33 {offsets = [0, 128], sizes = [8, 128], strides = [1, 1]} : vector<8x256xf32> to vector<8x128xf32>
    %46 = vector.shape_cast %44 : vector<8x128xf32> to vector<1x8x128xf32>
    %47 = vector.shape_cast %45 : vector<8x128xf32> to vector<1x8x128xf32>
    %48 = tpu.concatenate %46, %47 in 0 : vector<1x8x128xf32>, vector<1x8x128xf32> -> vector<2x8x128xf32>
    "tpu.trace_start"() <{level = 10 : i32, message = "hqd,hkd->hqk"}> : () -> ()
    %cst_15 = arith.constant dense<0.000000e+00> : vector<2x8x8xf32>
    %49 = tpu.matmul %38, %43, %cst_15 {dimension_numbers = #tpu.dot_dimension_numbers<[2], [2], [1], [1], [0, 0, 0, 1, 1, 1], [0], [0]>} : vector<2x8x128xf32>, vector<2x8x128xf32>, vector<2x8x8xf32> -> vector<2x8x8xf32>
    "tpu.trace_stop"() : () -> ()
    %cst_16 = arith.constant dense<0xFF800000> : vector<2x8xf32>
    %50 = vector.multi_reduction <maximumf>, %49, %cst_16 [2] : vector<2x8x8xf32> to vector<2x8xf32>
    %51 = vector.shape_cast %50 : vector<2x8xf32> to vector<2x8x1xf32>
    %52 = vector.broadcast %51 : vector<2x8x1xf32> to vector<2x8x8xf32>
    %53 = arith.subf %49, %52 : vector<2x8x8xf32>
    %54 = math.exp %53 : vector<2x8x8xf32>
    %cst_17 = arith.constant dense<0.000000e+00> : vector<2x8xf32>
    %55 = vector.multi_reduction <add>, %54, %cst_17 [2] : vector<2x8x8xf32> to vector<2x8xf32>
    %56 = vector.shape_cast %55 : vector<2x8xf32> to vector<2x8x1xf32>
    %cst_18 = arith.constant 1.000000e+00 : f32
    %57 = vector.broadcast %cst_18 : f32 to vector<2x8x1xf32>
    %58 = arith.divf %57, %56 : vector<2x8x1xf32>
    %59 = vector.broadcast %58 : vector<2x8x1xf32> to vector<2x8x8xf32>
    %60 = arith.mulf %54, %59 : vector<2x8x8xf32>
    "tpu.trace_start"() <{level = 10 : i32, message = "hqk,hkd->hqd"}> : () -> ()
    %cst_19 = arith.constant dense<0.000000e+00> : vector<2x8x128xf32>
    %61 = tpu.matmul %60, %48, %cst_19 {dimension_numbers = #tpu.dot_dimension_numbers<[2], [1], [1], [2], [0, 0, 0, 1, 1, 2], [0], [0]>} : vector<2x8x8xf32>, vector<2x8x128xf32>, vector<2x8x128xf32> -> vector<2x8x128xf32>
    "tpu.trace_stop"() : () -> ()
    %62 = vector.extract_strided_slice %61 {offsets = [0, 0, 0], sizes = [1, 8, 128], strides = [1, 1, 1]} : vector<2x8x128xf32> to vector<1x8x128xf32>
    %63 = vector.shape_cast %62 : vector<1x8x128xf32> to vector<8x128xf32>
    %64 = vector.extract_strided_slice %61 {offsets = [1, 0, 0], sizes = [1, 8, 128], strides = [1, 1, 1]} : vector<2x8x128xf32> to vector<1x8x128xf32>
    %65 = vector.shape_cast %64 : vector<1x8x128xf32> to vector<8x128xf32>
    %66 = tpu.concatenate %63, %65 in 1 : vector<8x128xf32>, vector<8x128xf32> -> vector<8x256xf32>
    %c0_20 = arith.constant 0 : index
    %c0_21 = arith.constant 0 : index
    %67 = vector.load %arg6[%c0_20, %c0_21] : memref<256x256xf32, #tpu.memory_space<vmem>>, vector<256x256xf32>
    %cst_22 = arith.constant dense<0.000000e+00> : vector<8x256xf32>
    %68 = tpu.matmul %66, %67, %cst_22 {dimension_numbers = #tpu.dot_dimension_numbers<[1], [0], [0], [1], [0, 0, 1, 1], [], []>} : vector<8x256xf32>, vector<256x256xf32>, vector<8x256xf32> -> vector<8x256xf32>
    %69 = arith.addf %1, %68 : vector<8x256xf32>
    %c0_23 = arith.constant 0 : index
    %c0_24 = arith.constant 0 : index
    %70 = vector.load %arg7[%c0_23, %c0_24] : memref<1x256xf32, #tpu.memory_space<vmem>>, vector<1x256xf32>
    %71 = vector.broadcast %70 : vector<1x256xf32> to vector<8x256xf32>
    %72 = arith.addf %69, %71 : vector<8x256xf32>
    %c0_25 = arith.constant 0 : index
    %c0_26 = arith.constant 0 : index
    %73 = vector.load %arg8[%c0_25, %c0_26] : memref<1x256xf32, #tpu.memory_space<vmem>>, vector<1x256xf32>
    %c0_27 = arith.constant 0 : index
    %c0_28 = arith.constant 0 : index
    %74 = vector.load %arg9[%c0_27, %c0_28] : memref<1x256xf32, #tpu.memory_space<vmem>>, vector<1x256xf32>
    %cst_29 = arith.constant dense<0.000000e+00> : vector<8xf32>
    %75 = vector.multi_reduction <add>, %72, %cst_29 [1] : vector<8x256xf32> to vector<8xf32>
    %76 = vector.shape_cast %75 : vector<8xf32> to vector<8x1xf32>
    %cst_30 = arith.constant 2.560000e+02 : f32
    %77 = vector.broadcast %cst_30 : f32 to vector<8x1xf32>
    %78 = arith.divf %76, %77 : vector<8x1xf32>
    %79 = vector.broadcast %78 : vector<8x1xf32> to vector<8x256xf32>
    %80 = arith.subf %72, %79 : vector<8x256xf32>
    %81 = arith.mulf %80, %80 : vector<8x256xf32>
    %cst_31 = arith.constant dense<0.000000e+00> : vector<8xf32>
    %82 = vector.multi_reduction <add>, %81, %cst_31 [1] : vector<8x256xf32> to vector<8xf32>
    %83 = vector.shape_cast %82 : vector<8xf32> to vector<8x1xf32>
    %cst_32 = arith.constant 2.560000e+02 : f32
    %84 = vector.broadcast %cst_32 : f32 to vector<8x1xf32>
    %85 = arith.divf %83, %84 : vector<8x1xf32>
    %86 = vector.broadcast %78 : vector<8x1xf32> to vector<8x256xf32>
    %87 = arith.subf %72, %86 : vector<8x256xf32>
    %cst_33 = arith.constant 9.99999996E-13 : f32
    %88 = vector.broadcast %cst_33 : f32 to vector<8x1xf32>
    %89 = arith.addf %85, %88 : vector<8x1xf32>
    %90 = math.rsqrt %89 : vector<8x1xf32>
    %91 = vector.broadcast %90 : vector<8x1xf32> to vector<8x256xf32>
    %92 = arith.mulf %87, %91 : vector<8x256xf32>
    %93 = vector.broadcast %73 : vector<1x256xf32> to vector<8x256xf32>
    %94 = arith.mulf %92, %93 : vector<8x256xf32>
    %95 = vector.broadcast %74 : vector<1x256xf32> to vector<8x256xf32>
    %96 = arith.addf %94, %95 : vector<8x256xf32>
    %c0_34 = arith.constant 0 : index
    %c0_35 = arith.constant 0 : index
    %97 = vector.load %arg10[%c0_34, %c0_35] : memref<256x1024xf32, #tpu.memory_space<vmem>>, vector<256x1024xf32>
    %cst_36 = arith.constant dense<0.000000e+00> : vector<8x1024xf32>
    %98 = tpu.matmul %96, %97, %cst_36 {dimension_numbers = #tpu.dot_dimension_numbers<[1], [0], [0], [1], [0, 0, 1, 1], [], []>} : vector<8x256xf32>, vector<256x1024xf32>, vector<8x1024xf32> -> vector<8x1024xf32>
    %c0_37 = arith.constant 0 : index
    %c0_38 = arith.constant 0 : index
    %99 = vector.load %arg11[%c0_37, %c0_38] : memref<1x1024xf32, #tpu.memory_space<vmem>>, vector<1x1024xf32>
    %100 = vector.broadcast %99 : vector<1x1024xf32> to vector<8x1024xf32>
    %101 = arith.addf %98, %100 : vector<8x1024xf32>
    %cst_39 = arith.constant 1.702000e+00 : f32
    %102 = vector.broadcast %cst_39 : f32 to vector<8x1024xf32>
    %103 = arith.mulf %102, %101 : vector<8x1024xf32>
    %104 = arith.negf %103 : vector<8x1024xf32>
    %105 = math.exp %104 : vector<8x1024xf32>
    %cst_40 = arith.constant 1.000000e+00 : f32
    %106 = vector.broadcast %cst_40 : f32 to vector<8x1024xf32>
    %107 = arith.addf %106, %105 : vector<8x1024xf32>
    %108 = arith.divf %106, %107 : vector<8x1024xf32>
    %109 = arith.mulf %101, %108 : vector<8x1024xf32>
    %c0_41 = arith.constant 0 : index
    %c0_42 = arith.constant 0 : index
    %110 = vector.load %arg12[%c0_41, %c0_42] : memref<1024x256xf32, #tpu.memory_space<vmem>>, vector<1024x256xf32>
    %cst_43 = arith.constant dense<0.000000e+00> : vector<8x256xf32>
    %111 = tpu.matmul %109, %110, %cst_43 {dimension_numbers = #tpu.dot_dimension_numbers<[1], [0], [0], [1], [0, 0, 1, 1], [], []>} : vector<8x1024xf32>, vector<1024x256xf32>, vector<8x256xf32> -> vector<8x256xf32>
    %112 = arith.addf %72, %111 : vector<8x256xf32>
    %c0_44 = arith.constant 0 : index
    %c0_45 = arith.constant 0 : index
    %113 = vector.load %arg13[%c0_44, %c0_45] : memref<1x256xf32, #tpu.memory_space<vmem>>, vector<1x256xf32>
    %114 = vector.broadcast %113 : vector<1x256xf32> to vector<8x256xf32>
    %115 = arith.addf %112, %114 : vector<8x256xf32>
    %c0_46 = arith.constant 0 : index
    %c0_47 = arith.constant 0 : index
    %c0_48 = arith.constant 0 : index
    %116 = vector.load %arg14[%c0_46, %c0_47, %c0_48] : memref<1x8x256xf32, #tpu.memory_space<vmem>>, vector<1x8x256xf32>
    %117 = vector.shape_cast %116 : vector<1x8x256xf32> to vector<8x256xf32>
    %118 = vector.shape_cast %115 : vector<8x256xf32> to vector<1x8x256xf32>
    tpu.vector_store %arg14[%c0_46, %c0_47, %c0_48], %118 {strides = array<i32>} : memref<1x8x256xf32, #tpu.memory_space<vmem>>, vector<1x8x256xf32>,
    return
  }
  func.func @transform_0(%arg0: i32) -> (i32, i32, i32) {
    %c0_i32 = arith.constant 0 : i32
    %c0_i32_0 = arith.constant 0 : i32
    %c0_i32_1 = arith.constant 0 : i32
    return %arg0, %c0_i32, %c0_i32_0 : i32, i32, i32
  }
  func.func @transform_1(%arg0: i32) -> (i32, i32) {
    %c0_i32 = arith.constant 0 : i32
    %c0_i32_0 = arith.constant 0 : i32
    %c0_i32_1 = arith.constant 0 : i32
    return %c0_i32, %c0_i32_0 : i32, i32
  }
  func.func @transform_2(%arg0: i32) -> (i32, i32) {
    %c0_i32 = arith.constant 0 : i32
    %c0_i32_0 = arith.constant 0 : i32
    %c0_i32_1 = arith.constant 0 : i32
    return %c0_i32, %c0_i32_0 : i32, i32
  }
  func.func @transform_3(%arg0: i32) -> (i32, i32) {
    %c0_i32 = arith.constant 0 : i32
    %c0_i32_0 = arith.constant 0 : i32
    %c0_i32_1 = arith.constant 0 : i32
    return %c0_i32, %c0_i32_0 : i32, i32
  }
  func.func @transform_4(%arg0: i32) -> (i32, i32) {
    %c0_i32 = arith.constant 0 : i32
    %c0_i32_0 = arith.constant 0 : i32
    %c0_i32_1 = arith.constant 0 : i32
    return %c0_i32, %c0_i32_0 : i32, i32
  }
  func.func @transform_5(%arg0: i32) -> (i32, i32) {
    %c0_i32 = arith.constant 0 : i32
    %c0_i32_0 = arith.constant 0 : i32
    %c0_i32_1 = arith.constant 0 : i32
    return %c0_i32, %c0_i32_0 : i32, i32
  }
  func.func @transform_6(%arg0: i32) -> (i32, i32) {
    %c0_i32 = arith.constant 0 : i32
    %c0_i32_0 = arith.constant 0 : i32
    %c0_i32_1 = arith.constant 0 : i32
    return %c0_i32, %c0_i32_0 : i32, i32
  }
  func.func @transform_7(%arg0: i32) -> (i32, i32) {
    %c0_i32 = arith.constant 0 : i32
    %c0_i32_0 = arith.constant 0 : i32
    %c0_i32_1 = arith.constant 0 : i32
    return %c0_i32, %c0_i32_0 : i32, i32
  }
  func.func @transform_8(%arg0: i32) -> (i32, i32) {
    %c0_i32 = arith.constant 0 : i32
    %c0_i32_0 = arith.constant 0 : i32
    %c0_i32_1 = arith.constant 0 : i32
    return %c0_i32, %c0_i32_0 : i32, i32
  }
  func.func @transform_9(%arg0: i32) -> (i32, i32) {
    %c0_i32 = arith.constant 0 : i32
    %c0_i32_0 = arith.constant 0 : i32
    %c0_i32_1 = arith.constant 0 : i32
    return %c0_i32, %c0_i32_0 : i32, i32
  }
  func.func @transform_10(%arg0: i32) -> (i32, i32) {
    %c0_i32 = arith.constant 0 : i32
    %c0_i32_0 = arith.constant 0 : i32
    %c0_i32_1 = arith.constant 0 : i32
    return %c0_i32, %c0_i32_0 : i32, i32
  }
  func.func @transform_11(%arg0: i32) -> (i32, i32) {
    %c0_i32 = arith.constant 0 : i32
    %c0_i32_0 = arith.constant 0 : i32
    %c0_i32_1 = arith.constant 0 : i32
    return %c0_i32, %c0_i32_0 : i32, i32
  }
  func.func @transform_12(%arg0: i32) -> (i32, i32) {
    %c0_i32 = arith.constant 0 : i32
    %c0_i32_0 = arith.constant 0 : i32
    %c0_i32_1 = arith.constant 0 : i32
    return %c0_i32, %c0_i32_0 : i32, i32
  }
  func.func @transform_13(%arg0: i32) -> (i32, i32, i32) {
    %c0_i32 = arith.constant 0 : i32
    %c0_i32_0 = arith.constant 0 : i32
    %c0_i32_1 = arith.constant 0 : i32
    return %arg0, %c0_i32, %c0_i32_0 : i32, i32, i32
  }
}

</mosaic_0001>

<llo_original>
// kernel: tpu_custom_call.1
$region0: #{tpu_custom_call.1}
  #allocation0 [shape = 'u32[]', space=smem, size = 0x4, offset = 0x4, fixed_abs, tag = 'smem constant byte address 0x4 - core index']
  #allocation1 [shape = 'u32[144,128]{1,0:T(1,128)}', space=vmem, size = 0x12000, scoped, tag = 'internal scratch']
  %s0 = inlined_call_operand.hbm [shape: f32[2,8,256], index: 0, kind: input, shape index: {}]
  %s1 = inlined_call_operand.hbm [shape: f32[1,256], index: 1, kind: input, shape index: {}]
  %s2 = inlined_call_operand.hbm [shape: f32[1,256], index: 2, kind: input, shape index: {}]
  %s3 = inlined_call_operand.hbm [shape: f32[256,768], index: 3, kind: input, shape index: {}]
  %s4 = inlined_call_operand.vmem [shape: f32[1,768], index: 4, kind: input, shape index: {}]
  %s5 = inlined_call_operand.hbm [shape: f32[256,256], index: 5, kind: input, shape index: {}]
  %s6 = inlined_call_operand.vmem [shape: f32[1,256], index: 6, kind: input, shape index: {}]
  %s7 = inlined_call_operand.hbm [shape: f32[1,256], index: 7, kind: input, shape index: {}]
  %s8 = inlined_call_operand.hbm [shape: f32[1,256], index: 8, kind: input, shape index: {}]
  %s9 = inlined_call_operand.hbm [shape: f32[256,1024], index: 9, kind: input, shape index: {}]
  %s10 = inlined_call_operand.vmem [shape: f32[1,1024], index: 10, kind: input, shape index: {}]
  %s11 = inlined_call_operand.hbm [shape: f32[1024,256], index: 11, kind: input, shape index: {}]
  %s12 = inlined_call_operand.vmem [shape: f32[1,256], index: 12, kind: input, shape index: {}]
  %s13 = inlined_call_operand.hbm [shape: f32[2,8,256], index: 13, kind: output, shape index: {}]
  %s14 = sld [smem:[#allocation0]]
  $region121: #{tpu_custom_call.1} parent=0
    _
  %s16 = ssub.s32 1, %s14
  %s17 = scalar_select 0, %s16, %s14
  $region1: #{tpu_custom_call.1} parent=0
    #allocation2 [shape = 'u8[16384]{0}', space=vmem, size = 0x4000, scoped, tag = 'input window, operand 0']
    #allocation3 [shape = 's32[2]{0}', space=sflag, size = 0x8, scoped, tag = 'scoped memory for tpu_custom_call.1']
    #allocation4 [shape = 's32[2]{0}', space=sflag, size = 0x8, scoped, tag = 'scoped memory for tpu_custom_call.1']
    #allocation5 [shape = 'u8[1024]{0}', space=vmem, size = 0x400, scoped, tag = 'input window, operand 1, single buffered']
    #allocation6 [shape = 's32[1]{0}', space=sflag, size = 0x4, scoped, tag = 'scoped memory for tpu_custom_call.1']
    #allocation7 [shape = 'u8[1024]{0}', space=vmem, size = 0x400, scoped, tag = 'input window, operand 2, single buffered']
    #allocation8 [shape = 'u8[786432]{0}', space=vmem, size = 0xc0000, scoped, tag = 'input window, operand 3, single buffered']
    #allocation9 [shape = 's32[1]{0}', space=sflag, size = 0x4, scoped, tag = 'scoped memory for tpu_custom_call.1']
    #allocation10 [shape = 'u8[262144]{0}', space=vmem, size = 0x40000, scoped, tag = 'input window, operand 5, single buffered']
    #allocation11 [shape = 'u8[1024]{0}', space=vmem, size = 0x400, scoped, tag = 'input window, operand 7, single buffered']
    #allocation12 [shape = 's32[1]{0}', space=sflag, size = 0x4, scoped, tag = 'scoped memory for tpu_custom_call.1']
    #allocation13 [shape = 'u8[1024]{0}', space=vmem, size = 0x400, scoped, tag = 'input window, operand 8, single buffered']
    #allocation14 [shape = 'u8[1048576]{0}', space=vmem, size = 0x100000, scoped, tag = 'input window, operand 9, single buffered']
    #allocation15 [shape = 's32[1]{0}', space=sflag, size = 0x4, scoped, tag = 'scoped memory for tpu_custom_call.1']
    #allocation16 [shape = 'u8[1048576]{0}', space=vmem, size = 0x100000, scoped, tag = 'input window, operand 11, single buffered']
    #allocation17 [shape = 'u8[16384]{0}', space=vmem, size = 0x4000, scoped, tag = 'output window, operand 0']
    %18 = vsyncpa [#allocation3], 0
    %s19 = scalar_lea.sflag [#allocation3], 1
    %20 = vsyncpa %s19, 0
    %21 = vsyncpa [#allocation6], 0
    %22 = vsyncpa [#allocation9], 0
    %23 = vsyncpa [#allocation12], 0
    %24 = vsyncpa [#allocation15], 0
    %25 = vsyncpa [#allocation4], 0
    %s26 = scalar_lea.sflag [#allocation4], 1
    %27 = vsyncpa %s26, 0
    loop: start=0, step=1, limit=4
    $region2: #{tpu_custom_call.1} parent=1 // loop_pre_header
      _
    $region3: #{tpu_custom_call.1} parent=1 // loop_header
      %s29 = sphi 0, %s33
      %p30 = scmp.ge.s32.totalorder %s29, 4
      %s39 = sphi 0, %s41
      %s42 = sphi 0, %s39
      %s43 = sphi 0, %s42
      %s59 = sphi 0, %s43
      %s63 = sphi 0, %s63
      %s65 = sphi 0, %s63
      %s66 = sphi 0, %s65
      %s80 = sphi 0, %s66
      %s84 = sphi 0, %s84
      %s86 = sphi 0, %s84
      %s87 = sphi 0, %s86
      %s101 = sphi 0, %s87
      %s105 = sphi 0, %s105
      %s107 = sphi 0, %s105
      %s108 = sphi 0, %s107
      %s122 = sphi 0, %s108
      %s126 = sphi 0, %s126
      %s128 = sphi 0, %s126
      %s129 = sphi 0, %s128
      %s143 = sphi 0, %s129
      %s147 = sphi 0, %s147
      %s149 = sphi 0, %s147
      %s150 = sphi 0, %s149
      %s164 = sphi 0, %s150
      %s168 = sphi 0, %s168
      %s170 = sphi 0, %s168
      %s171 = sphi 0, %s170
      %s185 = sphi 0, %s171
      %s189 = sphi 0, %s189
      %s191 = sphi 0, %s189
      %s192 = sphi 0, %s191
      %s206 = sphi 0, %s192
      %s210 = sphi 0, %s210
      %s212 = sphi 0, %s210
      %s213 = sphi 0, %s212
      %s227 = sphi 0, %s213
      %s231 = sphi 0, %s231
      %s233 = sphi 0, %s231
      %s234 = sphi 0, %s233
      %s248 = sphi 0, %s234
      %s252 = sphi 0, %s252
      %s254 = sphi 0, %s252
      %s255 = sphi 0, %s254
      %s269 = sphi 0, %s255
      %s273 = sphi 0, %s273
      %s275 = sphi 0, %s273
      %s276 = sphi 0, %s275
      %s290 = sphi 0, %s276
      %s294 = sphi 0, %s294
      %s296 = sphi 0, %s294
      %s297 = sphi 0, %s296
      %s311 = sphi 0, %s297
      %s317 = sphi 0, %s319
      %s320 = sphi 0, %s317
      %s321 = sphi 0, %s320
      %s337 = sphi 0, %s321
    $region4: #{tpu_custom_call.1} parent=1 // loop_header_branch
      %32 = sbr.rel (%p30) target = $region8
    $region5: #{tpu_custom_call.1} parent=1 // loop_body
      %s34 = ssub.s32 %s29, 1
      %s35 = ssub.s32 %s29, 2
      %s36 = sadd.s32 %s29, 1
      %s37 = ssub.s32 %s29, %s36
      %p38 = scmp.eq.s32.totalorder %s37, 0
      %s40 = sadd.s32 %s39, 1
      %s41 = scalar_select %p38, %s39, %s40
      %p44 = pneg %p38
      %p45 = scmp.eq.s32.totalorder %s29, 1
      %p46 = por %p44, %p45
      %p47 = scmp.ne.s32.totalorder %s39, %s42
      %p48 = scmp.eq.s32.totalorder %s29, 0
      %p49 = por %p47, %p48
      %p50 = scmp.ne.s32.totalorder %s39, %s42
      %p51 = scmp.eq.s32.totalorder %s34, 1
      %p52 = por %p50, %p51
      %p53 = scmp.ne.s32.totalorder %s42, %s43
      %p54 = scmp.eq.s32.totalorder %s34, 0
      %p55 = por %p53, %p54
      %p56 = scmp.ne.s32.totalorder %s42, %s43
      %p57 = scmp.eq.s32.totalorder %s35, 1
      %p58 = por %p56, %p57
      %p60 = scmp.ne.s32.totalorder %s43, %s59
      %p61 = scmp.eq.s32.totalorder %s35, 0
      %p62 = por %p60, %p61
      %s64 = sadd.s32 %s63, 1
      %p67 = scmp.eq.s32.totalorder %s29, 1
      %p68 = scmp.ne.s32.totalorder %s63, %s65
      %p69 = scmp.eq.s32.totalorder %s29, 0
      %p70 = por %p68, %p69
      %p71 = scmp.ne.s32.totalorder %s63, %s65
      %p72 = scmp.eq.s32.totalorder %s34, 1
      %p73 = por %p71, %p72
      %p74 = scmp.ne.s32.totalorder %s65, %s66
      %p75 = scmp.eq.s32.totalorder %s34, 0
      %p76 = por %p74, %p75
      %p77 = scmp.ne.s32.totalorder %s65, %s66
      %p78 = scmp.eq.s32.totalorder %s35, 1
      %p79 = por %p77, %p78
      %p81 = scmp.ne.s32.totalorder %s66, %s80
      %p82 = scmp.eq.s32.totalorder %s35, 0
      %p83 = por %p81, %p82
      %s85 = sadd.s32 %s84, 1
      %p88 = scmp.eq.s32.totalorder %s29, 1
      %p89 = scmp.ne.s32.totalorder %s84, %s86
      %p90 = scmp.eq.s32.totalorder %s29, 0
      %p91 = por %p89, %p90
      %p92 = scmp.ne.s32.totalorder %s84, %s86
      %p93 = scmp.eq.s32.totalorder %s34, 1
      %p94 = por %p92, %p93
      %p95 = scmp.ne.s32.totalorder %s86, %s87
      %p96 = scmp.eq.s32.totalorder %s34, 0
      %p97 = por %p95, %p96
      %p98 = scmp.ne.s32.totalorder %s86, %s87
      %p99 = scmp.eq.s32.totalorder %s35, 1
      %p100 = por %p98, %p99
      %p102 = scmp.ne.s32.totalorder %s87, %s101
      %p103 = scmp.eq.s32.totalorder %s35, 0
      %p104 = por %p102, %p103
      %s106 = sadd.s32 %s105, 1
      %p109 = scmp.eq.s32.totalorder %s29, 1
      %p110 = scmp.ne.s32.totalorder %s105, %s107
      %p111 = scmp.eq.s32.totalorder %s29, 0
      %p112 = por %p110, %p111
      %p113 = scmp.ne.s32.totalorder %s105, %s107
      %p114 = scmp.eq.s32.totalorder %s34, 1
      %p115 = por %p113, %p114
      %p116 = scmp.ne.s32.totalorder %s107, %s108
      %p117 = scmp.eq.s32.totalorder %s34, 0
      %p118 = por %p116, %p117
      %p119 = scmp.ne.s32.totalorder %s107, %s108
      %p120 = scmp.eq.s32.totalorder %s35, 1
      %p121 = por %p119, %p120
      %p123 = scmp.ne.s32.totalorder %s108, %s122
      %p124 = scmp.eq.s32.totalorder %s35, 0
      %p125 = por %p123, %p124
      %s127 = sadd.s32 %s126, 1
      %p130 = scmp.eq.s32.totalorder %s29, 1
      %p131 = scmp.ne.s32.totalorder %s126, %s128
      %p132 = scmp.eq.s32.totalorder %s29, 0
      %p133 = por %p131, %p132
      %p134 = scmp.ne.s32.totalorder %s126, %s128
      %p135 = scmp.eq.s32.totalorder %s34, 1
      %p136 = por %p134, %p135
      %p137 = scmp.ne.s32.totalorder %s128, %s129
      %p138 = scmp.eq.s32.totalorder %s34, 0
      %p139 = por %p137, %p138
      %p140 = scmp.ne.s32.totalorder %s128, %s129
      %p141 = scmp.eq.s32.totalorder %s35, 1
      %p142 = por %p140, %p141
      %p144 = scmp.ne.s32.totalorder %s129, %s143
      %p145 = scmp.eq.s32.totalorder %s35, 0
      %p146 = por %p144, %p145
      %s148 = sadd.s32 %s147, 1
      %p151 = scmp.eq.s32.totalorder %s29, 1
      %p152 = scmp.ne.s32.totalorder %s147, %s149
      %p153 = scmp.eq.s32.totalorder %s29, 0
      %p154 = por %p152, %p153
      %p155 = scmp.ne.s32.totalorder %s147, %s149
      %p156 = scmp.eq.s32.totalorder %s34, 1
      %p157 = por %p155, %p156
      %p158 = scmp.ne.s32.totalorder %s149, %s150
      %p159 = scmp.eq.s32.totalorder %s34, 0
      %p160 = por %p158, %p159
      %p161 = scmp.ne.s32.totalorder %s149, %s150
      %p162 = scmp.eq.s32.totalorder %s35, 1
      %p163 = por %p161, %p162
      %p165 = scmp.ne.s32.totalorder %s150, %s164
      %p166 = scmp.eq.s32.totalorder %s35, 0
      %p167 = por %p165, %p166
      %s169 = sadd.s32 %s168, 1
      %p172 = scmp.eq.s32.totalorder %s29, 1
      %p173 = scmp.ne.s32.totalorder %s168, %s170
      %p174 = scmp.eq.s32.totalorder %s29, 0
      %p175 = por %p173, %p174
      %p176 = scmp.ne.s32.totalorder %s168, %s170
      %p177 = scmp.eq.s32.totalorder %s34, 1
      %p178 = por %p176, %p177
      %p179 = scmp.ne.s32.totalorder %s170, %s171
      %p180 = scmp.eq.s32.totalorder %s34, 0
      %p181 = por %p179, %p180
      %p182 = scmp.ne.s32.totalorder %s170, %s171
      %p183 = scmp.eq.s32.totalorder %s35, 1
      %p184 = por %p182, %p183
      %p186 = scmp.ne.s32.totalorder %s171, %s185
      %p187 = scmp.eq.s32.totalorder %s35, 0
      %p188 = por %p186, %p187
      %s190 = sadd.s32 %s189, 1
      %p193 = scmp.eq.s32.totalorder %s29, 1
      %p194 = scmp.ne.s32.totalorder %s189, %s191
      %p195 = scmp.eq.s32.totalorder %s29, 0
      %p196 = por %p194, %p195
      %p197 = scmp.ne.s32.totalorder %s189, %s191
      %p198 = scmp.eq.s32.totalorder %s34, 1
      %p199 = por %p197, %p198
      %p200 = scmp.ne.s32.totalorder %s191, %s192
      %p201 = scmp.eq.s32.totalorder %s34, 0
      %p202 = por %p200, %p201
      %p203 = scmp.ne.s32.totalorder %s191, %s192
      %p204 = scmp.eq.s32.totalorder %s35, 1
      %p205 = por %p203, %p204
      %p207 = scmp.ne.s32.totalorder %s192, %s206
      %p208 = scmp.eq.s32.totalorder %s35, 0
      %p209 = por %p207, %p208
      %s211 = sadd.s32 %s210, 1
      %p214 = scmp.eq.s32.totalorder %s29, 1
      %p215 = scmp.ne.s32.totalorder %s210, %s212
      %p216 = scmp.eq.s32.totalorder %s29, 0
      %p217 = por %p215, %p216
      %p218 = scmp.ne.s32.totalorder %s210, %s212
      %p219 = scmp.eq.s32.totalorder %s34, 1
      %p220 = por %p218, %p219
      %p221 = scmp.ne.s32.totalorder %s212, %s213
      %p222 = scmp.eq.s32.totalorder %s34, 0
      %p223 = por %p221, %p222
      %p224 = scmp.ne.s32.totalorder %s212, %s213
      %p225 = scmp.eq.s32.totalorder %s35, 1
      %p226 = por %p224, %p225
      %p228 = scmp.ne.s32.totalorder %s213, %s227
      %p229 = scmp.eq.s32.totalorder %s35, 0
      %p230 = por %p228, %p229
      %s232 = sadd.s32 %s231, 1
      %p235 = scmp.eq.s32.totalorder %s29, 1
      %p236 = scmp.ne.s32.totalorder %s231, %s233
      %p237 = scmp.eq.s32.totalorder %s29, 0
      %p238 = por %p236, %p237
      %p239 = scmp.ne.s32.totalorder %s231, %s233
      %p240 = scmp.eq.s32.totalorder %s34, 1
      %p241 = por %p239, %p240
      %p242 = scmp.ne.s32.totalorder %s233, %s234
      %p243 = scmp.eq.s32.totalorder %s34, 0
      %p244 = por %p242, %p243
      %p245 = scmp.ne.s32.totalorder %s233, %s234
      %p246 = scmp.eq.s32.totalorder %s35, 1
      %p247 = por %p245, %p246
      %p249 = scmp.ne.s32.totalorder %s234, %s248
      %p250 = scmp.eq.s32.totalorder %s35, 0
      %p251 = por %p249, %p250
      %s253 = sadd.s32 %s252, 1
      %p256 = scmp.eq.s32.totalorder %s29, 1
      %p257 = scmp.ne.s32.totalorder %s252, %s254
      %p258 = scmp.eq.s32.totalorder %s29, 0
      %p259 = por %p257, %p258
      %p260 = scmp.ne.s32.totalorder %s252, %s254
      %p261 = scmp.eq.s32.totalorder %s34, 1
      %p262 = por %p260, %p261
      %p263 = scmp.ne.s32.totalorder %s254, %s255
      %p264 = scmp.eq.s32.totalorder %s34, 0
      %p265 = por %p263, %p264
      %p266 = scmp.ne.s32.totalorder %s254, %s255
      %p267 = scmp.eq.s32.totalorder %s35, 1
      %p268 = por %p266, %p267
      %p270 = scmp.ne.s32.totalorder %s255, %s269
      %p271 = scmp.eq.s32.totalorder %s35, 0
      %p272 = por %p270, %p271
      %s274 = sadd.s32 %s273, 1
      %p277 = scmp.eq.s32.totalorder %s29, 1
      %p278 = scmp.ne.s32.totalorder %s273, %s275
      %p279 = scmp.eq.s32.totalorder %s29, 0
      %p280 = por %p278, %p279
      %p281 = scmp.ne.s32.totalorder %s273, %s275
      %p282 = scmp.eq.s32.totalorder %s34, 1
      %p283 = por %p281, %p282
      %p284 = scmp.ne.s32.totalorder %s275, %s276
      %p285 = scmp.eq.s32.totalorder %s34, 0
      %p286 = por %p284, %p285
      %p287 = scmp.ne.s32.totalorder %s275, %s276
      %p288 = scmp.eq.s32.totalorder %s35, 1
      %p289 = por %p287, %p288
      %p291 = scmp.ne.s32.totalorder %s276, %s290
      %p292 = scmp.eq.s32.totalorder %s35, 0
      %p293 = por %p291, %p292
      %s295 = sadd.s32 %s294, 1
      %p298 = scmp.eq.s32.totalorder %s29, 1
      %p299 = scmp.ne.s32.totalorder %s294, %s296
      %p300 = scmp.eq.s32.totalorder %s29, 0
      %p301 = por %p299, %p300
      %p302 = scmp.ne.s32.totalorder %s294, %s296
      %p303 = scmp.eq.s32.totalorder %s34, 1
      %p304 = por %p302, %p303
      %p305 = scmp.ne.s32.totalorder %s296, %s297
      %p306 = scmp.eq.s32.totalorder %s34, 0
      %p307 = por %p305, %p306
      %p308 = scmp.ne.s32.totalorder %s296, %s297
      %p309 = scmp.eq.s32.totalorder %s35, 1
      %p310 = por %p308, %p309
      %p312 = scmp.ne.s32.totalorder %s297, %s311
      %p313 = scmp.eq.s32.totalorder %s35, 0
      %p314 = por %p312, %p313
      %s315 = ssub.s32 %s29, %s36
      %p316 = scmp.eq.s32.totalorder %s315, 0
      %s318 = sadd.s32 %s317, 1
      %s319 = scalar_select %p316, %s317, %s318
      %p322 = pneg %p316
      %p323 = scmp.eq.s32.totalorder %s29, 1
      %p324 = por %p322, %p323
      %p325 = scmp.ne.s32.totalorder %s317, %s320
      %p326 = scmp.eq.s32.totalorder %s29, 0
      %p327 = por %p325, %p326
      %p328 = scmp.ne.s32.totalorder %s317, %s320
      %p329 = scmp.eq.s32.totalorder %s34, 1
      %p330 = por %p328, %p329
      %p331 = scmp.ne.s32.totalorder %s320, %s321
      %p332 = scmp.eq.s32.totalorder %s34, 0
      %p333 = por %p331, %p332
      %p334 = scmp.ne.s32.totalorder %s320, %s321
      %p335 = scmp.eq.s32.totalorder %s35, 1
      %p336 = por %p334, %p335
      %p338 = scmp.ne.s32.totalorder %s321, %s337
      %p339 = scmp.eq.s32.totalorder %s35, 0
      %p340 = por %p338, %p339
      %p341 = scmp.le.s32.totalorder 1, %s29
      %p342 = scmp.lt.s32.totalorder %s29, 3
      %p343 = pnand %p341, %p342
      %p344 = pneg %p343
      // Predicated region
      $region9: #{tpu_custom_call.1} parent=5 // pred_check
        _
      $region10: #{tpu_custom_call.1} parent=5 // pred_check_branch
        %346 = sbr.rel (%p343) target = $region12
      $region11: #{tpu_custom_call.1} parent=5 // pred_region
        %s347 = ssub.s32 %s29, 1
        // Predicated region
        $region13: #{tpu_custom_call.1} parent=11 // pred_check
          %p348 = pneg %p76
        $region14: #{tpu_custom_call.1} parent=11 // pred_check_branch
          %350 = sbr.rel (%p348) target = $region16
        $region15: #{tpu_custom_call.1} parent=11 // pred_region
          %s352 = ssub.s32 32, 32
          %353 = vsyncadd [#allocation6], %s352
          %s355 = sshll.u32 [#allocation5], 4
          %s356 = int_to_ptr.vmem [resolvable:$true] %s355
          %358 = dma.hbm_to_vmem [thread:$0]  %s1, 32, %s356, [#allocation6]
        $region16: #{tpu_custom_call.1} parent=11 // pred_fallthru
          _
        // Predicated region
        $region17: #{tpu_custom_call.1} parent=11 // pred_check
          %p359 = pneg %p97
        $region18: #{tpu_custom_call.1} parent=11 // pred_check_branch
          %361 = sbr.rel (%p359) target = $region20
        $region19: #{tpu_custom_call.1} parent=11 // pred_region
          %s363 = ssub.s32 32, 32
          %364 = vsyncadd [#allocation6], %s363
          %s366 = sshll.u32 [#allocation7], 4
          %s367 = int_to_ptr.vmem [resolvable:$true] %s366
          %369 = dma.hbm_to_vmem [thread:$0]  %s2, 32, %s367, [#allocation6]
        $region20: #{tpu_custom_call.1} parent=11 // pred_fallthru
          _
        // Predicated region
        $region21: #{tpu_custom_call.1} parent=11 // pred_check
          %p370 = pneg %p118
        $region22: #{tpu_custom_call.1} parent=11 // pred_check_branch
          %372 = sbr.rel (%p370) target = $region24
        $region23: #{tpu_custom_call.1} parent=11 // pred_region
          %s374 = ssub.s32 24576, 24576
          %375 = vsyncadd [#allocation9], %s374
          %s376 = sshll.u32 [#allocation8], 4
          %s377 = int_to_ptr.vmem [resolvable:$true] %s376
          %382 = dma.hbm_to_vmem [thread:$0]  %s3, 24576, %s377, [#allocation9], 768, 768, 48
        $region24: #{tpu_custom_call.1} parent=11 // pred_fallthru
          _
        // Predicated region
        $region25: #{tpu_custom_call.1} parent=11 // pred_check
          %p383 = pneg %p139
        $region26: #{tpu_custom_call.1} parent=11 // pred_check_branch
          %385 = sbr.rel (%p383) target = $region28
        $region27: #{tpu_custom_call.1} parent=11 // pred_region
          _
        $region28: #{tpu_custom_call.1} parent=11 // pred_fallthru
          _
        // Predicated region
        $region29: #{tpu_custom_call.1} parent=11 // pred_check
          %p386 = pneg %p160
        $region30: #{tpu_custom_call.1} parent=11 // pred_check_branch
          %388 = sbr.rel (%p386) target = $region32
        $region31: #{tpu_custom_call.1} parent=11 // pred_region
          %s390 = ssub.s32 8192, 8192
          %391 = vsyncadd [#allocation9], %s390
          %s392 = sshll.u32 [#allocation10], 4
          %s393 = int_to_ptr.vmem [resolvable:$true] %s392
          %398 = dma.hbm_to_vmem [thread:$0]  %s5, 8192, %s393, [#allocation9], 256, 256, 16
        $region32: #{tpu_custom_call.1} parent=11 // pred_fallthru
          _
        // Predicated region
        $region33: #{tpu_custom_call.1} parent=11 // pred_check
          %p399 = pneg %p181
        $region34: #{tpu_custom_call.1} parent=11 // pred_check_branch
          %401 = sbr.rel (%p399) target = $region36
        $region35: #{tpu_custom_call.1} parent=11 // pred_region
          _
        $region36: #{tpu_custom_call.1} parent=11 // pred_fallthru
          _
        // Predicated region
        $region37: #{tpu_custom_call.1} parent=11 // pred_check
          %p402 = pneg %p202
        $region38: #{tpu_custom_call.1} parent=11 // pred_check_branch
          %404 = sbr.rel (%p402) target = $region40
        $region39: #{tpu_custom_call.1} parent=11 // pred_region
          %s406 = ssub.s32 32, 32
          %407 = vsyncadd [#allocation12], %s406
          %s409 = sshll.u32 [#allocation11], 4
          %s410 = int_to_ptr.vmem [resolvable:$true] %s409
          %412 = dma.hbm_to_vmem [thread:$0]  %s7, 32, %s410, [#allocation12]
        $region40: #{tpu_custom_call.1} parent=11 // pred_fallthru
          _
        // Predicated region
        $region41: #{tpu_custom_call.1} parent=11 // pred_check
          %p413 = pneg %p223
        $region42: #{tpu_custom_call.1} parent=11 // pred_check_branch
          %415 = sbr.rel (%p413) target = $region44
        $region43: #{tpu_custom_call.1} parent=11 // pred_region
          %s417 = ssub.s32 32, 32
          %418 = vsyncadd [#allocation12], %s417
          %s420 = sshll.u32 [#allocation13], 4
          %s421 = int_to_ptr.vmem [resolvable:$true] %s420
          %423 = dma.hbm_to_vmem [thread:$0]  %s8, 32, %s421, [#allocation12]
        $region44: #{tpu_custom_call.1} parent=11 // pred_fallthru
          _
        // Predicated region
        $region45: #{tpu_custom_call.1} parent=11 // pred_check
          %p424 = pneg %p244
        $region46: #{tpu_custom_call.1} parent=11 // pred_check_branch
          %426 = sbr.rel (%p424) target = $region48
        $region47: #{tpu_custom_call.1} parent=11 // pred_region
          %s428 = ssub.s32 32768, 32768
          %429 = vsyncadd [#allocation15], %s428
          %s430 = sshll.u32 [#allocation14], 4
          %s431 = int_to_ptr.vmem [resolvable:$true] %s430
          %436 = dma.hbm_to_vmem [thread:$0]  %s9, 32768, %s431, [#allocation15], 1024, 1024, 64
        $region48: #{tpu_custom_call.1} parent=11 // pred_fallthru
          _
        // Predicated region
        $region49: #{tpu_custom_call.1} parent=11 // pred_check
          %p437 = pneg %p265
        $region50: #{tpu_custom_call.1} parent=11 // pred_check_branch
          %439 = sbr.rel (%p437) target = $region52
        $region51: #{tpu_custom_call.1} parent=11 // pred_region
          _
        $region52: #{tpu_custom_call.1} parent=11 // pred_fallthru
          _
        // Predicated region
        $region53: #{tpu_custom_call.1} parent=11 // pred_check
          %p440 = pneg %p286
        $region54: #{tpu_custom_call.1} parent=11 // pred_check_branch
          %442 = sbr.rel (%p440) target = $region56
        $region55: #{tpu_custom_call.1} parent=11 // pred_region
          %s444 = ssub.s32 32768, 32768
          %445 = vsyncadd [#allocation15], %s444
          %s446 = sshll.u32 [#allocation16], 4
          %s447 = int_to_ptr.vmem [resolvable:$true] %s446
          %452 = dma.hbm_to_vmem [thread:$0]  %s11, 32768, %s447, [#allocation15], 256, 256, 16
        $region56: #{tpu_custom_call.1} parent=11 // pred_fallthru
          _
        // Predicated region
        $region57: #{tpu_custom_call.1} parent=11 // pred_check
          %p453 = pneg %p307
        $region58: #{tpu_custom_call.1} parent=11 // pred_check_branch
          %455 = sbr.rel (%p453) target = $region60
        $region59: #{tpu_custom_call.1} parent=11 // pred_region
          _
        $region60: #{tpu_custom_call.1} parent=11 // pred_fallthru
          _
      $region12: #{tpu_custom_call.1} parent=5 // pred_fallthru
        _
      %p456 = scmp.lt.s32.totalorder %s29, 2
      // Predicated region
      $region61: #{tpu_custom_call.1} parent=5 // pred_check
        %p457 = pneg %p456
      $region62: #{tpu_custom_call.1} parent=5 // pred_check_branch
        %459 = sbr.rel (%p457) target = $region64
      $region63: #{tpu_custom_call.1} parent=5 // pred_region
        // Predicated region
        $region65: #{tpu_custom_call.1} parent=63 // pred_check
          %p460 = pneg %p49
        $region66: #{tpu_custom_call.1} parent=63 // pred_check_branch
          %462 = sbr.rel (%p460) target = $region68
        $region67: #{tpu_custom_call.1} parent=63 // pred_region
          %s463 = sand.u32 %s39, 1
          %s464 = scalar_lea.sflag [#allocation3], %s463
          %s465 = sand.u32 %s39, 1
          %s466 = smul.addr %s465, 16
          %s467 = scalar_lea.vmem [#allocation2], %s466
          %s469 = ssub.s32 256, 256
          %470 = vsyncadd %s464, %s469
          %s471 = smul.addr %s29, 2
          %s472 = smul.addr %s471, 128
          %s473 = scalar_lea.hbm %s0, %s472
          %s475 = sshll.u32 %s467, 4
          %s476 = int_to_ptr.vmem [resolvable:$true] %s475
          %478 = dma.hbm_to_vmem [thread:$0]  %s473, 256, %s476, %s464
        $region68: #{tpu_custom_call.1} parent=63 // pred_fallthru
          _
      $region64: #{tpu_custom_call.1} parent=5 // pred_fallthru
        _
      %p479 = scmp.le.s32.totalorder 1, %s29
      %p480 = scmp.lt.s32.totalorder %s29, 3
      %p481 = pnand %p479, %p480
      %p482 = pneg %p481
      // Predicated region
      $region69: #{tpu_custom_call.1} parent=5 // pred_check
        _
      $region70: #{tpu_custom_call.1} parent=5 // pred_check_branch
        %484 = sbr.rel (%p481) target = $region72
      $region71: #{tpu_custom_call.1} parent=5 // pred_region
        %s485 = ssub.s32 %s29, 1
        %s486 = sand.u32 %s42, 1
        %s487 = scalar_lea.sflag [#allocation3], %s486
        %s488 = sand.u32 %s42, 1
        %s489 = smul.addr %s488, 16
        %s490 = scalar_lea.vmem [#allocation2], %s489
        // Predicated region
        $region73: #{tpu_custom_call.1} parent=71 // pred_check
          %p491 = pneg %p55
        $region74: #{tpu_custom_call.1} parent=71 // pred_check_branch
          %493 = sbr.rel (%p491) target = $region76
        $region75: #{tpu_custom_call.1} parent=71 // pred_region
          %494 = dma.done %s487, 256
        $region76: #{tpu_custom_call.1} parent=71 // pred_fallthru
          _
        // Predicated region
        $region77: #{tpu_custom_call.1} parent=71 // pred_check
          %p495 = pneg %p76
        $region78: #{tpu_custom_call.1} parent=71 // pred_check_branch
          %497 = sbr.rel (%p495) target = $region80
        $region79: #{tpu_custom_call.1} parent=71 // pred_region
          %498 = dma.done [#allocation6], 32
        $region80: #{tpu_custom_call.1} parent=71 // pred_fallthru
          _
        // Predicated region
        $region81: #{tpu_custom_call.1} parent=71 // pred_check
          %p499 = pneg %p97
        $region82: #{tpu_custom_call.1} parent=71 // pred_check_branch
          %501 = sbr.rel (%p499) target = $region84
        $region83: #{tpu_custom_call.1} parent=71 // pred_region
          %502 = dma.done [#allocation6], 32
        $region84: #{tpu_custom_call.1} parent=71 // pred_fallthru
          _
        // Predicated region
        $region85: #{tpu_custom_call.1} parent=71 // pred_check
          %p503 = pneg %p118
        $region86: #{tpu_custom_call.1} parent=71 // pred_check_branch
          %505 = sbr.rel (%p503) target = $region88
        $region87: #{tpu_custom_call.1} parent=71 // pred_region
          %506 = dma.done [#allocation9], 24576
        $region88: #{tpu_custom_call.1} parent=71 // pred_fallthru
          _
        // Predicated region
        $region89: #{tpu_custom_call.1} parent=71 // pred_check
          %p507 = pneg %p160
        $region90: #{tpu_custom_call.1} parent=71 // pred_check_branch
          %509 = sbr.rel (%p507) target = $region92
        $region91: #{tpu_custom_call.1} parent=71 // pred_region
          %510 = dma.done [#allocation9], 8192
        $region92: #{tpu_custom_call.1} parent=71 // pred_fallthru
          _
        // Predicated region
        $region93: #{tpu_custom_call.1} parent=71 // pred_check
          %p511 = pneg %p202
        $region94: #{tpu_custom_call.1} parent=71 // pred_check_branch
          %513 = sbr.rel (%p511) target = $region96
        $region95: #{tpu_custom_call.1} parent=71 // pred_region
          %514 = dma.done [#allocation12], 32
        $region96: #{tpu_custom_call.1} parent=71 // pred_fallthru
          _
        // Predicated region
        $region97: #{tpu_custom_call.1} parent=71 // pred_check
          %p515 = pneg %p223
        $region98: #{tpu_custom_call.1} parent=71 // pred_check_branch
          %517 = sbr.rel (%p515) target = $region100
        $region99: #{tpu_custom_call.1} parent=71 // pred_region
          %518 = dma.done [#allocation12], 32
        $region100: #{tpu_custom_call.1} parent=71 // pred_fallthru
          _
        // Predicated region
        $region101: #{tpu_custom_call.1} parent=71 // pred_check
          %p519 = pneg %p244
        $region102: #{tpu_custom_call.1} parent=71 // pred_check_branch
          %521 = sbr.rel (%p519) target = $region104
        $region103: #{tpu_custom_call.1} parent=71 // pred_region
          %522 = dma.done [#allocation15], 32768
        $region104: #{tpu_custom_call.1} parent=71 // pred_fallthru
          _
        // Predicated region
        $region105: #{tpu_custom_call.1} parent=71 // pred_check
          %p523 = pneg %p286
        $region106: #{tpu_custom_call.1} parent=71 // pred_check_branch
          %525 = sbr.rel (%p523) target = $region108
        $region107: #{tpu_custom_call.1} parent=71 // pred_region
          %526 = dma.done [#allocation15], 32768
        $region108: #{tpu_custom_call.1} parent=71 // pred_fallthru
          _
        %s527 = sand.u32 %s42, 1
        %s528 = scalar_lea.sflag [#allocation3], %s527
        %s529 = sand.u32 %s42, 1
        %s530 = smul.addr %s529, 16
        %s531 = scalar_lea.vmem [#allocation2], %s530
        %p532 = pneg %p55
        %p533 = pneg %p52
        %p534 = pneg %p76
        %p535 = pneg %p73
        %p536 = pneg %p97
        %p537 = pneg %p94
        %p538 = pneg %p118
        %p539 = pneg %p115
        %p540 = pneg %p139
        %p541 = pneg %p136
        %p542 = pneg %p160
        %p543 = pneg %p157
        %p544 = pneg %p181
        %p545 = pneg %p178
        %p546 = pneg %p202
        %p547 = pneg %p199
        %p548 = pneg %p223
        %p549 = pneg %p220
        %p550 = pneg %p244
        %p551 = pneg %p241
        %p552 = pneg %p265
        %p553 = pneg %p262
        %p554 = pneg %p286
        %p555 = pneg %p283
        %p556 = pneg %p307
        %p557 = pneg %p304
        %p558 = pneg %p333
        %p559 = pneg %p330
        %s560 = sand.u32 %s320, 1
        %s561 = scalar_lea.sflag [#allocation4], %s560
        %s562 = sand.u32 %s320, 1
        %s563 = smul.addr %s562, 16
        %s564 = scalar_lea.vmem [#allocation17], %s563
        %v565 = vld [vmem:[%s490] sm:$0xff]
        %v566 = vld [vmem:[%s490 + $0x8] sm:$0xff]
        %v567 = vld [vmem:[#allocation5] sm:$0x3]
        %v568 = vld [vmem:[#allocation7] sm:$0x3]
        %v569 = vadd.f32 %v565, %v566
        %570 = vadd.xlane.f32.xlu0 %v569
        %v571 = vpop.xlane.xlu0 %570
        %v572 = vrcp.pop 256.0
        %v573 = vmul.f32 %v571, %v572
        %v574 = vsub.f32 %v565, %v573
        %v575 = vsub.f32 %v566, %v573
        %v576 = vmul.f32 %v574, %v574
        %v577 = vmul.f32 %v575, %v575
        %v578 = vadd.f32 %v576, %v577
        %579 = vadd.xlane.f32.xlu0 %v578
        %v580 = vpop.xlane.xlu0 %579
        %v581 = vmul.f32 %v580, %v572
        %v582 = vadd.f32 %v581, 1e-12
        %v583 = vrsqrt.pop %v582
        %v584 = vmul.f32 %v574, %v583
        %v585 = vmul.f32 %v575, %v583
        %v587 = vlaneseq
        %v588 = vshrl.u32 %v587, 7
        %v589 = vsub.s32 0, %v588
        %v590 = vrot.slane %v567, %v589
        %v591 = vlaneseq
        %v592 = vshrl.u32 %v591, 7
        %v593 = vsub.s32 1, %v592
        %v594 = vrot.slane %v567, %v593
        %v597 = vmul.f32 %v584, %v590
        %v598 = vmul.f32 %v585, %v594
        %v600 = vlaneseq
        %v601 = vshrl.u32 %v600, 7
        %v602 = vsub.s32 0, %v601
        %v603 = vrot.slane %v568, %v602
        %v604 = vlaneseq
        %v605 = vshrl.u32 %v604, 7
        %v606 = vsub.s32 1, %v605
        %v607 = vrot.slane %v568, %v606
        %v610 = vadd.f32 %v597, %v603
        %v611 = vadd.f32 %v598, %v607
        %v612 = vld [vmem:[#allocation8] sm:$0xff]
        %v613 = vld [vmem:[#allocation8 + $0x8] sm:$0xff]
        %v614 = vld [vmem:[#allocation8 + $0x10] sm:$0xff]
        %v615 = vld [vmem:[#allocation8 + $0x18] sm:$0xff]
        %v616 = vld [vmem:[#allocation8 + $0x20] sm:$0xff]
        %v617 = vld [vmem:[#allocation8 + $0x28] sm:$0xff]
        %v618 = vld [vmem:[#allocation8 + $0x30] sm:$0xff]
        %v619 = vld [vmem:[#allocation8 + $0x38] sm:$0xff]
        %v620 = vld [vmem:[#allocation8 + $0x40] sm:$0xff]
        %v621 = vld [vmem:[#allocation8 + $0x48] sm:$0xff]
        %v622 = vld [vmem:[#allocation8 + $0x50] sm:$0xff]
        %v623 = vld [vmem:[#allocation8 + $0x58] sm:$0xff]
        %v624 = vld [vmem:[#allocation8 + $0x60] sm:$0xff]
        %v625 = vld [vmem:[#allocation8 + $0x68] sm:$0xff]
        %v626 = vld [vmem:[#allocation8 + $0x70] sm:$0xff]
        %v627 = vld [vmem:[#allocation8 + $0x78] sm:$0xff]
        %v628 = vld [vmem:[#allocation8 + $0x80] sm:$0xff]
        %v629 = vld [vmem:[#allocation8 + $0x88] sm:$0xff]
        %v630 = vld [vmem:[#allocation8 + $0x90] sm:$0xff]
        %v631 = vld [vmem:[#allocation8 + $0x98] sm:$0xff]
        %v632 = vld [vmem:[#allocation8 + $0xa0] sm:$0xff]
        %v633 = vld [vmem:[#allocation8 + $0xa8] sm:$0xff]
        %v634 = vld [vmem:[#allocation8 + $0xb0] sm:$0xff]
        %v635 = vld [vmem:[#allocation8 + $0xb8] sm:$0xff]
        %v636 = vld [vmem:[#allocation8 + $0xc0] sm:$0xff]
        %v637 = vld [vmem:[#allocation8 + $0xc8] sm:$0xff]
        %v638 = vld [vmem:[#allocation8 + $0xd0] sm:$0xff]
        %v639 = vld [vmem:[#allocation8 + $0xd8] sm:$0xff]
        %v640 = vld [vmem:[#allocation8 + $0xe0] sm:$0xff]
        %v641 = vld [vmem:[#allocation8 + $0xe8] sm:$0xff]
        %v642 = vld [vmem:[#allocation8 + $0xf0] sm:$0xff]
        %v643 = vld [vmem:[#allocation8 + $0xf8] sm:$0xff]
        %v644 = vld [vmem:[#allocation8 + $0x100] sm:$0xff]
        %v645 = vld [vmem:[#allocation8 + $0x108] sm:$0xff]
        %v646 = vld [vmem:[#allocation8 + $0x110] sm:$0xff]
        %v647 = vld [vmem:[#allocation8 + $0x118] sm:$0xff]
        %v648 = vld [vmem:[#allocation8 + $0x120] sm:$0xff]
        %v649 = vld [vmem:[#allocation8 + $0x128] sm:$0xff]
        %v650 = vld [vmem:[#allocation8 + $0x130] sm:$0xff]
        %v651 = vld [vmem:[#allocation8 + $0x138] sm:$0xff]
        %v652 = vld [vmem:[#allocation8 + $0x140] sm:$0xff]
        %v653 = vld [vmem:[#allocation8 + $0x148] sm:$0xff]
        %v654 = vld [vmem:[#allocation8 + $0x150] sm:$0xff]
        %v655 = vld [vmem:[#allocation8 + $0x158] sm:$0xff]
        %v656 = vld [vmem:[#allocation8 + $0x160] sm:$0xff]
        %v657 = vld [vmem:[#allocation8 + $0x168] sm:$0xff]
        %v658 = vld [vmem:[#allocation8 + $0x170] sm:$0xff]
        %v659 = vld [vmem:[#allocation8 + $0x178] sm:$0xff]
        %v660 = vld [vmem:[#allocation8 + $0x180] sm:$0xff]
        %v661 = vld [vmem:[#allocation8 + $0x188] sm:$0xff]
        %v662 = vld [vmem:[#allocation8 + $0x190] sm:$0xff]
        %v663 = vld [vmem:[#allocation8 + $0x198] sm:$0xff]
        %v664 = vld [vmem:[#allocation8 + $0x1a0] sm:$0xff]
        %v665 = vld [vmem:[#allocation8 + $0x1a8] sm:$0xff]
        %v666 = vld [vmem:[#allocation8 + $0x1b0] sm:$0xff]
        %v667 = vld [vmem:[#allocation8 + $0x1b8] sm:$0xff]
        %v668 = vld [vmem:[#allocation8 + $0x1c0] sm:$0xff]
        %v669 = vld [vmem:[#allocation8 + $0x1c8] sm:$0xff]
        %v670 = vld [vmem:[#allocation8 + $0x1d0] sm:$0xff]
        %v671 = vld [vmem:[#allocation8 + $0x1d8] sm:$0xff]
        %v672 = vld [vmem:[#allocation8 + $0x1e0] sm:$0xff]
        %v673 = vld [vmem:[#allocation8 + $0x1e8] sm:$0xff]
        %v674 = vld [vmem:[#allocation8 + $0x1f0] sm:$0xff]
        %v675 = vld [vmem:[#allocation8 + $0x1f8] sm:$0xff]
        %v676 = vld [vmem:[#allocation8 + $0x200] sm:$0xff]
        %v677 = vld [vmem:[#allocation8 + $0x208] sm:$0xff]
        %v678 = vld [vmem:[#allocation8 + $0x210] sm:$0xff]
        %v679 = vld [vmem:[#allocation8 + $0x218] sm:$0xff]
        %v680 = vld [vmem:[#allocation8 + $0x220] sm:$0xff]
        %v681 = vld [vmem:[#allocation8 + $0x228] sm:$0xff]
        %v682 = vld [vmem:[#allocation8 + $0x230] sm:$0xff]
        %v683 = vld [vmem:[#allocation8 + $0x238] sm:$0xff]
        %v684 = vld [vmem:[#allocation8 + $0x240] sm:$0xff]
        %v685 = vld [vmem:[#allocation8 + $0x248] sm:$0xff]
        %v686 = vld [vmem:[#allocation8 + $0x250] sm:$0xff]
        %v687 = vld [vmem:[#allocation8 + $0x258] sm:$0xff]
        %v688 = vld [vmem:[#allocation8 + $0x260] sm:$0xff]
        %v689 = vld [vmem:[#allocation8 + $0x268] sm:$0xff]
        %v690 = vld [vmem:[#allocation8 + $0x270] sm:$0xff]
        %v691 = vld [vmem:[#allocation8 + $0x278] sm:$0xff]
        %v692 = vld [vmem:[#allocation8 + $0x280] sm:$0xff]
        %v693 = vld [vmem:[#allocation8 + $0x288] sm:$0xff]
        %v694 = vld [vmem:[#allocation8 + $0x290] sm:$0xff]
        %v695 = vld [vmem:[#allocation8 + $0x298] sm:$0xff]
        %v696 = vld [vmem:[#allocation8 + $0x2a0] sm:$0xff]
        %v697 = vld [vmem:[#allocation8 + $0x2a8] sm:$0xff]
        %v698 = vld [vmem:[#allocation8 + $0x2b0] sm:$0xff]
        %v699 = vld [vmem:[#allocation8 + $0x2b8] sm:$0xff]
        %v700 = vld [vmem:[#allocation8 + $0x2c0] sm:$0xff]
        %v701 = vld [vmem:[#allocation8 + $0x2c8] sm:$0xff]
        %v702 = vld [vmem:[#allocation8 + $0x2d0] sm:$0xff]
        %v703 = vld [vmem:[#allocation8 + $0x2d8] sm:$0xff]
        %v704 = vld [vmem:[#allocation8 + $0x2e0] sm:$0xff]
        %v705 = vld [vmem:[#allocation8 + $0x2e8] sm:$0xff]
        %v706 = vld [vmem:[#allocation8 + $0x2f0] sm:$0xff]
        %v707 = vld [vmem:[#allocation8 + $0x2f8] sm:$0xff]
        %v708 = vld [vmem:[#allocation8 + $0x300] sm:$0xff]
        %v709 = vld [vmem:[#allocation8 + $0x308] sm:$0xff]
        %v710 = vld [vmem:[#allocation8 + $0x310] sm:$0xff]
        %v711 = vld [vmem:[#allocation8 + $0x318] sm:$0xff]
        %v712 = vld [vmem:[#allocation8 + $0x320] sm:$0xff]
        %v713 = vld [vmem:[#allocation8 + $0x328] sm:$0xff]
        %v714 = vld [vmem:[#allocation8 + $0x330] sm:$0xff]
        %v715 = vld [vmem:[#allocation8 + $0x338] sm:$0xff]
        %v716 = vld [vmem:[#allocation8 + $0x340] sm:$0xff]
        %v717 = vld [vmem:[#allocation8 + $0x348] sm:$0xff]
        %v718 = vld [vmem:[#allocation8 + $0x350] sm:$0xff]
        %v719 = vld [vmem:[#allocation8 + $0x358] sm:$0xff]
        %v720 = vld [vmem:[#allocation8 + $0x360] sm:$0xff]
        %v721 = vld [vmem:[#allocation8 + $0x368] sm:$0xff]
        %v722 = vld [vmem:[#allocation8 + $0x370] sm:$0xff]
        %v723 = vld [vmem:[#allocation8 + $0x378] sm:$0xff]
        %v724 = vld [vmem:[#allocation8 + $0x380] sm:$0xff]
        %v725 = vld [vmem:[#allocation8 + $0x388] sm:$0xff]
        %v726 = vld [vmem:[#allocation8 + $0x390] sm:$0xff]
        %v727 = vld [vmem:[#allocation8 + $0x398] sm:$0xff]
        %v728 = vld [vmem:[#allocation8 + $0x3a0] sm:$0xff]
        %v729 = vld [vmem:[#allocation8 + $0x3a8] sm:$0xff]
        %v730 = vld [vmem:[#allocation8 + $0x3b0] sm:$0xff]
        %v731 = vld [vmem:[#allocation8 + $0x3b8] sm:$0xff]
        %v732 = vld [vmem:[#allocation8 + $0x3c0] sm:$0xff]
        %v733 = vld [vmem:[#allocation8 + $0x3c8] sm:$0xff]
        %v734 = vld [vmem:[#allocation8 + $0x3d0] sm:$0xff]
        %v735 = vld [vmem:[#allocation8 + $0x3d8] sm:$0xff]
        %v736 = vld [vmem:[#allocation8 + $0x3e0] sm:$0xff]
        %v737 = vld [vmem:[#allocation8 + $0x3e8] sm:$0xff]
        %v738 = vld [vmem:[#allocation8 + $0x3f0] sm:$0xff]
        %v739 = vld [vmem:[#allocation8 + $0x3f8] sm:$0xff]
        %v740 = vld [vmem:[#allocation8 + $0x400] sm:$0xff]
        %v741 = vld [vmem:[#allocation8 + $0x408] sm:$0xff]
        %v742 = vld [vmem:[#allocation8 + $0x410] sm:$0xff]
        %v743 = vld [vmem:[#allocation8 + $0x418] sm:$0xff]
        %v744 = vld [vmem:[#allocation8 + $0x420] sm:$0xff]
        %v745 = vld [vmem:[#allocation8 + $0x428] sm:$0xff]
        %v746 = vld [vmem:[#allocation8 + $0x430] sm:$0xff]
        %v747 = vld [vmem:[#allocation8 + $0x438] sm:$0xff]
        %v748 = vld [vmem:[#allocation8 + $0x440] sm:$0xff]
        %v749 = vld [vmem:[#allocation8 + $0x448] sm:$0xff]
        %v750 = vld [vmem:[#allocation8 + $0x450] sm:$0xff]
        %v751 = vld [vmem:[#allocation8 + $0x458] sm:$0xff]
        %v752 = vld [vmem:[#allocation8 + $0x460] sm:$0xff]
        %v753 = vld [vmem:[#allocation8 + $0x468] sm:$0xff]
        %v754 = vld [vmem:[#allocation8 + $0x470] sm:$0xff]
        %v755 = vld [vmem:[#allocation8 + $0x478] sm:$0xff]
        %v756 = vld [vmem:[#allocation8 + $0x480] sm:$0xff]
        %v757 = vld [vmem:[#allocation8 + $0x488] sm:$0xff]
        %v758 = vld [vmem:[#allocation8 + $0x490] sm:$0xff]
        %v759 = vld [vmem:[#allocation8 + $0x498] sm:$0xff]
        %v760 = vld [vmem:[#allocation8 + $0x4a0] sm:$0xff]
        %v761 = vld [vmem:[#allocation8 + $0x4a8] sm:$0xff]
        %v762 = vld [vmem:[#allocation8 + $0x4b0] sm:$0xff]
        %v763 = vld [vmem:[#allocation8 + $0x4b8] sm:$0xff]
        %v764 = vld [vmem:[#allocation8 + $0x4c0] sm:$0xff]
        %v765 = vld [vmem:[#allocation8 + $0x4c8] sm:$0xff]
        %v766 = vld [vmem:[#allocation8 + $0x4d0] sm:$0xff]
        %v767 = vld [vmem:[#allocation8 + $0x4d8] sm:$0xff]
        %v768 = vld [vmem:[#allocation8 + $0x4e0] sm:$0xff]
        %v769 = vld [vmem:[#allocation8 + $0x4e8] sm:$0xff]
        %v770 = vld [vmem:[#allocation8 + $0x4f0] sm:$0xff]
        %v771 = vld [vmem:[#allocation8 + $0x4f8] sm:$0xff]
        %v772 = vld [vmem:[#allocation8 + $0x500] sm:$0xff]
        %v773 = vld [vmem:[#allocation8 + $0x508] sm:$0xff]
        %v774 = vld [vmem:[#allocation8 + $0x510] sm:$0xff]
        %v775 = vld [vmem:[#allocation8 + $0x518] sm:$0xff]
        %v776 = vld [vmem:[#allocation8 + $0x520] sm:$0xff]
        %v777 = vld [vmem:[#allocation8 + $0x528] sm:$0xff]
        %v778 = vld [vmem:[#allocation8 + $0x530] sm:$0xff]
        %v779 = vld [vmem:[#allocation8 + $0x538] sm:$0xff]
        %v780 = vld [vmem:[#allocation8 + $0x540] sm:$0xff]
        %v781 = vld [vmem:[#allocation8 + $0x548] sm:$0xff]
        %v782 = vld [vmem:[#allocation8 + $0x550] sm:$0xff]
        %v783 = vld [vmem:[#allocation8 + $0x558] sm:$0xff]
        %v784 = vld [vmem:[#allocation8 + $0x560] sm:$0xff]
        %v785 = vld [vmem:[#allocation8 + $0x568] sm:$0xff]
        %v786 = vld [vmem:[#allocation8 + $0x570] sm:$0xff]
        %v787 = vld [vmem:[#allocation8 + $0x578] sm:$0xff]
        %v788 = vld [vmem:[#allocation8 + $0x580] sm:$0xff]
        %v789 = vld [vmem:[#allocation8 + $0x588] sm:$0xff]
        %v790 = vld [vmem:[#allocation8 + $0x590] sm:$0xff]
        %v791 = vld [vmem:[#allocation8 + $0x598] sm:$0xff]
        %v792 = vld [vmem:[#allocation8 + $0x5a0] sm:$0xff]
        %v793 = vld [vmem:[#allocation8 + $0x5a8] sm:$0xff]
        %v794 = vld [vmem:[#allocation8 + $0x5b0] sm:$0xff]
        %v795 = vld [vmem:[#allocation8 + $0x5b8] sm:$0xff]
        %v796 = vld [vmem:[#allocation8 + $0x5c0] sm:$0xff]
        %v797 = vld [vmem:[#allocation8 + $0x5c8] sm:$0xff]
        %v798 = vld [vmem:[#allocation8 + $0x5d0] sm:$0xff]
        %v799 = vld [vmem:[#allocation8 + $0x5d8] sm:$0xff]
        %v800 = vld [vmem:[#allocation8 + $0x5e0] sm:$0xff]
        %v801 = vld [vmem:[#allocation8 + $0x5e8] sm:$0xff]
        %v802 = vld [vmem:[#allocation8 + $0x5f0] sm:$0xff]
        %v803 = vld [vmem:[#allocation8 + $0x5f8] sm:$0xff]
        %v804 = vld [vmem:[%s4] sm:$0x3f]
        %v806 = vlaneseq
        %v807 = vshrl.u32 %v806, 7
        %v808 = vsub.s32 0, %v807
        %v809 = vrot.slane %v804, %v808
        %v810 = vlaneseq
        %v811 = vshrl.u32 %v810, 7
        %v812 = vsub.s32 1, %v811
        %v813 = vrot.slane %v804, %v812
        %v814 = vlaneseq
        %v815 = vshrl.u32 %v814, 7
        %v816 = vsub.s32 2, %v815
        %v817 = vrot.slane %v804, %v816
        %v818 = vlaneseq
        %v819 = vshrl.u32 %v818, 7
        %v820 = vsub.s32 3, %v819
        %v821 = vrot.slane %v804, %v820
        %v822 = vlaneseq
        %v823 = vshrl.u32 %v822, 7
        %v824 = vsub.s32 4, %v823
        %v825 = vrot.slane %v804, %v824
        %v826 = vlaneseq
        %v827 = vshrl.u32 %v826, 7
        %v828 = vsub.s32 5, %v827
        %v829 = vrot.slane %v804, %v828
        %836 = vmatprep.subr.mxu0 %v703
        %837 = vmatpush1.msra.mxu0 %v702
        %838 = vmatprep.subr.mxu0 %v697
        %839 = vmatpush1.msra.mxu0 %v696
        %840 = vmatprep.subr.mxu0 %v691
        %841 = vmatpush1.msra.mxu0 %v690
        %842 = vmatprep.subr.mxu0 %v685
        %843 = vmatpush1.msra.mxu0 %v684
        %844 = vmatprep.subr.mxu0 %v679
        %845 = vmatpush1.msra.mxu0 %v678
        %846 = vmatprep.subr.mxu0 %v673
        %847 = vmatpush1.msra.mxu0 %v672
        %848 = vmatprep.subr.mxu0 %v667
        %849 = vmatpush1.msra.mxu0 %v666
        %850 = vmatprep.subr.mxu0 %v661
        %851 = vmatpush1.msra.mxu0 %v660
        %852 = vmatprep.subr.mxu0 %v655
        %853 = vmatpush1.msra.mxu0 %v654
        %854 = vmatprep.subr.mxu0 %v649
        %855 = vmatpush1.msra.mxu0 %v648
        %856 = vmatprep.subr.mxu0 %v643
        %857 = vmatpush1.msra.mxu0 %v642
        %858 = vmatprep.subr.mxu0 %v637
        %859 = vmatpush1.msra.mxu0 %v636
        %860 = vmatprep.subr.mxu0 %v631
        %861 = vmatpush1.msra.mxu0 %v630
        %862 = vmatprep.subr.mxu0 %v625
        %863 = vmatpush1.msra.mxu0 %v624
        %864 = vmatprep.subr.mxu0 %v619
        %865 = vmatpush1.msra.mxu0 %v618
        %866 = vmatprep.subr.mxu0 %v613
        %867 = vmatpush1.msra.mxu0 %v612
        %868 = vmatprep.subr.mxu0 %v799
        %869 = vmatpush2.msra.mxu0 %v798
        %870 = vmatprep.subr.mxu0 %v793
        %871 = vmatpush2.msra.mxu0 %v792
        %872 = vmatprep.subr.mxu0 %v787
        %873 = vmatpush2.msra.mxu0 %v786
        %874 = vmatprep.subr.mxu0 %v781
        %875 = vmatpush2.msra.mxu0 %v780
        %876 = vmatprep.subr.mxu0 %v775
        %877 = vmatpush2.msra.mxu0 %v774
        %878 = vmatprep.subr.mxu0 %v769
        %879 = vmatpush2.msra.mxu0 %v768
        %880 = vmatprep.subr.mxu0 %v763
        %881 = vmatpush2.msra.mxu0 %v762
        %882 = vmatprep.subr.mxu0 %v757
        %883 = vmatpush2.msra.mxu0 %v756
        %884 = vmatprep.subr.mxu0 %v751
        %885 = vmatpush2.msra.mxu0 %v750
        %886 = vmatprep.subr.mxu0 %v745
        %887 = vmatpush2.msra.mxu0 %v744
        %888 = vmatprep.subr.mxu0 %v739
        %889 = vmatpush2.msra.mxu0 %v738
        %890 = vmatprep.subr.mxu0 %v733
        %891 = vmatpush2.msra.mxu0 %v732
        %892 = vmatprep.subr.mxu0 %v727
        %893 = vmatpush2.msra.mxu0 %v726
        %894 = vmatprep.subr.mxu0 %v721
        %895 = vmatpush2.msra.mxu0 %v720
        %896 = vmatprep.subr.mxu0 %v715
        %897 = vmatpush2.msra.mxu0 %v714
        %898 = vmatprep.subr.mxu0 %v709
        %899 = vmatpush2.msra.mxu0 %v708
        %900 = vmatprep.mubr.f32.mxu0 %v611
        %901 = vmatmul.mubr.f32.gmra.mxu0 %v610
        %v902 = vpop.f32.mrf.mxu0
        %v903 = vadd.f32 %v809, %v902
        %v904 = vpop.f32.mrf.mxu0
        %v905 = vadd.f32 %v813, %v904
        %906 = vdwg.mxu0
        %907 = vmatprep.subr.mxu0 %v705
        %908 = vmatpush1.msra.mxu0 %v704
        %909 = vmatprep.subr.mxu0 %v699
        %910 = vmatpush1.msra.mxu0 %v698
        %911 = vmatprep.subr.mxu0 %v693
        %912 = vmatpush1.msra.mxu0 %v692
        %913 = vmatprep.subr.mxu0 %v687
        %914 = vmatpush1.msra.mxu0 %v686
        %915 = vmatprep.subr.mxu0 %v681
        %916 = vmatpush1.msra.mxu0 %v680
        %917 = vmatprep.subr.mxu0 %v675
        %918 = vmatpush1.msra.mxu0 %v674
        %919 = vmatprep.subr.mxu0 %v669
        %920 = vmatpush1.msra.mxu0 %v668
        %921 = vmatprep.subr.mxu0 %v663
        %922 = vmatpush1.msra.mxu0 %v662
        %923 = vmatprep.subr.mxu0 %v657
        %924 = vmatpush1.msra.mxu0 %v656
        %925 = vmatprep.subr.mxu0 %v651
        %926 = vmatpush1.msra.mxu0 %v650
        %927 = vmatprep.subr.mxu0 %v645
        %928 = vmatpush1.msra.mxu0 %v644
        %929 = vmatprep.subr.mxu0 %v639
        %930 = vmatpush1.msra.mxu0 %v638
        %931 = vmatprep.subr.mxu0 %v633
        %932 = vmatpush1.msra.mxu0 %v632
        %933 = vmatprep.subr.mxu0 %v627
        %934 = vmatpush1.msra.mxu0 %v626
        %935 = vmatprep.subr.mxu0 %v621
        %936 = vmatpush1.msra.mxu0 %v620
        %937 = vmatprep.subr.mxu0 %v615
        %938 = vmatpush1.msra.mxu0 %v614
        %939 = vmatprep.subr.mxu0 %v801
        %940 = vmatpush2.msra.mxu0 %v800
        %941 = vmatprep.subr.mxu0 %v795
        %942 = vmatpush2.msra.mxu0 %v794
        %943 = vmatprep.subr.mxu0 %v789
        %944 = vmatpush2.msra.mxu0 %v788
        %945 = vmatprep.subr.mxu0 %v783
        %946 = vmatpush2.msra.mxu0 %v782
        %947 = vmatprep.subr.mxu0 %v777
        %948 = vmatpush2.msra.mxu0 %v776
        %949 = vmatprep.subr.mxu0 %v771
        %950 = vmatpush2.msra.mxu0 %v770
        %951 = vmatprep.subr.mxu0 %v765
        %952 = vmatpush2.msra.mxu0 %v764
        %953 = vmatprep.subr.mxu0 %v759
        %954 = vmatpush2.msra.mxu0 %v758
        %955 = vmatprep.subr.mxu0 %v753
        %956 = vmatpush2.msra.mxu0 %v752
        %957 = vmatprep.subr.mxu0 %v747
        %958 = vmatpush2.msra.mxu0 %v746
        %959 = vmatprep.subr.mxu0 %v741
        %960 = vmatpush2.msra.mxu0 %v740
        %961 = vmatprep.subr.mxu0 %v735
        %962 = vmatpush2.msra.mxu0 %v734
        %963 = vmatprep.subr.mxu0 %v729
        %964 = vmatpush2.msra.mxu0 %v728
        %965 = vmatprep.subr.mxu0 %v723
        %966 = vmatpush2.msra.mxu0 %v722
        %967 = vmatprep.subr.mxu0 %v717
        %968 = vmatpush2.msra.mxu0 %v716
        %969 = vmatprep.subr.mxu0 %v711
        %970 = vmatpush2.msra.mxu0 %v710
        %971 = vmatprep.mubr.f32.mxu0 %v611
        %972 = vmatmul.mubr.f32.gmra.mxu0 %v610
        %v973 = vpop.f32.mrf.mxu0
        %v974 = vadd.f32 %v817, %v973
        %v975 = vpop.f32.mrf.mxu0
        %v976 = vadd.f32 %v821, %v975
        %977 = vdwg.mxu0
        %978 = vmatprep.subr.mxu0 %v707
        %979 = vmatpush1.msra.mxu0 %v706
        %980 = vmatprep.subr.mxu0 %v701
        %981 = vmatpush1.msra.mxu0 %v700
        %982 = vmatprep.subr.mxu0 %v695
        %983 = vmatpush1.msra.mxu0 %v694
        %984 = vmatprep.subr.mxu0 %v689
        %985 = vmatpush1.msra.mxu0 %v688
        %986 = vmatprep.subr.mxu0 %v683
        %987 = vmatpush1.msra.mxu0 %v682
        %988 = vmatprep.subr.mxu0 %v677
        %989 = vmatpush1.msra.mxu0 %v676
        %990 = vmatprep.subr.mxu0 %v671
        %991 = vmatpush1.msra.mxu0 %v670
        %992 = vmatprep.subr.mxu0 %v665
        %993 = vmatpush1.msra.mxu0 %v664
        %994 = vmatprep.subr.mxu0 %v659
        %995 = vmatpush1.msra.mxu0 %v658
        %996 = vmatprep.subr.mxu0 %v653
        %997 = vmatpush1.msra.mxu0 %v652
        %998 = vmatprep.subr.mxu0 %v647
        %999 = vmatpush1.msra.mxu0 %v646
        %1000 = vmatprep.subr.mxu0 %v641
        %1001 = vmatpush1.msra.mxu0 %v640
        %1002 = vmatprep.subr.mxu0 %v635
        %1003 = vmatpush1.msra.mxu0 %v634
        %1004 = vmatprep.subr.mxu0 %v629
        %1005 = vmatpush1.msra.mxu0 %v628
        %1006 = vmatprep.subr.mxu0 %v623
        %1007 = vmatpush1.msra.mxu0 %v622
        %1008 = vmatprep.subr.mxu0 %v617
        %1009 = vmatpush1.msra.mxu0 %v616
        %1010 = vmatprep.subr.mxu0 %v803
        %1011 = vmatpush2.msra.mxu0 %v802
        %1012 = vmatprep.subr.mxu0 %v797
        %1013 = vmatpush2.msra.mxu0 %v796
        %1014 = vmatprep.subr.mxu0 %v791
        %1015 = vmatpush2.msra.mxu0 %v790
        %1016 = vmatprep.subr.mxu0 %v785
        %1017 = vmatpush2.msra.mxu0 %v784
        %1018 = vmatprep.subr.mxu0 %v779
        %1019 = vmatpush2.msra.mxu0 %v778
        %1020 = vmatprep.subr.mxu0 %v773
        %1021 = vmatpush2.msra.mxu0 %v772
        %1022 = vmatprep.subr.mxu0 %v767
        %1023 = vmatpush2.msra.mxu0 %v766
        %1024 = vmatprep.subr.mxu0 %v761
        %1025 = vmatpush2.msra.mxu0 %v760
        %1026 = vmatprep.subr.mxu0 %v755
        %1027 = vmatpush2.msra.mxu0 %v754
        %1028 = vmatprep.subr.mxu0 %v749
        %1029 = vmatpush2.msra.mxu0 %v748
        %1030 = vmatprep.subr.mxu0 %v743
        %1031 = vmatpush2.msra.mxu0 %v742
        %1032 = vmatprep.subr.mxu0 %v737
        %1033 = vmatpush2.msra.mxu0 %v736
        %1034 = vmatprep.subr.mxu0 %v731
        %1035 = vmatpush2.msra.mxu0 %v730
        %1036 = vmatprep.subr.mxu0 %v725
        %1037 = vmatpush2.msra.mxu0 %v724
        %1038 = vmatprep.subr.mxu0 %v719
        %1039 = vmatpush2.msra.mxu0 %v718
        %1040 = vmatprep.subr.mxu0 %v713
        %1041 = vmatpush2.msra.mxu0 %v712
        %1042 = vmatprep.mubr.f32.mxu0 %v611
        %1043 = vmatmul.mubr.f32.gmra.mxu0 %v610
        %v1044 = vpop.f32.mrf.mxu0
        %v1045 = vadd.f32 %v825, %v1044
        %v1046 = vpop.f32.mrf.mxu0
        %v1047 = vadd.f32 %v829, %v1046
        %1048 = vdwg.mxu0
        %1049 = vmatprep.subr.mxu0 0.0
        %1050 = vmatpush1.xpose.msra.mxu0 0.0
        %1051 = vmatprep.subr.mxu0 0.0
        %1052 = vmatpush1.xpose.msra.mxu0 0.0
        %1053 = vmatprep.subr.mxu0 0.0
        %1054 = vmatpush1.xpose.msra.mxu0 0.0
        %1055 = vmatprep.subr.mxu0 0.0
        %1056 = vmatpush1.xpose.msra.mxu0 0.0
        %1057 = vmatprep.subr.mxu0 0.0
        %1058 = vmatpush1.xpose.msra.mxu0 0.0
        %1059 = vmatprep.subr.mxu0 0.0
        %1060 = vmatpush1.xpose.msra.mxu0 0.0
        %1061 = vmatprep.subr.mxu0 0.0
        %1062 = vmatpush1.xpose.msra.mxu0 0.0
        %1063 = vmatprep.subr.mxu0 0.0
        %1064 = vmatpush1.xpose.msra.mxu0 0.0
        %1065 = vmatprep.subr.mxu0 0.0
        %1066 = vmatpush1.xpose.msra.mxu0 0.0
        %1067 = vmatprep.subr.mxu0 0.0
        %1068 = vmatpush1.xpose.msra.mxu0 0.0
        %1069 = vmatprep.subr.mxu0 0.0
        %1070 = vmatpush1.xpose.msra.mxu0 0.0
        %1071 = vmatprep.subr.mxu0 0.0
        %1072 = vmatpush1.xpose.msra.mxu0 0.0
        %1073 = vmatprep.subr.mxu0 0.0
        %1074 = vmatpush1.xpose.msra.mxu0 0.0
        %1075 = vmatprep.subr.mxu0 0.0
        %1076 = vmatpush1.xpose.msra.mxu0 0.0
        %1077 = vmatprep.subr.mxu0 0.0
        %1078 = vmatpush1.xpose.msra.mxu0 0.0
        %1079 = vmatprep.subr.mxu0 0.0
        %1080 = vmatpush1.xpose.msra.mxu0 %v974
        %1081 = vmatprep.subr.mxu0 0.0
        %1082 = vmatpush2.xpose.msra.mxu0 0.0
        %1083 = vmatprep.subr.mxu0 0.0
        %1084 = vmatpush2.xpose.msra.mxu0 0.0
        %1085 = vmatprep.subr.mxu0 0.0
        %1086 = vmatpush2.xpose.msra.mxu0 0.0
        %1087 = vmatprep.subr.mxu0 0.0
        %1088 = vmatpush2.xpose.msra.mxu0 0.0
        %1089 = vmatprep.subr.mxu0 0.0
        %1090 = vmatpush2.xpose.msra.mxu0 0.0
        %1091 = vmatprep.subr.mxu0 0.0
        %1092 = vmatpush2.xpose.msra.mxu0 0.0
        %1093 = vmatprep.subr.mxu0 0.0
        %1094 = vmatpush2.xpose.msra.mxu0 0.0
        %1095 = vmatprep.subr.mxu0 0.0
        %1096 = vmatpush2.xpose.msra.mxu0 0.0
        %1097 = vmatprep.subr.mxu0 0.0
        %1098 = vmatpush2.xpose.msra.mxu0 0.0
        %1099 = vmatprep.subr.mxu0 0.0
        %1100 = vmatpush2.xpose.msra.mxu0 0.0
        %1101 = vmatprep.subr.mxu0 0.0
        %1102 = vmatpush2.xpose.msra.mxu0 0.0
        %1103 = vmatprep.subr.mxu0 0.0
        %1104 = vmatpush2.xpose.msra.mxu0 0.0
        %1105 = vmatprep.subr.mxu0 0.0
        %1106 = vmatpush2.xpose.msra.mxu0 0.0
        %1107 = vmatprep.subr.mxu0 0.0
        %1108 = vmatpush2.xpose.msra.mxu0 0.0
        %1109 = vmatprep.subr.mxu0 0.0
        %1110 = vmatpush2.xpose.msra.mxu0 0.0
        %1111 = vmatprep.subr.mxu0 0.0
        %1112 = vmatpush2.xpose.msra.mxu0 0.0
        %1113 = vmatprep.mubr.f32.mxu0 0.0
        %1114 = vmatmul.mubr.f32.gmra.mxu0 %v903
        %v1115 = vpop.f32.mrf.mxu0
        %v1116 = vadd.f32 0.0, %v1115
        %v1117 = vpop.f32.mrf.mxu0
        %1118 = vdwg.mxu0
        %1119 = vmatprep.subr.mxu0 0.0
        %1120 = vmatpush1.xpose.msra.mxu0 0.0
        %1121 = vmatprep.subr.mxu0 0.0
        %1122 = vmatpush1.xpose.msra.mxu0 0.0
        %1123 = vmatprep.subr.mxu0 0.0
        %1124 = vmatpush1.xpose.msra.mxu0 0.0
        %1125 = vmatprep.subr.mxu0 0.0
        %1126 = vmatpush1.xpose.msra.mxu0 0.0
        %1127 = vmatprep.subr.mxu0 0.0
        %1128 = vmatpush1.xpose.msra.mxu0 0.0
        %1129 = vmatprep.subr.mxu0 0.0
        %1130 = vmatpush1.xpose.msra.mxu0 0.0
        %1131 = vmatprep.subr.mxu0 0.0
        %1132 = vmatpush1.xpose.msra.mxu0 0.0
        %1133 = vmatprep.subr.mxu0 0.0
        %1134 = vmatpush1.xpose.msra.mxu0 0.0
        %1135 = vmatprep.subr.mxu0 0.0
        %1136 = vmatpush1.xpose.msra.mxu0 0.0
        %1137 = vmatprep.subr.mxu0 0.0
        %1138 = vmatpush1.xpose.msra.mxu0 0.0
        %1139 = vmatprep.subr.mxu0 0.0
        %1140 = vmatpush1.xpose.msra.mxu0 0.0
        %1141 = vmatprep.subr.mxu0 0.0
        %1142 = vmatpush1.xpose.msra.mxu0 0.0
        %1143 = vmatprep.subr.mxu0 0.0
        %1144 = vmatpush1.xpose.msra.mxu0 0.0
        %1145 = vmatprep.subr.mxu0 0.0
        %1146 = vmatpush1.xpose.msra.mxu0 0.0
        %1147 = vmatprep.subr.mxu0 0.0
        %1148 = vmatpush1.xpose.msra.mxu0 0.0
        %1149 = vmatprep.subr.mxu0 0.0
        %1150 = vmatpush1.xpose.msra.mxu0 %v976
        %1151 = vmatprep.subr.mxu0 0.0
        %1152 = vmatpush2.xpose.msra.mxu0 0.0
        %1153 = vmatprep.subr.mxu0 0.0
        %1154 = vmatpush2.xpose.msra.mxu0 0.0
        %1155 = vmatprep.subr.mxu0 0.0
        %1156 = vmatpush2.xpose.msra.mxu0 0.0
        %1157 = vmatprep.subr.mxu0 0.0
        %1158 = vmatpush2.xpose.msra.mxu0 0.0
        %1159 = vmatprep.subr.mxu0 0.0
        %1160 = vmatpush2.xpose.msra.mxu0 0.0
        %1161 = vmatprep.subr.mxu0 0.0
        %1162 = vmatpush2.xpose.msra.mxu0 0.0
        %1163 = vmatprep.subr.mxu0 0.0
        %1164 = vmatpush2.xpose.msra.mxu0 0.0
        %1165 = vmatprep.subr.mxu0 0.0
        %1166 = vmatpush2.xpose.msra.mxu0 0.0
        %1167 = vmatprep.subr.mxu0 0.0
        %1168 = vmatpush2.xpose.msra.mxu0 0.0
        %1169 = vmatprep.subr.mxu0 0.0
        %1170 = vmatpush2.xpose.msra.mxu0 0.0
        %1171 = vmatprep.subr.mxu0 0.0
        %1172 = vmatpush2.xpose.msra.mxu0 0.0
        %1173 = vmatprep.subr.mxu0 0.0
        %1174 = vmatpush2.xpose.msra.mxu0 0.0
        %1175 = vmatprep.subr.mxu0 0.0
        %1176 = vmatpush2.xpose.msra.mxu0 0.0
        %1177 = vmatprep.subr.mxu0 0.0
        %1178 = vmatpush2.xpose.msra.mxu0 0.0
        %1179 = vmatprep.subr.mxu0 0.0
        %1180 = vmatpush2.xpose.msra.mxu0 0.0
        %1181 = vmatprep.subr.mxu0 0.0
        %1182 = vmatpush2.xpose.msra.mxu0 0.0
        %1183 = vmatprep.mubr.f32.mxu0 0.0
        %1184 = vmatmul.mubr.f32.gmra.mxu0 %v905
        %v1185 = vpop.f32.mrf.mxu0
        %v1186 = vadd.f32 0.0, %v1185
        %v1187 = vpop.f32.mrf.mxu0
        %1188 = vdwg.mxu0
        %vm1189 = vcmask 64512
        %v1190 = vsel %vm1189, %v1116, -inf
        %1191 = vmax.xlane.f32.xlu0 %v1190
        %v1192 = vpop.xlane.xlu0 %1191
        %v1193 = vsel %vm1189, %v1186, -inf
        %1194 = vmax.xlane.f32.xlu0 %v1193
        %v1195 = vpop.xlane.xlu0 %1194
        %v1196 = vsub.f32 %v1116, %v1192
        %v1197 = vsub.f32 %v1186, %v1195
        %v1198 = vmul.f32 %v1196, 1.442695
        %v1199 = vpow.pop %v1198
        %v1200 = vmul.f32 %v1197, 1.442695
        %v1201 = vpow.pop %v1200
        %v1202 = vsel %vm1189, %v1199, 0.0
        %1203 = vadd.xlane.f32.xlu0 %v1202
        %v1204 = vpop.xlane.xlu0 %1203
        %v1205 = vsel %vm1189, %v1201, 0.0
        %1206 = vadd.xlane.f32.xlu0 %v1205
        %v1207 = vpop.xlane.xlu0 %1206
        %v1208 = vrcp.pop %v1204
        %v1209 = vmul.f32 1.0, %v1208
        %v1210 = vrcp.pop %v1207
        %v1211 = vmul.f32 1.0, %v1210
        %v1212 = vmul.f32 %v1199, %v1209
        %v1213 = vmul.f32 %v1201, %v1211
        %v1215 = vsel %vm1189, %v1212, 0
        %1217 = vmatprep.subr.mxu0 0.0
        %1218 = vmatpush1.msra.mxu0 0.0
        %1219 = vmatprep.subr.mxu0 0.0
        %1220 = vmatpush1.msra.mxu0 0.0
        %1221 = vmatprep.subr.mxu0 0.0
        %1222 = vmatpush1.msra.mxu0 0.0
        %1223 = vmatprep.subr.mxu0 0.0
        %1224 = vmatpush1.msra.mxu0 0.0
        %1225 = vmatprep.subr.mxu0 0.0
        %1226 = vmatpush1.msra.mxu0 0.0
        %1227 = vmatprep.subr.mxu0 0.0
        %1228 = vmatpush1.msra.mxu0 0.0
        %1229 = vmatprep.subr.mxu0 0.0
        %1230 = vmatpush1.msra.mxu0 0.0
        %1231 = vmatprep.subr.mxu0 0.0
        %1232 = vmatpush1.msra.mxu0 0.0
        %1233 = vmatprep.subr.mxu0 0.0
        %1234 = vmatpush1.msra.mxu0 0.0
        %1235 = vmatprep.subr.mxu0 0.0
        %1236 = vmatpush1.msra.mxu0 0.0
        %1237 = vmatprep.subr.mxu0 0.0
        %1238 = vmatpush1.msra.mxu0 0.0
        %1239 = vmatprep.subr.mxu0 0.0
        %1240 = vmatpush1.msra.mxu0 0.0
        %1241 = vmatprep.subr.mxu0 0.0
        %1242 = vmatpush1.msra.mxu0 0.0
        %1243 = vmatprep.subr.mxu0 0.0
        %1244 = vmatpush1.msra.mxu0 0.0
        %1245 = vmatprep.subr.mxu0 0.0
        %1246 = vmatpush1.msra.mxu0 0.0
        %1247 = vmatprep.subr.mxu0 0.0
        %1248 = vmatpush1.msra.mxu0 %v1045
        %1249 = vmatprep.subr.mxu0 0.0
        %1250 = vmatpush2.msra.mxu0 0.0
        %1251 = vmatprep.subr.mxu0 0.0
        %1252 = vmatpush2.msra.mxu0 0.0
        %1253 = vmatprep.subr.mxu0 0.0
        %1254 = vmatpush2.msra.mxu0 0.0
        %1255 = vmatprep.subr.mxu0 0.0
        %1256 = vmatpush2.msra.mxu0 0.0
        %1257 = vmatprep.subr.mxu0 0.0
        %1258 = vmatpush2.msra.mxu0 0.0
        %1259 = vmatprep.subr.mxu0 0.0
        %1260 = vmatpush2.msra.mxu0 0.0
        %1261 = vmatprep.subr.mxu0 0.0
        %1262 = vmatpush2.msra.mxu0 0.0
        %1263 = vmatprep.subr.mxu0 0.0
        %1264 = vmatpush2.msra.mxu0 0.0
        %1265 = vmatprep.subr.mxu0 0.0
        %1266 = vmatpush2.msra.mxu0 0.0
        %1267 = vmatprep.subr.mxu0 0.0
        %1268 = vmatpush2.msra.mxu0 0.0
        %1269 = vmatprep.subr.mxu0 0.0
        %1270 = vmatpush2.msra.mxu0 0.0
        %1271 = vmatprep.subr.mxu0 0.0
        %1272 = vmatpush2.msra.mxu0 0.0
        %1273 = vmatprep.subr.mxu0 0.0
        %1274 = vmatpush2.msra.mxu0 0.0
        %1275 = vmatprep.subr.mxu0 0.0
        %1276 = vmatpush2.msra.mxu0 0.0
        %1277 = vmatprep.subr.mxu0 0.0
        %1278 = vmatpush2.msra.mxu0 0.0
        %1279 = vmatprep.subr.mxu0 0.0
        %1280 = vmatpush2.msra.mxu0 0.0
        %1281 = vmatprep.mubr.f32.mxu0 0.0
        %1282 = vmatmul.mubr.f32.gmra.mxu0 %v1215
        %v1283 = vpop.f32.mrf.mxu0
        %v1284 = vadd.f32 0.0, %v1283
        %v1285 = vpop.f32.mrf.mxu0
        %1286 = vdwg.mxu0
        %v1288 = vsel %vm1189, %v1213, 0
        %1290 = vmatprep.subr.mxu0 0.0
        %1291 = vmatpush1.msra.mxu0 0.0
        %1292 = vmatprep.subr.mxu0 0.0
        %1293 = vmatpush1.msra.mxu0 0.0
        %1294 = vmatprep.subr.mxu0 0.0
        %1295 = vmatpush1.msra.mxu0 0.0
        %1296 = vmatprep.subr.mxu0 0.0
        %1297 = vmatpush1.msra.mxu0 0.0
        %1298 = vmatprep.subr.mxu0 0.0
        %1299 = vmatpush1.msra.mxu0 0.0
        %1300 = vmatprep.subr.mxu0 0.0
        %1301 = vmatpush1.msra.mxu0 0.0
        %1302 = vmatprep.subr.mxu0 0.0
        %1303 = vmatpush1.msra.mxu0 0.0
        %1304 = vmatprep.subr.mxu0 0.0
        %1305 = vmatpush1.msra.mxu0 0.0
        %1306 = vmatprep.subr.mxu0 0.0
        %1307 = vmatpush1.msra.mxu0 0.0
        %1308 = vmatprep.subr.mxu0 0.0
        %1309 = vmatpush1.msra.mxu0 0.0
        %1310 = vmatprep.subr.mxu0 0.0
        %1311 = vmatpush1.msra.mxu0 0.0
        %1312 = vmatprep.subr.mxu0 0.0
        %1313 = vmatpush1.msra.mxu0 0.0
        %1314 = vmatprep.subr.mxu0 0.0
        %1315 = vmatpush1.msra.mxu0 0.0
        %1316 = vmatprep.subr.mxu0 0.0
        %1317 = vmatpush1.msra.mxu0 0.0
        %1318 = vmatprep.subr.mxu0 0.0
        %1319 = vmatpush1.msra.mxu0 0.0
        %1320 = vmatprep.subr.mxu0 0.0
        %1321 = vmatpush1.msra.mxu0 %v1047
        %1322 = vmatprep.subr.mxu0 0.0
        %1323 = vmatpush2.msra.mxu0 0.0
        %1324 = vmatprep.subr.mxu0 0.0
        %1325 = vmatpush2.msra.mxu0 0.0
        %1326 = vmatprep.subr.mxu0 0.0
        %1327 = vmatpush2.msra.mxu0 0.0
        %1328 = vmatprep.subr.mxu0 0.0
        %1329 = vmatpush2.msra.mxu0 0.0
        %1330 = vmatprep.subr.mxu0 0.0
        %1331 = vmatpush2.msra.mxu0 0.0
        %1332 = vmatprep.subr.mxu0 0.0
        %1333 = vmatpush2.msra.mxu0 0.0
        %1334 = vmatprep.subr.mxu0 0.0
        %1335 = vmatpush2.msra.mxu0 0.0
        %1336 = vmatprep.subr.mxu0 0.0
        %1337 = vmatpush2.msra.mxu0 0.0
        %1338 = vmatprep.subr.mxu0 0.0
        %1339 = vmatpush2.msra.mxu0 0.0
        %1340 = vmatprep.subr.mxu0 0.0
        %1341 = vmatpush2.msra.mxu0 0.0
        %1342 = vmatprep.subr.mxu0 0.0
        %1343 = vmatpush2.msra.mxu0 0.0
        %1344 = vmatprep.subr.mxu0 0.0
        %1345 = vmatpush2.msra.mxu0 0.0
        %1346 = vmatprep.subr.mxu0 0.0
        %1347 = vmatpush2.msra.mxu0 0.0
        %1348 = vmatprep.subr.mxu0 0.0
        %1349 = vmatpush2.msra.mxu0 0.0
        %1350 = vmatprep.subr.mxu0 0.0
        %1351 = vmatpush2.msra.mxu0 0.0
        %1352 = vmatprep.subr.mxu0 0.0
        %1353 = vmatpush2.msra.mxu0 0.0
        %1354 = vmatprep.mubr.f32.mxu0 0.0
        %1355 = vmatmul.mubr.f32.gmra.mxu0 %v1288
        %v1356 = vpop.f32.mrf.mxu0
        %v1357 = vadd.f32 0.0, %v1356
        %v1358 = vpop.f32.mrf.mxu0
        %1359 = vdwg.mxu0
        %v1360 = vld [vmem:[#allocation10] sm:$0xff]
        %v1361 = vld [vmem:[#allocation10 + $0x8] sm:$0xff]
        %v1362 = vld [vmem:[#allocation10 + $0x10] sm:$0xff]
        %v1363 = vld [vmem:[#allocation10 + $0x18] sm:$0xff]
        %v1364 = vld [vmem:[#allocation10 + $0x20] sm:$0xff]
        %v1365 = vld [vmem:[#allocation10 + $0x28] sm:$0xff]
        %v1366 = vld [vmem:[#allocation10 + $0x30] sm:$0xff]
        %v1367 = vld [vmem:[#allocation10 + $0x38] sm:$0xff]
        %v1368 = vld [vmem:[#allocation10 + $0x40] sm:$0xff]
        %v1369 = vld [vmem:[#allocation10 + $0x48] sm:$0xff]
        %v1370 = vld [vmem:[#allocation10 + $0x50] sm:$0xff]
        %v1371 = vld [vmem:[#allocation10 + $0x58] sm:$0xff]
        %v1372 = vld [vmem:[#allocation10 + $0x60] sm:$0xff]
        %v1373 = vld [vmem:[#allocation10 + $0x68] sm:$0xff]
        %v1374 = vld [vmem:[#allocation10 + $0x70] sm:$0xff]
        %v1375 = vld [vmem:[#allocation10 + $0x78] sm:$0xff]
        %v1376 = vld [vmem:[#allocation10 + $0x80] sm:$0xff]
        %v1377 = vld [vmem:[#allocation10 + $0x88] sm:$0xff]
        %v1378 = vld [vmem:[#allocation10 + $0x90] sm:$0xff]
        %v1379 = vld [vmem:[#allocation10 + $0x98] sm:$0xff]
        %v1380 = vld [vmem:[#allocation10 + $0xa0] sm:$0xff]
        %v1381 = vld [vmem:[#allocation10 + $0xa8] sm:$0xff]
        %v1382 = vld [vmem:[#allocation10 + $0xb0] sm:$0xff]
        %v1383 = vld [vmem:[#allocation10 + $0xb8] sm:$0xff]
        %v1384 = vld [vmem:[#allocation10 + $0xc0] sm:$0xff]
        %v1385 = vld [vmem:[#allocation10 + $0xc8] sm:$0xff]
        %v1386 = vld [vmem:[#allocation10 + $0xd0] sm:$0xff]
        %v1387 = vld [vmem:[#allocation10 + $0xd8] sm:$0xff]
        %v1388 = vld [vmem:[#allocation10 + $0xe0] sm:$0xff]
        %v1389 = vld [vmem:[#allocation10 + $0xe8] sm:$0xff]
        %v1390 = vld [vmem:[#allocation10 + $0xf0] sm:$0xff]
        %v1391 = vld [vmem:[#allocation10 + $0xf8] sm:$0xff]
        %v1392 = vld [vmem:[#allocation10 + $0x100] sm:$0xff]
        %v1393 = vld [vmem:[#allocation10 + $0x108] sm:$0xff]
        %v1394 = vld [vmem:[#allocation10 + $0x110] sm:$0xff]
        %v1395 = vld [vmem:[#allocation10 + $0x118] sm:$0xff]
        %v1396 = vld [vmem:[#allocation10 + $0x120] sm:$0xff]
        %v1397 = vld [vmem:[#allocation10 + $0x128] sm:$0xff]
        %v1398 = vld [vmem:[#allocation10 + $0x130] sm:$0xff]
        %v1399 = vld [vmem:[#allocation10 + $0x138] sm:$0xff]
        %v1400 = vld [vmem:[#allocation10 + $0x140] sm:$0xff]
        %v1401 = vld [vmem:[#allocation10 + $0x148] sm:$0xff]
        %v1402 = vld [vmem:[#allocation10 + $0x150] sm:$0xff]
        %v1403 = vld [vmem:[#allocation10 + $0x158] sm:$0xff]
        %v1404 = vld [vmem:[#allocation10 + $0x160] sm:$0xff]
        %v1405 = vld [vmem:[#allocation10 + $0x168] sm:$0xff]
        %v1406 = vld [vmem:[#allocation10 + $0x170] sm:$0xff]
        %v1407 = vld [vmem:[#allocation10 + $0x178] sm:$0xff]
        %v1408 = vld [vmem:[#allocation10 + $0x180] sm:$0xff]
        %v1409 = vld [vmem:[#allocation10 + $0x188] sm:$0xff]
        %v1410 = vld [vmem:[#allocation10 + $0x190] sm:$0xff]
        %v1411 = vld [vmem:[#allocation10 + $0x198] sm:$0xff]
        %v1412 = vld [vmem:[#allocation10 + $0x1a0] sm:$0xff]
        %v1413 = vld [vmem:[#allocation10 + $0x1a8] sm:$0xff]
        %v1414 = vld [vmem:[#allocation10 + $0x1b0] sm:$0xff]
        %v1415 = vld [vmem:[#allocation10 + $0x1b8] sm:$0xff]
        %v1416 = vld [vmem:[#allocation10 + $0x1c0] sm:$0xff]
        %v1417 = vld [vmem:[#allocation10 + $0x1c8] sm:$0xff]
        %v1418 = vld [vmem:[#allocation10 + $0x1d0] sm:$0xff]
        %v1419 = vld [vmem:[#allocation10 + $0x1d8] sm:$0xff]
        %v1420 = vld [vmem:[#allocation10 + $0x1e0] sm:$0xff]
        %v1421 = vld [vmem:[#allocation10 + $0x1e8] sm:$0xff]
        %v1422 = vld [vmem:[#allocation10 + $0x1f0] sm:$0xff]
        %v1423 = vld [vmem:[#allocation10 + $0x1f8] sm:$0xff]
        %1424 = vmatprep.subr.mxu0 %v1391
        %1425 = vmatpush1.msra.mxu0 %v1390
        %1426 = vmatprep.subr.mxu0 %v1389
        %1427 = vmatpush1.msra.mxu0 %v1388
        %1428 = vmatprep.subr.mxu0 %v1387
        %1429 = vmatpush1.msra.mxu0 %v1386
        %1430 = vmatprep.subr.mxu0 %v1385
        %1431 = vmatpush1.msra.mxu0 %v1384
        %1432 = vmatprep.subr.mxu0 %v1383
        %1433 = vmatpush1.msra.mxu0 %v1382
        %1434 = vmatprep.subr.mxu0 %v1381
        %1435 = vmatpush1.msra.mxu0 %v1380
        %1436 = vmatprep.subr.mxu0 %v1379
        %1437 = vmatpush1.msra.mxu0 %v1378
        %1438 = vmatprep.subr.mxu0 %v1377
        %1439 = vmatpush1.msra.mxu0 %v1376
        %1440 = vmatprep.subr.mxu0 %v1375
        %1441 = vmatpush1.msra.mxu0 %v1374
        %1442 = vmatprep.subr.mxu0 %v1373
        %1443 = vmatpush1.msra.mxu0 %v1372
        %1444 = vmatprep.subr.mxu0 %v1371
        %1445 = vmatpush1.msra.mxu0 %v1370
        %1446 = vmatprep.subr.mxu0 %v1369
        %1447 = vmatpush1.msra.mxu0 %v1368
        %1448 = vmatprep.subr.mxu0 %v1367
        %1449 = vmatpush1.msra.mxu0 %v1366
        %1450 = vmatprep.subr.mxu0 %v1365
        %1451 = vmatpush1.msra.mxu0 %v1364
        %1452 = vmatprep.subr.mxu0 %v1363
        %1453 = vmatpush1.msra.mxu0 %v1362
        %1454 = vmatprep.subr.mxu0 %v1361
        %1455 = vmatpush1.msra.mxu0 %v1360
        %1456 = vmatprep.subr.mxu0 %v1423
        %1457 = vmatpush2.msra.mxu0 %v1422
        %1458 = vmatprep.subr.mxu0 %v1421
        %1459 = vmatpush2.msra.mxu0 %v1420
        %1460 = vmatprep.subr.mxu0 %v1419
        %1461 = vmatpush2.msra.mxu0 %v1418
        %1462 = vmatprep.subr.mxu0 %v1417
        %1463 = vmatpush2.msra.mxu0 %v1416
        %1464 = vmatprep.subr.mxu0 %v1415
        %1465 = vmatpush2.msra.mxu0 %v1414
        %1466 = vmatprep.subr.mxu0 %v1413
        %1467 = vmatpush2.msra.mxu0 %v1412
        %1468 = vmatprep.subr.mxu0 %v1411
        %1469 = vmatpush2.msra.mxu0 %v1410
        %1470 = vmatprep.subr.mxu0 %v1409
        %1471 = vmatpush2.msra.mxu0 %v1408
        %1472 = vmatprep.subr.mxu0 %v1407
        %1473 = vmatpush2.msra.mxu0 %v1406
        %1474 = vmatprep.subr.mxu0 %v1405
        %1475 = vmatpush2.msra.mxu0 %v1404
        %1476 = vmatprep.subr.mxu0 %v1403
        %1477 = vmatpush2.msra.mxu0 %v1402
        %1478 = vmatprep.subr.mxu0 %v1401
        %1479 = vmatpush2.msra.mxu0 %v1400
        %1480 = vmatprep.subr.mxu0 %v1399
        %1481 = vmatpush2.msra.mxu0 %v1398
        %1482 = vmatprep.subr.mxu0 %v1397
        %1483 = vmatpush2.msra.mxu0 %v1396
        %1484 = vmatprep.subr.mxu0 %v1395
        %1485 = vmatpush2.msra.mxu0 %v1394
        %1486 = vmatprep.subr.mxu0 %v1393
        %1487 = vmatpush2.msra.mxu0 %v1392
        %1488 = vmatprep.mubr.f32.mxu0 %v1357
        %1489 = vmatmul.mubr.f32.gmra.mxu0 %v1284
        %v1490 = vpop.f32.mrf.mxu0
        %v1491 = vadd.f32 0.0, %v1490
        %v1492 = vpop.f32.mrf.mxu0
        %v1493 = vadd.f32 0.0, %v1492
        %1494 = vdwg.mxu0
        %v1495 = vadd.f32 %v565, %v1491
        %v1496 = vadd.f32 %v566, %v1493
        %v1497 = vld [vmem:[%s6] sm:$0x3]
        %v1499 = vlaneseq
        %v1500 = vshrl.u32 %v1499, 7
        %v1501 = vsub.s32 0, %v1500
        %v1502 = vrot.slane %v1497, %v1501
        %v1503 = vlaneseq
        %v1504 = vshrl.u32 %v1503, 7
        %v1505 = vsub.s32 1, %v1504
        %v1506 = vrot.slane %v1497, %v1505
        %v1509 = vadd.f32 %v1495, %v1502
        %v1510 = vadd.f32 %v1496, %v1506
        %v1511 = vld [vmem:[#allocation11] sm:$0x3]
        %v1512 = vld [vmem:[#allocation13] sm:$0x3]
        %v1513 = vadd.f32 %v1509, %v1510
        %1514 = vadd.xlane.f32.xlu0 %v1513
        %v1515 = vpop.xlane.xlu0 %1514
        %v1516 = vmul.f32 %v1515, %v572
        %v1517 = vsub.f32 %v1509, %v1516
        %v1518 = vsub.f32 %v1510, %v1516
        %v1519 = vmul.f32 %v1517, %v1517
        %v1520 = vmul.f32 %v1518, %v1518
        %v1521 = vadd.f32 %v1519, %v1520
        %1522 = vadd.xlane.f32.xlu0 %v1521
        %v1523 = vpop.xlane.xlu0 %1522
        %v1524 = vmul.f32 %v1523, %v572
        %v1525 = vadd.f32 %v1524, 1e-12
        %v1526 = vrsqrt.pop %v1525
        %v1527 = vmul.f32 %v1517, %v1526
        %v1528 = vmul.f32 %v1518, %v1526
        %v1530 = vlaneseq
        %v1531 = vshrl.u32 %v1530, 7
        %v1532 = vsub.s32 0, %v1531
        %v1533 = vrot.slane %v1511, %v1532
        %v1534 = vlaneseq
        %v1535 = vshrl.u32 %v1534, 7
        %v1536 = vsub.s32 1, %v1535
        %v1537 = vrot.slane %v1511, %v1536
        %v1540 = vmul.f32 %v1527, %v1533
        %v1541 = vmul.f32 %v1528, %v1537
        %v1543 = vlaneseq
        %v1544 = vshrl.u32 %v1543, 7
        %v1545 = vsub.s32 0, %v1544
        %v1546 = vrot.slane %v1512, %v1545
        %v1547 = vlaneseq
        %v1548 = vshrl.u32 %v1547, 7
        %v1549 = vsub.s32 1, %v1548
        %v1550 = vrot.slane %v1512, %v1549
        %v1553 = vadd.f32 %v1540, %v1546
        %v1554 = vadd.f32 %v1541, %v1550
        %v1555 = vld [vmem:[#allocation14] sm:$0xff]
        %v1556 = vld [vmem:[#allocation14 + $0x8] sm:$0xff]
        %v1557 = vld [vmem:[#allocation14 + $0x10] sm:$0xff]
        %v1558 = vld [vmem:[#allocation14 + $0x18] sm:$0xff]
        %v1559 = vld [vmem:[#allocation14 + $0x20] sm:$0xff]
        %v1560 = vld [vmem:[#allocation14 + $0x28] sm:$0xff]
        %v1561 = vld [vmem:[#allocation14 + $0x30] sm:$0xff]
        %v1562 = vld [vmem:[#allocation14 + $0x38] sm:$0xff]
        %v1563 = vld [vmem:[#allocation14 + $0x40] sm:$0xff]
        %v1564 = vld [vmem:[#allocation14 + $0x48] sm:$0xff]
        %v1565 = vld [vmem:[#allocation14 + $0x50] sm:$0xff]
        %v1566 = vld [vmem:[#allocation14 + $0x58] sm:$0xff]
        %v1567 = vld [vmem:[#allocation14 + $0x60] sm:$0xff]
        %v1568 = vld [vmem:[#allocation14 + $0x68] sm:$0xff]
        %v1569 = vld [vmem:[#allocation14 + $0x70] sm:$0xff]
        %v1570 = vld [vmem:[#allocation14 + $0x78] sm:$0xff]
        %v1571 = vld [vmem:[#allocation14 + $0x80] sm:$0xff]
        %v1572 = vld [vmem:[#allocation14 + $0x88] sm:$0xff]
        %v1573 = vld [vmem:[#allocation14 + $0x90] sm:$0xff]
        %v1574 = vld [vmem:[#allocation14 + $0x98] sm:$0xff]
        %v1575 = vld [vmem:[#allocation14 + $0xa0] sm:$0xff]
        %v1576 = vld [vmem:[#allocation14 + $0xa8] sm:$0xff]
        %v1577 = vld [vmem:[#allocation14 + $0xb0] sm:$0xff]
        %v1578 = vld [vmem:[#allocation14 + $0xb8] sm:$0xff]
        %v1579 = vld [vmem:[#allocation14 + $0xc0] sm:$0xff]
        %v1580 = vld [vmem:[#allocation14 + $0xc8] sm:$0xff]
        %v1581 = vld [vmem:[#allocation14 + $0xd0] sm:$0xff]
        %v1582 = vld [vmem:[#allocation14 + $0xd8] sm:$0xff]
        %v1583 = vld [vmem:[#allocation14 + $0xe0] sm:$0xff]
        %v1584 = vld [vmem:[#allocation14 + $0xe8] sm:$0xff]
        %v1585 = vld [vmem:[#allocation14 + $0xf0] sm:$0xff]
        %v1586 = vld [vmem:[#allocation14 + $0xf8] sm:$0xff]
        %v1587 = vld [vmem:[#allocation14 + $0x100] sm:$0xff]
        %v1588 = vld [vmem:[#allocation14 + $0x108] sm:$0xff]
        %v1589 = vld [vmem:[#allocation14 + $0x110] sm:$0xff]
        %v1590 = vld [vmem:[#allocation14 + $0x118] sm:$0xff]
        %v1591 = vld [vmem:[#allocation14 + $0x120] sm:$0xff]
        %v1592 = vld [vmem:[#allocation14 + $0x128] sm:$0xff]
        %v1593 = vld [vmem:[#allocation14 + $0x130] sm:$0xff]
        %v1594 = vld [vmem:[#allocation14 + $0x138] sm:$0xff]
        %v1595 = vld [vmem:[#allocation14 + $0x140] sm:$0xff]
        %v1596 = vld [vmem:[#allocation14 + $0x148] sm:$0xff]
        %v1597 = vld [vmem:[#allocation14 + $0x150] sm:$0xff]
        %v1598 = vld [vmem:[#allocation14 + $0x158] sm:$0xff]
        %v1599 = vld [vmem:[#allocation14 + $0x160] sm:$0xff]
        %v1600 = vld [vmem:[#allocation14 + $0x168] sm:$0xff]
        %v1601 = vld [vmem:[#allocation14 + $0x170] sm:$0xff]
        %v1602 = vld [vmem:[#allocation14 + $0x178] sm:$0xff]
        %v1603 = vld [vmem:[#allocation14 + $0x180] sm:$0xff]
        %v1604 = vld [vmem:[#allocation14 + $0x188] sm:$0xff]
        %v1605 = vld [vmem:[#allocation14 + $0x190] sm:$0xff]
        %v1606 = vld [vmem:[#allocation14 + $0x198] sm:$0xff]
        %v1607 = vld [vmem:[#allocation14 + $0x1a0] sm:$0xff]
        %v1608 = vld [vmem:[#allocation14 + $0x1a8] sm:$0xff]
        %v1609 = vld [vmem:[#allocation14 + $0x1b0] sm:$0xff]
        %v1610 = vld [vmem:[#allocation14 + $0x1b8] sm:$0xff]
        %v1611 = vld [vmem:[#allocation14 + $0x1c0] sm:$0xff]
        %v1612 = vld [vmem:[#allocation14 + $0x1c8] sm:$0xff]
        %v1613 = vld [vmem:[#allocation14 + $0x1d0] sm:$0xff]
        %v1614 = vld [vmem:[#allocation14 + $0x1d8] sm:$0xff]
        %v1615 = vld [vmem:[#allocation14 + $0x1e0] sm:$0xff]
        %v1616 = vld [vmem:[#allocation14 + $0x1e8] sm:$0xff]
        %v1617 = vld [vmem:[#allocation14 + $0x1f0] sm:$0xff]
        %v1618 = vld [vmem:[#allocation14 + $0x1f8] sm:$0xff]
        %v1619 = vld [vmem:[#allocation14 + $0x200] sm:$0xff]
        %v1620 = vld [vmem:[#allocation14 + $0x208] sm:$0xff]
        %v1621 = vld [vmem:[#allocation14 + $0x210] sm:$0xff]
        %v1622 = vld [vmem:[#allocation14 + $0x218] sm:$0xff]
        %v1623 = vld [vmem:[#allocation14 + $0x220] sm:$0xff]
        %v1624 = vld [vmem:[#allocation14 + $0x228] sm:$0xff]
        %v1625 = vld [vmem:[#allocation14 + $0x230] sm:$0xff]
        %v1626 = vld [vmem:[#allocation14 + $0x238] sm:$0xff]
        %v1627 = vld [vmem:[#allocation14 + $0x240] sm:$0xff]
        %v1628 = vld [vmem:[#allocation14 + $0x248] sm:$0xff]
        %v1629 = vld [vmem:[#allocation14 + $0x250] sm:$0xff]
        %v1630 = vld [vmem:[#allocation14 + $0x258] sm:$0xff]
        %v1631 = vld [vmem:[#allocation14 + $0x260] sm:$0xff]
        %v1632 = vld [vmem:[#allocation14 + $0x268] sm:$0xff]
        %v1633 = vld [vmem:[#allocation14 + $0x270] sm:$0xff]
        %v1634 = vld [vmem:[#allocation14 + $0x278] sm:$0xff]
        %v1635 = vld [vmem:[#allocation14 + $0x280] sm:$0xff]
        %v1636 = vld [vmem:[#allocation14 + $0x288] sm:$0xff]
        %v1637 = vld [vmem:[#allocation14 + $0x290] sm:$0xff]
        %v1638 = vld [vmem:[#allocation14 + $0x298] sm:$0xff]
        %v1639 = vld [vmem:[#allocation14 + $0x2a0] sm:$0xff]
        %v1640 = vld [vmem:[#allocation14 + $0x2a8] sm:$0xff]
        %v1641 = vld [vmem:[#allocation14 + $0x2b0] sm:$0xff]
        %v1642 = vld [vmem:[#allocation14 + $0x2b8] sm:$0xff]
        %v1643 = vld [vmem:[#allocation14 + $0x2c0] sm:$0xff]
        %v1644 = vld [vmem:[#allocation14 + $0x2c8] sm:$0xff]
        %v1645 = vld [vmem:[#allocation14 + $0x2d0] sm:$0xff]
        %v1646 = vld [vmem:[#allocation14 + $0x2d8] sm:$0xff]
        %v1647 = vld [vmem:[#allocation14 + $0x2e0] sm:$0xff]
        %v1648 = vld [vmem:[#allocation14 + $0x2e8] sm:$0xff]
        %v1649 = vld [vmem:[#allocation14 + $0x2f0] sm:$0xff]
        %v1650 = vld [vmem:[#allocation14 + $0x2f8] sm:$0xff]
        %v1651 = vld [vmem:[#allocation14 + $0x300] sm:$0xff]
        %v1652 = vld [vmem:[#allocation14 + $0x308] sm:$0xff]
        %v1653 = vld [vmem:[#allocation14 + $0x310] sm:$0xff]
        %v1654 = vld [vmem:[#allocation14 + $0x318] sm:$0xff]
        %v1655 = vld [vmem:[#allocation14 + $0x320] sm:$0xff]
        %v1656 = vld [vmem:[#allocation14 + $0x328] sm:$0xff]
        %v1657 = vld [vmem:[#allocation14 + $0x330] sm:$0xff]
        %v1658 = vld [vmem:[#allocation14 + $0x338] sm:$0xff]
        %v1659 = vld [vmem:[#allocation14 + $0x340] sm:$0xff]
        %v1660 = vld [vmem:[#allocation14 + $0x348] sm:$0xff]
        %v1661 = vld [vmem:[#allocation14 + $0x350] sm:$0xff]
        %v1662 = vld [vmem:[#allocation14 + $0x358] sm:$0xff]
        %v1663 = vld [vmem:[#allocation14 + $0x360] sm:$0xff]
        %v1664 = vld [vmem:[#allocation14 + $0x368] sm:$0xff]
        %v1665 = vld [vmem:[#allocation14 + $0x370] sm:$0xff]
        %v1666 = vld [vmem:[#allocation14 + $0x378] sm:$0xff]
        %v1667 = vld [vmem:[#allocation14 + $0x380] sm:$0xff]
        %v1668 = vld [vmem:[#allocation14 + $0x388] sm:$0xff]
        %v1669 = vld [vmem:[#allocation14 + $0x390] sm:$0xff]
        %v1670 = vld [vmem:[#allocation14 + $0x398] sm:$0xff]
        %v1671 = vld [vmem:[#allocation14 + $0x3a0] sm:$0xff]
        %v1672 = vld [vmem:[#allocation14 + $0x3a8] sm:$0xff]
        %v1673 = vld [vmem:[#allocation14 + $0x3b0] sm:$0xff]
        %v1674 = vld [vmem:[#allocation14 + $0x3b8] sm:$0xff]
        %v1675 = vld [vmem:[#allocation14 + $0x3c0] sm:$0xff]
        %v1676 = vld [vmem:[#allocation14 + $0x3c8] sm:$0xff]
        %v1677 = vld [vmem:[#allocation14 + $0x3d0] sm:$0xff]
        %v1678 = vld [vmem:[#allocation14 + $0x3d8] sm:$0xff]
        %v1679 = vld [vmem:[#allocation14 + $0x3e0] sm:$0xff]
        %v1680 = vld [vmem:[#allocation14 + $0x3e8] sm:$0xff]
        %v1681 = vld [vmem:[#allocation14 + $0x3f0] sm:$0xff]
        %v1682 = vld [vmem:[#allocation14 + $0x3f8] sm:$0xff]
        %v1683 = vld [vmem:[#allocation14 + $0x400] sm:$0xff]
        %v1684 = vld [vmem:[#allocation14 + $0x408] sm:$0xff]
        %v1685 = vld [vmem:[#allocation14 + $0x410] sm:$0xff]
        %v1686 = vld [vmem:[#allocation14 + $0x418] sm:$0xff]
        %v1687 = vld [vmem:[#allocation14 + $0x420] sm:$0xff]
        %v1688 = vld [vmem:[#allocation14 + $0x428] sm:$0xff]
        %v1689 = vld [vmem:[#allocation14 + $0x430] sm:$0xff]
        %v1690 = vld [vmem:[#allocation14 + $0x438] sm:$0xff]
        %v1691 = vld [vmem:[#allocation14 + $0x440] sm:$0xff]
        %v1692 = vld [vmem:[#allocation14 + $0x448] sm:$0xff]
        %v1693 = vld [vmem:[#allocation14 + $0x450] sm:$0xff]
        %v1694 = vld [vmem:[#allocation14 + $0x458] sm:$0xff]
        %v1695 = vld [vmem:[#allocation14 + $0x460] sm:$0xff]
        %v1696 = vld [vmem:[#allocation14 + $0x468] sm:$0xff]
        %v1697 = vld [vmem:[#allocation14 + $0x470] sm:$0xff]
        %v1698 = vld [vmem:[#allocation14 + $0x478] sm:$0xff]
        %v1699 = vld [vmem:[#allocation14 + $0x480] sm:$0xff]
        %v1700 = vld [vmem:[#allocation14 + $0x488] sm:$0xff]
        %v1701 = vld [vmem:[#allocation14 + $0x490] sm:$0xff]
        %v1702 = vld [vmem:[#allocation14 + $0x498] sm:$0xff]
        %v1703 = vld [vmem:[#allocation14 + $0x4a0] sm:$0xff]
        %v1704 = vld [vmem:[#allocation14 + $0x4a8] sm:$0xff]
        %v1705 = vld [vmem:[#allocation14 + $0x4b0] sm:$0xff]
        %v1706 = vld [vmem:[#allocation14 + $0x4b8] sm:$0xff]
        %v1707 = vld [vmem:[#allocation14 + $0x4c0] sm:$0xff]
        %v1708 = vld [vmem:[#allocation14 + $0x4c8] sm:$0xff]
        %v1709 = vld [vmem:[#allocation14 + $0x4d0] sm:$0xff]
        %v1710 = vld [vmem:[#allocation14 + $0x4d8] sm:$0xff]
        %v1711 = vld [vmem:[#allocation14 + $0x4e0] sm:$0xff]
        %v1712 = vld [vmem:[#allocation14 + $0x4e8] sm:$0xff]
        %v1713 = vld [vmem:[#allocation14 + $0x4f0] sm:$0xff]
        %v1714 = vld [vmem:[#allocation14 + $0x4f8] sm:$0xff]
        %v1715 = vld [vmem:[#allocation14 + $0x500] sm:$0xff]
        %v1716 = vld [vmem:[#allocation14 + $0x508] sm:$0xff]
        %v1717 = vld [vmem:[#allocation14 + $0x510] sm:$0xff]
        %v1718 = vld [vmem:[#allocation14 + $0x518] sm:$0xff]
        %v1719 = vld [vmem:[#allocation14 + $0x520] sm:$0xff]
        %v1720 = vld [vmem:[#allocation14 + $0x528] sm:$0xff]
        %v1721 = vld [vmem:[#allocation14 + $0x530] sm:$0xff]
        %v1722 = vld [vmem:[#allocation14 + $0x538] sm:$0xff]
        %v1723 = vld [vmem:[#allocation14 + $0x540] sm:$0xff]
        %v1724 = vld [vmem:[#allocation14 + $0x548] sm:$0xff]
        %v1725 = vld [vmem:[#allocation14 + $0x550] sm:$0xff]
        %v1726 = vld [vmem:[#allocation14 + $0x558] sm:$0xff]
        %v1727 = vld [vmem:[#allocation14 + $0x560] sm:$0xff]
        %v1728 = vld [vmem:[#allocation14 + $0x568] sm:$0xff]
        %v1729 = vld [vmem:[#allocation14 + $0x570] sm:$0xff]
        %v1730 = vld [vmem:[#allocation14 + $0x578] sm:$0xff]
        %v1731 = vld [vmem:[#allocation14 + $0x580] sm:$0xff]
        %v1732 = vld [vmem:[#allocation14 + $0x588] sm:$0xff]
        %v1733 = vld [vmem:[#allocation14 + $0x590] sm:$0xff]
        %v1734 = vld [vmem:[#allocation14 + $0x598] sm:$0xff]
        %v1735 = vld [vmem:[#allocation14 + $0x5a0] sm:$0xff]
        %v1736 = vld [vmem:[#allocation14 + $0x5a8] sm:$0xff]
        %v1737 = vld [vmem:[#allocation14 + $0x5b0] sm:$0xff]
        %v1738 = vld [vmem:[#allocation14 + $0x5b8] sm:$0xff]
        %v1739 = vld [vmem:[#allocation14 + $0x5c0] sm:$0xff]
        %v1740 = vld [vmem:[#allocation14 + $0x5c8] sm:$0xff]
        %v1741 = vld [vmem:[#allocation14 + $0x5d0] sm:$0xff]
        %v1742 = vld [vmem:[#allocation14 + $0x5d8] sm:$0xff]
        %v1743 = vld [vmem:[#allocation14 + $0x5e0] sm:$0xff]
        %v1744 = vld [vmem:[#allocation14 + $0x5e8] sm:$0xff]
        %v1745 = vld [vmem:[#allocation14 + $0x5f0] sm:$0xff]
        %v1746 = vld [vmem:[#allocation14 + $0x5f8] sm:$0xff]
        %v1747 = vld [vmem:[#allocation14 + $0x600] sm:$0xff]
        %v1748 = vld [vmem:[#allocation14 + $0x608] sm:$0xff]
        %v1749 = vld [vmem:[#allocation14 + $0x610] sm:$0xff]
        %v1750 = vld [vmem:[#allocation14 + $0x618] sm:$0xff]
        %v1751 = vld [vmem:[#allocation14 + $0x620] sm:$0xff]
        %v1752 = vld [vmem:[#allocation14 + $0x628] sm:$0xff]
        %v1753 = vld [vmem:[#allocation14 + $0x630] sm:$0xff]
        %v1754 = vld [vmem:[#allocation14 + $0x638] sm:$0xff]
        %v1755 = vld [vmem:[#allocation14 + $0x640] sm:$0xff]
        %v1756 = vld [vmem:[#allocation14 + $0x648] sm:$0xff]
        %v1757 = vld [vmem:[#allocation14 + $0x650] sm:$0xff]
        %v1758 = vld [vmem:[#allocation14 + $0x658] sm:$0xff]
        %v1759 = vld [vmem:[#allocation14 + $0x660] sm:$0xff]
        %v1760 = vld [vmem:[#allocation14 + $0x668] sm:$0xff]
        %v1761 = vld [vmem:[#allocation14 + $0x670] sm:$0xff]
        %v1762 = vld [vmem:[#allocation14 + $0x678] sm:$0xff]
        %v1763 = vld [vmem:[#allocation14 + $0x680] sm:$0xff]
        %v1764 = vld [vmem:[#allocation14 + $0x688] sm:$0xff]
        %v1765 = vld [vmem:[#allocation14 + $0x690] sm:$0xff]
        %v1766 = vld [vmem:[#allocation14 + $0x698] sm:$0xff]
        %v1767 = vld [vmem:[#allocation14 + $0x6a0] sm:$0xff]
        %v1768 = vld [vmem:[#allocation14 + $0x6a8] sm:$0xff]
        %v1769 = vld [vmem:[#allocation14 + $0x6b0] sm:$0xff]
        %v1770 = vld [vmem:[#allocation14 + $0x6b8] sm:$0xff]
        %v1771 = vld [vmem:[#allocation14 + $0x6c0] sm:$0xff]
        %v1772 = vld [vmem:[#allocation14 + $0x6c8] sm:$0xff]
        %v1773 = vld [vmem:[#allocation14 + $0x6d0] sm:$0xff]
        %v1774 = vld [vmem:[#allocation14 + $0x6d8] sm:$0xff]
        %v1775 = vld [vmem:[#allocation14 + $0x6e0] sm:$0xff]
        %v1776 = vld [vmem:[#allocation14 + $0x6e8] sm:$0xff]
        %v1777 = vld [vmem:[#allocation14 + $0x6f0] sm:$0xff]
        %v1778 = vld [vmem:[#allocation14 + $0x6f8] sm:$0xff]
        %v1779 = vld [vmem:[#allocation14 + $0x700] sm:$0xff]
        %v1780 = vld [vmem:[#allocation14 + $0x708] sm:$0xff]
        %v1781 = vld [vmem:[#allocation14 + $0x710] sm:$0xff]
        %v1782 = vld [vmem:[#allocation14 + $0x718] sm:$0xff]
        %v1783 = vld [vmem:[#allocation14 + $0x720] sm:$0xff]
        %v1784 = vld [vmem:[#allocation14 + $0x728] sm:$0xff]
        %v1785 = vld [vmem:[#allocation14 + $0x730] sm:$0xff]
        %v1786 = vld [vmem:[#allocation14 + $0x738] sm:$0xff]
        %v1787 = vld [vmem:[#allocation14 + $0x740] sm:$0xff]
        %v1788 = vld [vmem:[#allocation14 + $0x748] sm:$0xff]
        %v1789 = vld [vmem:[#allocation14 + $0x750] sm:$0xff]
        %v1790 = vld [vmem:[#allocation14 + $0x758] sm:$0xff]
        %v1791 = vld [vmem:[#allocation14 + $0x760] sm:$0xff]
        %v1792 = vld [vmem:[#allocation14 + $0x768] sm:$0xff]
        %v1793 = vld [vmem:[#allocation14 + $0x770] sm:$0xff]
        %v1794 = vld [vmem:[#allocation14 + $0x778] sm:$0xff]
        %v1795 = vld [vmem:[#allocation14 + $0x780] sm:$0xff]
        %v1796 = vld [vmem:[#allocation14 + $0x788] sm:$0xff]
        %v1797 = vld [vmem:[#allocation14 + $0x790] sm:$0xff]
        %v1798 = vld [vmem:[#allocation14 + $0x798] sm:$0xff]
        %v1799 = vld [vmem:[#allocation14 + $0x7a0] sm:$0xff]
        %v1800 = vld [vmem:[#allocation14 + $0x7a8] sm:$0xff]
        %v1801 = vld [vmem:[#allocation14 + $0x7b0] sm:$0xff]
        %v1802 = vld [vmem:[#allocation14 + $0x7b8] sm:$0xff]
        %v1803 = vld [vmem:[#allocation14 + $0x7c0] sm:$0xff]
        %v1804 = vld [vmem:[#allocation14 + $0x7c8] sm:$0xff]
        %v1805 = vld [vmem:[#allocation14 + $0x7d0] sm:$0xff]
        %v1806 = vld [vmem:[#allocation14 + $0x7d8] sm:$0xff]
        %v1807 = vld [vmem:[#allocation14 + $0x7e0] sm:$0xff]
        %v1808 = vld [vmem:[#allocation14 + $0x7e8] sm:$0xff]
        %v1809 = vld [vmem:[#allocation14 + $0x7f0] sm:$0xff]
        %v1810 = vld [vmem:[#allocation14 + $0x7f8] sm:$0xff]
        %v1811 = vld [vmem:[%s10] sm:$0xff]
        %v1813 = vlaneseq
        %v1814 = vshrl.u32 %v1813, 7
        %v1815 = vsub.s32 0, %v1814
        %v1816 = vrot.slane %v1811, %v1815
        %v1817 = vlaneseq
        %v1818 = vshrl.u32 %v1817, 7
        %v1819 = vsub.s32 1, %v1818
        %v1820 = vrot.slane %v1811, %v1819
        %v1821 = vlaneseq
        %v1822 = vshrl.u32 %v1821, 7
        %v1823 = vsub.s32 2, %v1822
        %v1824 = vrot.slane %v1811, %v1823
        %v1825 = vlaneseq
        %v1826 = vshrl.u32 %v1825, 7
        %v1827 = vsub.s32 3, %v1826
        %v1828 = vrot.slane %v1811, %v1827
        %v1829 = vlaneseq
        %v1830 = vshrl.u32 %v1829, 7
        %v1831 = vsub.s32 4, %v1830
        %v1832 = vrot.slane %v1811, %v1831
        %v1833 = vlaneseq
        %v1834 = vshrl.u32 %v1833, 7
        %v1835 = vsub.s32 5, %v1834
        %v1836 = vrot.slane %v1811, %v1835
        %v1837 = vlaneseq
        %v1838 = vshrl.u32 %v1837, 7
        %v1839 = vsub.s32 6, %v1838
        %v1840 = vrot.slane %v1811, %v1839
        %v1841 = vlaneseq
        %v1842 = vshrl.u32 %v1841, 7
        %v1843 = vsub.s32 7, %v1842
        %v1844 = vrot.slane %v1811, %v1843
        %1853 = vmatprep.subr.mxu0 %v1676
        %1854 = vmatpush1.msra.mxu0 %v1675
        %1855 = vmatprep.subr.mxu0 %v1668
        %1856 = vmatpush1.msra.mxu0 %v1667
        %1857 = vmatprep.subr.mxu0 %v1660
        %1858 = vmatpush1.msra.mxu0 %v1659
        %1859 = vmatprep.subr.mxu0 %v1652
        %1860 = vmatpush1.msra.mxu0 %v1651
        %1861 = vmatprep.subr.mxu0 %v1644
        %1862 = vmatpush1.msra.mxu0 %v1643
        %1863 = vmatprep.subr.mxu0 %v1636
        %1864 = vmatpush1.msra.mxu0 %v1635
        %1865 = vmatprep.subr.mxu0 %v1628
        %1866 = vmatpush1.msra.mxu0 %v1627
        %1867 = vmatprep.subr.mxu0 %v1620
        %1868 = vmatpush1.msra.mxu0 %v1619
        %1869 = vmatprep.subr.mxu0 %v1612
        %1870 = vmatpush1.msra.mxu0 %v1611
        %1871 = vmatprep.subr.mxu0 %v1604
        %1872 = vmatpush1.msra.mxu0 %v1603
        %1873 = vmatprep.subr.mxu0 %v1596
        %1874 = vmatpush1.msra.mxu0 %v1595
        %1875 = vmatprep.subr.mxu0 %v1588
        %1876 = vmatpush1.msra.mxu0 %v1587
        %1877 = vmatprep.subr.mxu0 %v1580
        %1878 = vmatpush1.msra.mxu0 %v1579
        %1879 = vmatprep.subr.mxu0 %v1572
        %1880 = vmatpush1.msra.mxu0 %v1571
        %1881 = vmatprep.subr.mxu0 %v1564
        %1882 = vmatpush1.msra.mxu0 %v1563
        %1883 = vmatprep.subr.mxu0 %v1556
        %1884 = vmatpush1.msra.mxu0 %v1555
        %1885 = vmatprep.subr.mxu0 %v1804
        %1886 = vmatpush2.msra.mxu0 %v1803
        %1887 = vmatprep.subr.mxu0 %v1796
        %1888 = vmatpush2.msra.mxu0 %v1795
        %1889 = vmatprep.subr.mxu0 %v1788
        %1890 = vmatpush2.msra.mxu0 %v1787
        %1891 = vmatprep.subr.mxu0 %v1780
        %1892 = vmatpush2.msra.mxu0 %v1779
        %1893 = vmatprep.subr.mxu0 %v1772
        %1894 = vmatpush2.msra.mxu0 %v1771
        %1895 = vmatprep.subr.mxu0 %v1764
        %1896 = vmatpush2.msra.mxu0 %v1763
        %1897 = vmatprep.subr.mxu0 %v1756
        %1898 = vmatpush2.msra.mxu0 %v1755
        %1899 = vmatprep.subr.mxu0 %v1748
        %1900 = vmatpush2.msra.mxu0 %v1747
        %1901 = vmatprep.subr.mxu0 %v1740
        %1902 = vmatpush2.msra.mxu0 %v1739
        %1903 = vmatprep.subr.mxu0 %v1732
        %1904 = vmatpush2.msra.mxu0 %v1731
        %1905 = vmatprep.subr.mxu0 %v1724
        %1906 = vmatpush2.msra.mxu0 %v1723
        %1907 = vmatprep.subr.mxu0 %v1716
        %1908 = vmatpush2.msra.mxu0 %v1715
        %1909 = vmatprep.subr.mxu0 %v1708
        %1910 = vmatpush2.msra.mxu0 %v1707
        %1911 = vmatprep.subr.mxu0 %v1700
        %1912 = vmatpush2.msra.mxu0 %v1699
        %1913 = vmatprep.subr.mxu0 %v1692
        %1914 = vmatpush2.msra.mxu0 %v1691
        %1915 = vmatprep.subr.mxu0 %v1684
        %1916 = vmatpush2.msra.mxu0 %v1683
        %1917 = vmatprep.mubr.f32.mxu0 %v1554
        %1918 = vmatmul.mubr.f32.gmra.mxu0 %v1553
        %v1919 = vpop.f32.mrf.mxu0
        %v1920 = vadd.f32 %v1816, %v1919
        %v1921 = vpop.f32.mrf.mxu0
        %v1922 = vadd.f32 %v1820, %v1921
        %1923 = vdwg.mxu0
        %1924 = vmatprep.subr.mxu0 %v1678
        %1925 = vmatpush1.msra.mxu0 %v1677
        %1926 = vmatprep.subr.mxu0 %v1670
        %1927 = vmatpush1.msra.mxu0 %v1669
        %1928 = vmatprep.subr.mxu0 %v1662
        %1929 = vmatpush1.msra.mxu0 %v1661
        %1930 = vmatprep.subr.mxu0 %v1654
        %1931 = vmatpush1.msra.mxu0 %v1653
        %1932 = vmatprep.subr.mxu0 %v1646
        %1933 = vmatpush1.msra.mxu0 %v1645
        %1934 = vmatprep.subr.mxu0 %v1638
        %1935 = vmatpush1.msra.mxu0 %v1637
        %1936 = vmatprep.subr.mxu0 %v1630
        %1937 = vmatpush1.msra.mxu0 %v1629
        %1938 = vmatprep.subr.mxu0 %v1622
        %1939 = vmatpush1.msra.mxu0 %v1621
        %1940 = vmatprep.subr.mxu0 %v1614
        %1941 = vmatpush1.msra.mxu0 %v1613
        %1942 = vmatprep.subr.mxu0 %v1606
        %1943 = vmatpush1.msra.mxu0 %v1605
        %1944 = vmatprep.subr.mxu0 %v1598
        %1945 = vmatpush1.msra.mxu0 %v1597
        %1946 = vmatprep.subr.mxu0 %v1590
        %1947 = vmatpush1.msra.mxu0 %v1589
        %1948 = vmatprep.subr.mxu0 %v1582
        %1949 = vmatpush1.msra.mxu0 %v1581
        %1950 = vmatprep.subr.mxu0 %v1574
        %1951 = vmatpush1.msra.mxu0 %v1573
        %1952 = vmatprep.subr.mxu0 %v1566
        %1953 = vmatpush1.msra.mxu0 %v1565
        %1954 = vmatprep.subr.mxu0 %v1558
        %1955 = vmatpush1.msra.mxu0 %v1557
        %1956 = vmatprep.subr.mxu0 %v1806
        %1957 = vmatpush2.msra.mxu0 %v1805
        %1958 = vmatprep.subr.mxu0 %v1798
        %1959 = vmatpush2.msra.mxu0 %v1797
        %1960 = vmatprep.subr.mxu0 %v1790
        %1961 = vmatpush2.msra.mxu0 %v1789
        %1962 = vmatprep.subr.mxu0 %v1782
        %1963 = vmatpush2.msra.mxu0 %v1781
        %1964 = vmatprep.subr.mxu0 %v1774
        %1965 = vmatpush2.msra.mxu0 %v1773
        %1966 = vmatprep.subr.mxu0 %v1766
        %1967 = vmatpush2.msra.mxu0 %v1765
        %1968 = vmatprep.subr.mxu0 %v1758
        %1969 = vmatpush2.msra.mxu0 %v1757
        %1970 = vmatprep.subr.mxu0 %v1750
        %1971 = vmatpush2.msra.mxu0 %v1749
        %1972 = vmatprep.subr.mxu0 %v1742
        %1973 = vmatpush2.msra.mxu0 %v1741
        %1974 = vmatprep.subr.mxu0 %v1734
        %1975 = vmatpush2.msra.mxu0 %v1733
        %1976 = vmatprep.subr.mxu0 %v1726
        %1977 = vmatpush2.msra.mxu0 %v1725
        %1978 = vmatprep.subr.mxu0 %v1718
        %1979 = vmatpush2.msra.mxu0 %v1717
        %1980 = vmatprep.subr.mxu0 %v1710
        %1981 = vmatpush2.msra.mxu0 %v1709
        %1982 = vmatprep.subr.mxu0 %v1702
        %1983 = vmatpush2.msra.mxu0 %v1701
        %1984 = vmatprep.subr.mxu0 %v1694
        %1985 = vmatpush2.msra.mxu0 %v1693
        %1986 = vmatprep.subr.mxu0 %v1686
        %1987 = vmatpush2.msra.mxu0 %v1685
        %1988 = vmatprep.mubr.f32.mxu0 %v1554
        %1989 = vmatmul.mubr.f32.gmra.mxu0 %v1553
        %v1990 = vpop.f32.mrf.mxu0
        %v1991 = vadd.f32 %v1824, %v1990
        %v1992 = vpop.f32.mrf.mxu0
        %v1993 = vadd.f32 %v1828, %v1992
        %1994 = vdwg.mxu0
        %1995 = vmatprep.subr.mxu0 %v1680
        %1996 = vmatpush1.msra.mxu0 %v1679
        %1997 = vmatprep.subr.mxu0 %v1672
        %1998 = vmatpush1.msra.mxu0 %v1671
        %1999 = vmatprep.subr.mxu0 %v1664
        %2000 = vmatpush1.msra.mxu0 %v1663
        %2001 = vmatprep.subr.mxu0 %v1656
        %2002 = vmatpush1.msra.mxu0 %v1655
        %2003 = vmatprep.subr.mxu0 %v1648
        %2004 = vmatpush1.msra.mxu0 %v1647
        %2005 = vmatprep.subr.mxu0 %v1640
        %2006 = vmatpush1.msra.mxu0 %v1639
        %2007 = vmatprep.subr.mxu0 %v1632
        %2008 = vmatpush1.msra.mxu0 %v1631
        %2009 = vmatprep.subr.mxu0 %v1624
        %2010 = vmatpush1.msra.mxu0 %v1623
        %2011 = vmatprep.subr.mxu0 %v1616
        %2012 = vmatpush1.msra.mxu0 %v1615
        %2013 = vmatprep.subr.mxu0 %v1608
        %2014 = vmatpush1.msra.mxu0 %v1607
        %2015 = vmatprep.subr.mxu0 %v1600
        %2016 = vmatpush1.msra.mxu0 %v1599
        %2017 = vmatprep.subr.mxu0 %v1592
        %2018 = vmatpush1.msra.mxu0 %v1591
        %2019 = vmatprep.subr.mxu0 %v1584
        %2020 = vmatpush1.msra.mxu0 %v1583
        %2021 = vmatprep.subr.mxu0 %v1576
        %2022 = vmatpush1.msra.mxu0 %v1575
        %2023 = vmatprep.subr.mxu0 %v1568
        %2024 = vmatpush1.msra.mxu0 %v1567
        %2025 = vmatprep.subr.mxu0 %v1560
        %2026 = vmatpush1.msra.mxu0 %v1559
        %2027 = vmatprep.subr.mxu0 %v1808
        %2028 = vmatpush2.msra.mxu0 %v1807
        %2029 = vmatprep.subr.mxu0 %v1800
        %2030 = vmatpush2.msra.mxu0 %v1799
        %2031 = vmatprep.subr.mxu0 %v1792
        %2032 = vmatpush2.msra.mxu0 %v1791
        %2033 = vmatprep.subr.mxu0 %v1784
        %2034 = vmatpush2.msra.mxu0 %v1783
        %2035 = vmatprep.subr.mxu0 %v1776
        %2036 = vmatpush2.msra.mxu0 %v1775
        %2037 = vmatprep.subr.mxu0 %v1768
        %2038 = vmatpush2.msra.mxu0 %v1767
        %2039 = vmatprep.subr.mxu0 %v1760
        %2040 = vmatpush2.msra.mxu0 %v1759
        %2041 = vmatprep.subr.mxu0 %v1752
        %2042 = vmatpush2.msra.mxu0 %v1751
        %2043 = vmatprep.subr.mxu0 %v1744
        %2044 = vmatpush2.msra.mxu0 %v1743
        %2045 = vmatprep.subr.mxu0 %v1736
        %2046 = vmatpush2.msra.mxu0 %v1735
        %2047 = vmatprep.subr.mxu0 %v1728
        %2048 = vmatpush2.msra.mxu0 %v1727
        %2049 = vmatprep.subr.mxu0 %v1720
        %2050 = vmatpush2.msra.mxu0 %v1719
        %2051 = vmatprep.subr.mxu0 %v1712
        %2052 = vmatpush2.msra.mxu0 %v1711
        %2053 = vmatprep.subr.mxu0 %v1704
        %2054 = vmatpush2.msra.mxu0 %v1703
        %2055 = vmatprep.subr.mxu0 %v1696
        %2056 = vmatpush2.msra.mxu0 %v1695
        %2057 = vmatprep.subr.mxu0 %v1688
        %2058 = vmatpush2.msra.mxu0 %v1687
        %2059 = vmatprep.mubr.f32.mxu0 %v1554
        %2060 = vmatmul.mubr.f32.gmra.mxu0 %v1553
        %v2061 = vpop.f32.mrf.mxu0
        %v2062 = vadd.f32 %v1832, %v2061
        %v2063 = vpop.f32.mrf.mxu0
        %v2064 = vadd.f32 %v1836, %v2063
        %2065 = vdwg.mxu0
        %2066 = vmatprep.subr.mxu0 %v1682
        %2067 = vmatpush1.msra.mxu0 %v1681
        %2068 = vmatprep.subr.mxu0 %v1674
        %2069 = vmatpush1.msra.mxu0 %v1673
        %2070 = vmatprep.subr.mxu0 %v1666
        %2071 = vmatpush1.msra.mxu0 %v1665
        %2072 = vmatprep.subr.mxu0 %v1658
        %2073 = vmatpush1.msra.mxu0 %v1657
        %2074 = vmatprep.subr.mxu0 %v1650
        %2075 = vmatpush1.msra.mxu0 %v1649
        %2076 = vmatprep.subr.mxu0 %v1642
        %2077 = vmatpush1.msra.mxu0 %v1641
        %2078 = vmatprep.subr.mxu0 %v1634
        %2079 = vmatpush1.msra.mxu0 %v1633
        %2080 = vmatprep.subr.mxu0 %v1626
        %2081 = vmatpush1.msra.mxu0 %v1625
        %2082 = vmatprep.subr.mxu0 %v1618
        %2083 = vmatpush1.msra.mxu0 %v1617
        %2084 = vmatprep.subr.mxu0 %v1610
        %2085 = vmatpush1.msra.mxu0 %v1609
        %2086 = vmatprep.subr.mxu0 %v1602
        %2087 = vmatpush1.msra.mxu0 %v1601
        %2088 = vmatprep.subr.mxu0 %v1594
        %2089 = vmatpush1.msra.mxu0 %v1593
        %2090 = vmatprep.subr.mxu0 %v1586
        %2091 = vmatpush1.msra.mxu0 %v1585
        %2092 = vmatprep.subr.mxu0 %v1578
        %2093 = vmatpush1.msra.mxu0 %v1577
        %2094 = vmatprep.subr.mxu0 %v1570
        %2095 = vmatpush1.msra.mxu0 %v1569
        %2096 = vmatprep.subr.mxu0 %v1562
        %2097 = vmatpush1.msra.mxu0 %v1561
        %2098 = vmatprep.subr.mxu0 %v1810
        %2099 = vmatpush2.msra.mxu0 %v1809
        %2100 = vmatprep.subr.mxu0 %v1802
        %2101 = vmatpush2.msra.mxu0 %v1801
        %2102 = vmatprep.subr.mxu0 %v1794
        %2103 = vmatpush2.msra.mxu0 %v1793
        %2104 = vmatprep.subr.mxu0 %v1786
        %2105 = vmatpush2.msra.mxu0 %v1785
        %2106 = vmatprep.subr.mxu0 %v1778
        %2107 = vmatpush2.msra.mxu0 %v1777
        %2108 = vmatprep.subr.mxu0 %v1770
        %2109 = vmatpush2.msra.mxu0 %v1769
        %2110 = vmatprep.subr.mxu0 %v1762
        %2111 = vmatpush2.msra.mxu0 %v1761
        %2112 = vmatprep.subr.mxu0 %v1754
        %2113 = vmatpush2.msra.mxu0 %v1753
        %2114 = vmatprep.subr.mxu0 %v1746
        %2115 = vmatpush2.msra.mxu0 %v1745
        %2116 = vmatprep.subr.mxu0 %v1738
        %2117 = vmatpush2.msra.mxu0 %v1737
        %2118 = vmatprep.subr.mxu0 %v1730
        %2119 = vmatpush2.msra.mxu0 %v1729
        %2120 = vmatprep.subr.mxu0 %v1722
        %2121 = vmatpush2.msra.mxu0 %v1721
        %2122 = vmatprep.subr.mxu0 %v1714
        %2123 = vmatpush2.msra.mxu0 %v1713
        %2124 = vmatprep.subr.mxu0 %v1706
        %2125 = vmatpush2.msra.mxu0 %v1705
        %2126 = vmatprep.subr.mxu0 %v1698
        %2127 = vmatpush2.msra.mxu0 %v1697
        %2128 = vmatprep.subr.mxu0 %v1690
        %2129 = vmatpush2.msra.mxu0 %v1689
        %2130 = vmatprep.mubr.f32.mxu0 %v1554
        %2131 = vmatmul.mubr.f32.gmra.mxu0 %v1553
        %v2132 = vpop.f32.mrf.mxu0
        %v2133 = vadd.f32 %v1840, %v2132
        %v2134 = vpop.f32.mrf.mxu0
        %v2135 = vadd.f32 %v1844, %v2134
        %2136 = vdwg.mxu0
        %v2137 = vmul.f32 %v1920, 1.702
        %v2138 = vmul.f32 %v1922, 1.702
        %v2139 = vmul.f32 %v1991, 1.702
        %v2140 = vmul.f32 %v1993, 1.702
        %v2141 = vmul.f32 %v2062, 1.702
        %v2142 = vmul.f32 %v2064, 1.702
        %v2143 = vmul.f32 %v2133, 1.702
        %v2144 = vmul.f32 %v2135, 1.702
        %v2145 = vxor.u32 %v2137, 2147483648
        %v2146 = vxor.u32 %v2138, 2147483648
        %v2147 = vxor.u32 %v2139, 2147483648
        %v2148 = vxor.u32 %v2140, 2147483648
        %v2149 = vxor.u32 %v2141, 2147483648
        %v2150 = vxor.u32 %v2142, 2147483648
        %v2151 = vxor.u32 %v2143, 2147483648
        %v2152 = vxor.u32 %v2144, 2147483648
        %v2153 = vmul.f32 %v2145, 1.442695
        %v2154 = vpow.pop %v2153
        %v2155 = vmul.f32 %v2146, 1.442695
        %v2156 = vpow.pop %v2155
        %v2157 = vmul.f32 %v2147, 1.442695
        %v2158 = vpow.pop %v2157
        %v2159 = vmul.f32 %v2148, 1.442695
        %v2160 = vpow.pop %v2159
        %v2161 = vmul.f32 %v2149, 1.442695
        %v2162 = vpow.pop %v2161
        %v2163 = vmul.f32 %v2150, 1.442695
        %v2164 = vpow.pop %v2163
        %v2165 = vmul.f32 %v2151, 1.442695
        %v2166 = vpow.pop %v2165
        %v2167 = vmul.f32 %v2152, 1.442695
        %v2168 = vpow.pop %v2167
        %v2169 = vadd.f32 %v2154, 1.0
        %v2170 = vadd.f32 %v2156, 1.0
        %v2171 = vadd.f32 %v2158, 1.0
        %v2172 = vadd.f32 %v2160, 1.0
        %v2173 = vadd.f32 %v2162, 1.0
        %v2174 = vadd.f32 %v2164, 1.0
        %v2175 = vadd.f32 %v2166, 1.0
        %v2176 = vadd.f32 %v2168, 1.0
        %v2177 = vrcp.pop %v2169
        %v2178 = vmul.f32 1.0, %v2177
        %v2179 = vrcp.pop %v2170
        %v2180 = vmul.f32 1.0, %v2179
        %v2181 = vrcp.pop %v2171
        %v2182 = vmul.f32 1.0, %v2181
        %v2183 = vrcp.pop %v2172
        %v2184 = vmul.f32 1.0, %v2183
        %v2185 = vrcp.pop %v2173
        %v2186 = vmul.f32 1.0, %v2185
        %v2187 = vrcp.pop %v2174
        %v2188 = vmul.f32 1.0, %v2187
        %v2189 = vrcp.pop %v2175
        %v2190 = vmul.f32 1.0, %v2189
        %v2191 = vrcp.pop %v2176
        %v2192 = vmul.f32 1.0, %v2191
        %v2193 = vmul.f32 %v1920, %v2178
        %v2194 = vmul.f32 %v1922, %v2180
        %v2195 = vmul.f32 %v1991, %v2182
        %v2196 = vmul.f32 %v1993, %v2184
        %v2197 = vmul.f32 %v2062, %v2186
        %v2198 = vmul.f32 %v2064, %v2188
        %v2199 = vmul.f32 %v2133, %v2190
        %v2200 = vmul.f32 %v2135, %v2192
        %v2201 = vld [vmem:[#allocation16] sm:$0xff]
        %v2202 = vld [vmem:[#allocation16 + $0x8] sm:$0xff]
        %v2203 = vld [vmem:[#allocation16 + $0x10] sm:$0xff]
        %v2204 = vld [vmem:[#allocation16 + $0x18] sm:$0xff]
        %v2205 = vld [vmem:[#allocation16 + $0x20] sm:$0xff]
        %v2206 = vld [vmem:[#allocation16 + $0x28] sm:$0xff]
        %v2207 = vld [vmem:[#allocation16 + $0x30] sm:$0xff]
        %v2208 = vld [vmem:[#allocation16 + $0x38] sm:$0xff]
        %v2209 = vld [vmem:[#allocation16 + $0x40] sm:$0xff]
        %v2210 = vld [vmem:[#allocation16 + $0x48] sm:$0xff]
        %v2211 = vld [vmem:[#allocation16 + $0x50] sm:$0xff]
        %v2212 = vld [vmem:[#allocation16 + $0x58] sm:$0xff]
        %v2213 = vld [vmem:[#allocation16 + $0x60] sm:$0xff]
        %v2214 = vld [vmem:[#allocation16 + $0x68] sm:$0xff]
        %v2215 = vld [vmem:[#allocation16 + $0x70] sm:$0xff]
        %v2216 = vld [vmem:[#allocation16 + $0x78] sm:$0xff]
        %v2217 = vld [vmem:[#allocation16 + $0x80] sm:$0xff]
        %v2218 = vld [vmem:[#allocation16 + $0x88] sm:$0xff]
        %v2219 = vld [vmem:[#allocation16 + $0x90] sm:$0xff]
        %v2220 = vld [vmem:[#allocation16 + $0x98] sm:$0xff]
        %v2221 = vld [vmem:[#allocation16 + $0xa0] sm:$0xff]
        %v2222 = vld [vmem:[#allocation16 + $0xa8] sm:$0xff]
        %v2223 = vld [vmem:[#allocation16 + $0xb0] sm:$0xff]
        %v2224 = vld [vmem:[#allocation16 + $0xb8] sm:$0xff]
        %v2225 = vld [vmem:[#allocation16 + $0xc0] sm:$0xff]
        %v2226 = vld [vmem:[#allocation16 + $0xc8] sm:$0xff]
        %v2227 = vld [vmem:[#allocation16 + $0xd0] sm:$0xff]
        %v2228 = vld [vmem:[#allocation16 + $0xd8] sm:$0xff]
        %v2229 = vld [vmem:[#allocation16 + $0xe0] sm:$0xff]
        %v2230 = vld [vmem:[#allocation16 + $0xe8] sm:$0xff]
        %v2231 = vld [vmem:[#allocation16 + $0xf0] sm:$0xff]
        %v2232 = vld [vmem:[#allocation16 + $0xf8] sm:$0xff]
        %v2233 = vld [vmem:[#allocation16 + $0x100] sm:$0xff]
        %v2234 = vld [vmem:[#allocation16 + $0x108] sm:$0xff]
        %v2235 = vld [vmem:[#allocation16 + $0x110] sm:$0xff]
        %v2236 = vld [vmem:[#allocation16 + $0x118] sm:$0xff]
        %v2237 = vld [vmem:[#allocation16 + $0x120] sm:$0xff]
        %v2238 = vld [vmem:[#allocation16 + $0x128] sm:$0xff]
        %v2239 = vld [vmem:[#allocation16 + $0x130] sm:$0xff]
        %v2240 = vld [vmem:[#allocation16 + $0x138] sm:$0xff]
        %v2241 = vld [vmem:[#allocation16 + $0x140] sm:$0xff]
        %v2242 = vld [vmem:[#allocation16 + $0x148] sm:$0xff]
        %v2243 = vld [vmem:[#allocation16 + $0x150] sm:$0xff]
        %v2244 = vld [vmem:[#allocation16 + $0x158] sm:$0xff]
        %v2245 = vld [vmem:[#allocation16 + $0x160] sm:$0xff]
        %v2246 = vld [vmem:[#allocation16 + $0x168] sm:$0xff]
        %v2247 = vld [vmem:[#allocation16 + $0x170] sm:$0xff]
        %v2248 = vld [vmem:[#allocation16 + $0x178] sm:$0xff]
        %v2249 = vld [vmem:[#allocation16 + $0x180] sm:$0xff]
        %v2250 = vld [vmem:[#allocation16 + $0x188] sm:$0xff]
        %v2251 = vld [vmem:[#allocation16 + $0x190] sm:$0xff]
        %v2252 = vld [vmem:[#allocation16 + $0x198] sm:$0xff]
        %v2253 = vld [vmem:[#allocation16 + $0x1a0] sm:$0xff]
        %v2254 = vld [vmem:[#allocation16 + $0x1a8] sm:$0xff]
        %v2255 = vld [vmem:[#allocation16 + $0x1b0] sm:$0xff]
        %v2256 = vld [vmem:[#allocation16 + $0x1b8] sm:$0xff]
        %v2257 = vld [vmem:[#allocation16 + $0x1c0] sm:$0xff]
        %v2258 = vld [vmem:[#allocation16 + $0x1c8] sm:$0xff]
        %v2259 = vld [vmem:[#allocation16 + $0x1d0] sm:$0xff]
        %v2260 = vld [vmem:[#allocation16 + $0x1d8] sm:$0xff]
        %v2261 = vld [vmem:[#allocation16 + $0x1e0] sm:$0xff]
        %v2262 = vld [vmem:[#allocation16 + $0x1e8] sm:$0xff]
        %v2263 = vld [vmem:[#allocation16 + $0x1f0] sm:$0xff]
        %v2264 = vld [vmem:[#allocation16 + $0x1f8] sm:$0xff]
        %v2265 = vld [vmem:[#allocation16 + $0x200] sm:$0xff]
        %v2266 = vld [vmem:[#allocation16 + $0x208] sm:$0xff]
        %v2267 = vld [vmem:[#allocation16 + $0x210] sm:$0xff]
        %v2268 = vld [vmem:[#allocation16 + $0x218] sm:$0xff]
        %v2269 = vld [vmem:[#allocation16 + $0x220] sm:$0xff]
        %v2270 = vld [vmem:[#allocation16 + $0x228] sm:$0xff]
        %v2271 = vld [vmem:[#allocation16 + $0x230] sm:$0xff]
        %v2272 = vld [vmem:[#allocation16 + $0x238] sm:$0xff]
        %v2273 = vld [vmem:[#allocation16 + $0x240] sm:$0xff]
        %v2274 = vld [vmem:[#allocation16 + $0x248] sm:$0xff]
        %v2275 = vld [vmem:[#allocation16 + $0x250] sm:$0xff]
        %v2276 = vld [vmem:[#allocation16 + $0x258] sm:$0xff]
        %v2277 = vld [vmem:[#allocation16 + $0x260] sm:$0xff]
        %v2278 = vld [vmem:[#allocation16 + $0x268] sm:$0xff]
        %v2279 = vld [vmem:[#allocation16 + $0x270] sm:$0xff]
        %v2280 = vld [vmem:[#allocation16 + $0x278] sm:$0xff]
        %v2281 = vld [vmem:[#allocation16 + $0x280] sm:$0xff]
        %v2282 = vld [vmem:[#allocation16 + $0x288] sm:$0xff]
        %v2283 = vld [vmem:[#allocation16 + $0x290] sm:$0xff]
        %v2284 = vld [vmem:[#allocation16 + $0x298] sm:$0xff]
        %v2285 = vld [vmem:[#allocation16 + $0x2a0] sm:$0xff]
        %v2286 = vld [vmem:[#allocation16 + $0x2a8] sm:$0xff]
        %v2287 = vld [vmem:[#allocation16 + $0x2b0] sm:$0xff]
        %v2288 = vld [vmem:[#allocation16 + $0x2b8] sm:$0xff]
        %v2289 = vld [vmem:[#allocation16 + $0x2c0] sm:$0xff]
        %v2290 = vld [vmem:[#allocation16 + $0x2c8] sm:$0xff]
        %v2291 = vld [vmem:[#allocation16 + $0x2d0] sm:$0xff]
        %v2292 = vld [vmem:[#allocation16 + $0x2d8] sm:$0xff]
        %v2293 = vld [vmem:[#allocation16 + $0x2e0] sm:$0xff]
        %v2294 = vld [vmem:[#allocation16 + $0x2e8] sm:$0xff]
        %v2295 = vld [vmem:[#allocation16 + $0x2f0] sm:$0xff]
        %v2296 = vld [vmem:[#allocation16 + $0x2f8] sm:$0xff]
        %v2297 = vld [vmem:[#allocation16 + $0x300] sm:$0xff]
        %v2298 = vld [vmem:[#allocation16 + $0x308] sm:$0xff]
        %v2299 = vld [vmem:[#allocation16 + $0x310] sm:$0xff]
        %v2300 = vld [vmem:[#allocation16 + $0x318] sm:$0xff]
        %v2301 = vld [vmem:[#allocation16 + $0x320] sm:$0xff]
        %v2302 = vld [vmem:[#allocation16 + $0x328] sm:$0xff]
        %v2303 = vld [vmem:[#allocation16 + $0x330] sm:$0xff]
        %v2304 = vld [vmem:[#allocation16 + $0x338] sm:$0xff]
        %v2305 = vld [vmem:[#allocation16 + $0x340] sm:$0xff]
        %v2306 = vld [vmem:[#allocation16 + $0x348] sm:$0xff]
        %v2307 = vld [vmem:[#allocation16 + $0x350] sm:$0xff]
        %v2308 = vld [vmem:[#allocation16 + $0x358] sm:$0xff]
        %v2309 = vld [vmem:[#allocation16 + $0x360] sm:$0xff]
        %v2310 = vld [vmem:[#allocation16 + $0x368] sm:$0xff]
        %v2311 = vld [vmem:[#allocation16 + $0x370] sm:$0xff]
        %v2312 = vld [vmem:[#allocation16 + $0x378] sm:$0xff]
        %v2313 = vld [vmem:[#allocation16 + $0x380] sm:$0xff]
        %v2314 = vld [vmem:[#allocation16 + $0x388] sm:$0xff]
        %v2315 = vld [vmem:[#allocation16 + $0x390] sm:$0xff]
        %v2316 = vld [vmem:[#allocation16 + $0x398] sm:$0xff]
        %v2317 = vld [vmem:[#allocation16 + $0x3a0] sm:$0xff]
        %v2318 = vld [vmem:[#allocation16 + $0x3a8] sm:$0xff]
        %v2319 = vld [vmem:[#allocation16 + $0x3b0] sm:$0xff]
        %v2320 = vld [vmem:[#allocation16 + $0x3b8] sm:$0xff]
        %v2321 = vld [vmem:[#allocation16 + $0x3c0] sm:$0xff]
        %v2322 = vld [vmem:[#allocation16 + $0x3c8] sm:$0xff]
        %v2323 = vld [vmem:[#allocation16 + $0x3d0] sm:$0xff]
        %v2324 = vld [vmem:[#allocation16 + $0x3d8] sm:$0xff]
        %v2325 = vld [vmem:[#allocation16 + $0x3e0] sm:$0xff]
        %v2326 = vld [vmem:[#allocation16 + $0x3e8] sm:$0xff]
        %v2327 = vld [vmem:[#allocation16 + $0x3f0] sm:$0xff]
        %v2328 = vld [vmem:[#allocation16 + $0x3f8] sm:$0xff]
        %v2329 = vld [vmem:[#allocation16 + $0x400] sm:$0xff]
        %v2330 = vld [vmem:[#allocation16 + $0x408] sm:$0xff]
        %v2331 = vld [vmem:[#allocation16 + $0x410] sm:$0xff]
        %v2332 = vld [vmem:[#allocation16 + $0x418] sm:$0xff]
        %v2333 = vld [vmem:[#allocation16 + $0x420] sm:$0xff]
        %v2334 = vld [vmem:[#allocation16 + $0x428] sm:$0xff]
        %v2335 = vld [vmem:[#allocation16 + $0x430] sm:$0xff]
        %v2336 = vld [vmem:[#allocation16 + $0x438] sm:$0xff]
        %v2337 = vld [vmem:[#allocation16 + $0x440] sm:$0xff]
        %v2338 = vld [vmem:[#allocation16 + $0x448] sm:$0xff]
        %v2339 = vld [vmem:[#allocation16 + $0x450] sm:$0xff]
        %v2340 = vld [vmem:[#allocation16 + $0x458] sm:$0xff]
        %v2341 = vld [vmem:[#allocation16 + $0x460] sm:$0xff]
        %v2342 = vld [vmem:[#allocation16 + $0x468] sm:$0xff]
        %v2343 = vld [vmem:[#allocation16 + $0x470] sm:$0xff]
        %v2344 = vld [vmem:[#allocation16 + $0x478] sm:$0xff]
        %v2345 = vld [vmem:[#allocation16 + $0x480] sm:$0xff]
        %v2346 = vld [vmem:[#allocation16 + $0x488] sm:$0xff]
        %v2347 = vld [vmem:[#allocation16 + $0x490] sm:$0xff]
        %v2348 = vld [vmem:[#allocation16 + $0x498] sm:$0xff]
        %v2349 = vld [vmem:[#allocation16 + $0x4a0] sm:$0xff]
        %v2350 = vld [vmem:[#allocation16 + $0x4a8] sm:$0xff]
        %v2351 = vld [vmem:[#allocation16 + $0x4b0] sm:$0xff]
        %v2352 = vld [vmem:[#allocation16 + $0x4b8] sm:$0xff]
        %v2353 = vld [vmem:[#allocation16 + $0x4c0] sm:$0xff]
        %v2354 = vld [vmem:[#allocation16 + $0x4c8] sm:$0xff]
        %v2355 = vld [vmem:[#allocation16 + $0x4d0] sm:$0xff]
        %v2356 = vld [vmem:[#allocation16 + $0x4d8] sm:$0xff]
        %v2357 = vld [vmem:[#allocation16 + $0x4e0] sm:$0xff]
        %v2358 = vld [vmem:[#allocation16 + $0x4e8] sm:$0xff]
        %v2359 = vld [vmem:[#allocation16 + $0x4f0] sm:$0xff]
        %v2360 = vld [vmem:[#allocation16 + $0x4f8] sm:$0xff]
        %v2361 = vld [vmem:[#allocation16 + $0x500] sm:$0xff]
        %v2362 = vld [vmem:[#allocation16 + $0x508] sm:$0xff]
        %v2363 = vld [vmem:[#allocation16 + $0x510] sm:$0xff]
        %v2364 = vld [vmem:[#allocation16 + $0x518] sm:$0xff]
        %v2365 = vld [vmem:[#allocation16 + $0x520] sm:$0xff]
        %v2366 = vld [vmem:[#allocation16 + $0x528] sm:$0xff]
        %v2367 = vld [vmem:[#allocation16 + $0x530] sm:$0xff]
        %v2368 = vld [vmem:[#allocation16 + $0x538] sm:$0xff]
        %v2369 = vld [vmem:[#allocation16 + $0x540] sm:$0xff]
        %v2370 = vld [vmem:[#allocation16 + $0x548] sm:$0xff]
        %v2371 = vld [vmem:[#allocation16 + $0x550] sm:$0xff]
        %v2372 = vld [vmem:[#allocation16 + $0x558] sm:$0xff]
        %v2373 = vld [vmem:[#allocation16 + $0x560] sm:$0xff]
        %v2374 = vld [vmem:[#allocation16 + $0x568] sm:$0xff]
        %v2375 = vld [vmem:[#allocation16 + $0x570] sm:$0xff]
        %v2376 = vld [vmem:[#allocation16 + $0x578] sm:$0xff]
        %v2377 = vld [vmem:[#allocation16 + $0x580] sm:$0xff]
        %v2378 = vld [vmem:[#allocation16 + $0x588] sm:$0xff]
        %v2379 = vld [vmem:[#allocation16 + $0x590] sm:$0xff]
        %v2380 = vld [vmem:[#allocation16 + $0x598] sm:$0xff]
        %v2381 = vld [vmem:[#allocation16 + $0x5a0] sm:$0xff]
        %v2382 = vld [vmem:[#allocation16 + $0x5a8] sm:$0xff]
        %v2383 = vld [vmem:[#allocation16 + $0x5b0] sm:$0xff]
        %v2384 = vld [vmem:[#allocation16 + $0x5b8] sm:$0xff]
        %v2385 = vld [vmem:[#allocation16 + $0x5c0] sm:$0xff]
        %v2386 = vld [vmem:[#allocation16 + $0x5c8] sm:$0xff]
        %v2387 = vld [vmem:[#allocation16 + $0x5d0] sm:$0xff]
        %v2388 = vld [vmem:[#allocation16 + $0x5d8] sm:$0xff]
        %v2389 = vld [vmem:[#allocation16 + $0x5e0] sm:$0xff]
        %v2390 = vld [vmem:[#allocation16 + $0x5e8] sm:$0xff]
        %v2391 = vld [vmem:[#allocation16 + $0x5f0] sm:$0xff]
        %v2392 = vld [vmem:[#allocation16 + $0x5f8] sm:$0xff]
        %v2393 = vld [vmem:[#allocation16 + $0x600] sm:$0xff]
        %v2394 = vld [vmem:[#allocation16 + $0x608] sm:$0xff]
        %v2395 = vld [vmem:[#allocation16 + $0x610] sm:$0xff]
        %v2396 = vld [vmem:[#allocation16 + $0x618] sm:$0xff]
        %v2397 = vld [vmem:[#allocation16 + $0x620] sm:$0xff]
        %v2398 = vld [vmem:[#allocation16 + $0x628] sm:$0xff]
        %v2399 = vld [vmem:[#allocation16 + $0x630] sm:$0xff]
        %v2400 = vld [vmem:[#allocation16 + $0x638] sm:$0xff]
        %v2401 = vld [vmem:[#allocation16 + $0x640] sm:$0xff]
        %v2402 = vld [vmem:[#allocation16 + $0x648] sm:$0xff]
        %v2403 = vld [vmem:[#allocation16 + $0x650] sm:$0xff]
        %v2404 = vld [vmem:[#allocation16 + $0x658] sm:$0xff]
        %v2405 = vld [vmem:[#allocation16 + $0x660] sm:$0xff]
        %v2406 = vld [vmem:[#allocation16 + $0x668] sm:$0xff]
        %v2407 = vld [vmem:[#allocation16 + $0x670] sm:$0xff]
        %v2408 = vld [vmem:[#allocation16 + $0x678] sm:$0xff]
        %v2409 = vld [vmem:[#allocation16 + $0x680] sm:$0xff]
        %v2410 = vld [vmem:[#allocation16 + $0x688] sm:$0xff]
        %v2411 = vld [vmem:[#allocation16 + $0x690] sm:$0xff]
        %v2412 = vld [vmem:[#allocation16 + $0x698] sm:$0xff]
        %v2413 = vld [vmem:[#allocation16 + $0x6a0] sm:$0xff]
        %v2414 = vld [vmem:[#allocation16 + $0x6a8] sm:$0xff]
        %v2415 = vld [vmem:[#allocation16 + $0x6b0] sm:$0xff]
        %v2416 = vld [vmem:[#allocation16 + $0x6b8] sm:$0xff]
        %v2417 = vld [vmem:[#allocation16 + $0x6c0] sm:$0xff]
        %v2418 = vld [vmem:[#allocation16 + $0x6c8] sm:$0xff]
        %v2419 = vld [vmem:[#allocation16 + $0x6d0] sm:$0xff]
        %v2420 = vld [vmem:[#allocation16 + $0x6d8] sm:$0xff]
        %v2421 = vld [vmem:[#allocation16 + $0x6e0] sm:$0xff]
        %v2422 = vld [vmem:[#allocation16 + $0x6e8] sm:$0xff]
        %v2423 = vld [vmem:[#allocation16 + $0x6f0] sm:$0xff]
        %v2424 = vld [vmem:[#allocation16 + $0x6f8] sm:$0xff]
        %v2425 = vld [vmem:[#allocation16 + $0x700] sm:$0xff]
        %v2426 = vld [vmem:[#allocation16 + $0x708] sm:$0xff]
        %v2427 = vld [vmem:[#allocation16 + $0x710] sm:$0xff]
        %v2428 = vld [vmem:[#allocation16 + $0x718] sm:$0xff]
        %v2429 = vld [vmem:[#allocation16 + $0x720] sm:$0xff]
        %v2430 = vld [vmem:[#allocation16 + $0x728] sm:$0xff]
        %v2431 = vld [vmem:[#allocation16 + $0x730] sm:$0xff]
        %v2432 = vld [vmem:[#allocation16 + $0x738] sm:$0xff]
        %v2433 = vld [vmem:[#allocation16 + $0x740] sm:$0xff]
        %v2434 = vld [vmem:[#allocation16 + $0x748] sm:$0xff]
        %v2435 = vld [vmem:[#allocation16 + $0x750] sm:$0xff]
        %v2436 = vld [vmem:[#allocation16 + $0x758] sm:$0xff]
        %v2437 = vld [vmem:[#allocation16 + $0x760] sm:$0xff]
        %v2438 = vld [vmem:[#allocation16 + $0x768] sm:$0xff]
        %v2439 = vld [vmem:[#allocation16 + $0x770] sm:$0xff]
        %v2440 = vld [vmem:[#allocation16 + $0x778] sm:$0xff]
        %v2441 = vld [vmem:[#allocation16 + $0x780] sm:$0xff]
        %v2442 = vld [vmem:[#allocation16 + $0x788] sm:$0xff]
        %v2443 = vld [vmem:[#allocation16 + $0x790] sm:$0xff]
        %v2444 = vld [vmem:[#allocation16 + $0x798] sm:$0xff]
        %v2445 = vld [vmem:[#allocation16 + $0x7a0] sm:$0xff]
        %v2446 = vld [vmem:[#allocation16 + $0x7a8] sm:$0xff]
        %v2447 = vld [vmem:[#allocation16 + $0x7b0] sm:$0xff]
        %v2448 = vld [vmem:[#allocation16 + $0x7b8] sm:$0xff]
        %v2449 = vld [vmem:[#allocation16 + $0x7c0] sm:$0xff]
        %v2450 = vld [vmem:[#allocation16 + $0x7c8] sm:$0xff]
        %v2451 = vld [vmem:[#allocation16 + $0x7d0] sm:$0xff]
        %v2452 = vld [vmem:[#allocation16 + $0x7d8] sm:$0xff]
        %v2453 = vld [vmem:[#allocation16 + $0x7e0] sm:$0xff]
        %v2454 = vld [vmem:[#allocation16 + $0x7e8] sm:$0xff]
        %v2455 = vld [vmem:[#allocation16 + $0x7f0] sm:$0xff]
        %v2456 = vld [vmem:[#allocation16 + $0x7f8] sm:$0xff]
        %2457 = vmatprep.subr.mxu0 %v2232
        %2458 = vmatpush1.msra.mxu0 %v2231
        %2459 = vmatprep.subr.mxu0 %v2230
        %2460 = vmatpush1.msra.mxu0 %v2229
        %2461 = vmatprep.subr.mxu0 %v2228
        %2462 = vmatpush1.msra.mxu0 %v2227
        %2463 = vmatprep.subr.mxu0 %v2226
        %2464 = vmatpush1.msra.mxu0 %v2225
        %2465 = vmatprep.subr.mxu0 %v2224
        %2466 = vmatpush1.msra.mxu0 %v2223
        %2467 = vmatprep.subr.mxu0 %v2222
        %2468 = vmatpush1.msra.mxu0 %v2221
        %2469 = vmatprep.subr.mxu0 %v2220
        %2470 = vmatpush1.msra.mxu0 %v2219
        %2471 = vmatprep.subr.mxu0 %v2218
        %2472 = vmatpush1.msra.mxu0 %v2217
        %2473 = vmatprep.subr.mxu0 %v2216
        %2474 = vmatpush1.msra.mxu0 %v2215
        %2475 = vmatprep.subr.mxu0 %v2214
        %2476 = vmatpush1.msra.mxu0 %v2213
        %2477 = vmatprep.subr.mxu0 %v2212
        %2478 = vmatpush1.msra.mxu0 %v2211
        %2479 = vmatprep.subr.mxu0 %v2210
        %2480 = vmatpush1.msra.mxu0 %v2209
        %2481 = vmatprep.subr.mxu0 %v2208
        %2482 = vmatpush1.msra.mxu0 %v2207
        %2483 = vmatprep.subr.mxu0 %v2206
        %2484 = vmatpush1.msra.mxu0 %v2205
        %2485 = vmatprep.subr.mxu0 %v2204
        %2486 = vmatpush1.msra.mxu0 %v2203
        %2487 = vmatprep.subr.mxu0 %v2202
        %2488 = vmatpush1.msra.mxu0 %v2201
        %2489 = vmatprep.subr.mxu0 %v2264
        %2490 = vmatpush2.msra.mxu0 %v2263
        %2491 = vmatprep.subr.mxu0 %v2262
        %2492 = vmatpush2.msra.mxu0 %v2261
        %2493 = vmatprep.subr.mxu0 %v2260
        %2494 = vmatpush2.msra.mxu0 %v2259
        %2495 = vmatprep.subr.mxu0 %v2258
        %2496 = vmatpush2.msra.mxu0 %v2257
        %2497 = vmatprep.subr.mxu0 %v2256
        %2498 = vmatpush2.msra.mxu0 %v2255
        %2499 = vmatprep.subr.mxu0 %v2254
        %2500 = vmatpush2.msra.mxu0 %v2253
        %2501 = vmatprep.subr.mxu0 %v2252
        %2502 = vmatpush2.msra.mxu0 %v2251
        %2503 = vmatprep.subr.mxu0 %v2250
        %2504 = vmatpush2.msra.mxu0 %v2249
        %2505 = vmatprep.subr.mxu0 %v2248
        %2506 = vmatpush2.msra.mxu0 %v2247
        %2507 = vmatprep.subr.mxu0 %v2246
        %2508 = vmatpush2.msra.mxu0 %v2245
        %2509 = vmatprep.subr.mxu0 %v2244
        %2510 = vmatpush2.msra.mxu0 %v2243
        %2511 = vmatprep.subr.mxu0 %v2242
        %2512 = vmatpush2.msra.mxu0 %v2241
        %2513 = vmatprep.subr.mxu0 %v2240
        %2514 = vmatpush2.msra.mxu0 %v2239
        %2515 = vmatprep.subr.mxu0 %v2238
        %2516 = vmatpush2.msra.mxu0 %v2237
        %2517 = vmatprep.subr.mxu0 %v2236
        %2518 = vmatpush2.msra.mxu0 %v2235
        %2519 = vmatprep.subr.mxu0 %v2234
        %2520 = vmatpush2.msra.mxu0 %v2233
        %2521 = vmatprep.mubr.f32.mxu0 %v2194
        %2522 = vmatmul.mubr.f32.gmra.mxu0 %v2193
        %v2523 = vpop.f32.mrf.mxu0
        %v2524 = vadd.f32 0.0, %v2523
        %v2525 = vpop.f32.mrf.mxu0
        %v2526 = vadd.f32 0.0, %v2525
        %2527 = vdwg.mxu0
        %2528 = vmatprep.subr.mxu0 %v2296
        %2529 = vmatpush1.msra.mxu0 %v2295
        %2530 = vmatprep.subr.mxu0 %v2294
        %2531 = vmatpush1.msra.mxu0 %v2293
        %2532 = vmatprep.subr.mxu0 %v2292
        %2533 = vmatpush1.msra.mxu0 %v2291
        %2534 = vmatprep.subr.mxu0 %v2290
        %2535 = vmatpush1.msra.mxu0 %v2289
        %2536 = vmatprep.subr.mxu0 %v2288
        %2537 = vmatpush1.msra.mxu0 %v2287
        %2538 = vmatprep.subr.mxu0 %v2286
        %2539 = vmatpush1.msra.mxu0 %v2285
        %2540 = vmatprep.subr.mxu0 %v2284
        %2541 = vmatpush1.msra.mxu0 %v2283
        %2542 = vmatprep.subr.mxu0 %v2282
        %2543 = vmatpush1.msra.mxu0 %v2281
        %2544 = vmatprep.subr.mxu0 %v2280
        %2545 = vmatpush1.msra.mxu0 %v2279
        %2546 = vmatprep.subr.mxu0 %v2278
        %2547 = vmatpush1.msra.mxu0 %v2277
        %2548 = vmatprep.subr.mxu0 %v2276
        %2549 = vmatpush1.msra.mxu0 %v2275
        %2550 = vmatprep.subr.mxu0 %v2274
        %2551 = vmatpush1.msra.mxu0 %v2273
        %2552 = vmatprep.subr.mxu0 %v2272
        %2553 = vmatpush1.msra.mxu0 %v2271
        %2554 = vmatprep.subr.mxu0 %v2270
        %2555 = vmatpush1.msra.mxu0 %v2269
        %2556 = vmatprep.subr.mxu0 %v2268
        %2557 = vmatpush1.msra.mxu0 %v2267
        %2558 = vmatprep.subr.mxu0 %v2266
        %2559 = vmatpush1.msra.mxu0 %v2265
        %2560 = vmatprep.subr.mxu0 %v2328
        %2561 = vmatpush2.msra.mxu0 %v2327
        %2562 = vmatprep.subr.mxu0 %v2326
        %2563 = vmatpush2.msra.mxu0 %v2325
        %2564 = vmatprep.subr.mxu0 %v2324
        %2565 = vmatpush2.msra.mxu0 %v2323
        %2566 = vmatprep.subr.mxu0 %v2322
        %2567 = vmatpush2.msra.mxu0 %v2321
        %2568 = vmatprep.subr.mxu0 %v2320
        %2569 = vmatpush2.msra.mxu0 %v2319
        %2570 = vmatprep.subr.mxu0 %v2318
        %2571 = vmatpush2.msra.mxu0 %v2317
        %2572 = vmatprep.subr.mxu0 %v2316
        %2573 = vmatpush2.msra.mxu0 %v2315
        %2574 = vmatprep.subr.mxu0 %v2314
        %2575 = vmatpush2.msra.mxu0 %v2313
        %2576 = vmatprep.subr.mxu0 %v2312
        %2577 = vmatpush2.msra.mxu0 %v2311
        %2578 = vmatprep.subr.mxu0 %v2310
        %2579 = vmatpush2.msra.mxu0 %v2309
        %2580 = vmatprep.subr.mxu0 %v2308
        %2581 = vmatpush2.msra.mxu0 %v2307
        %2582 = vmatprep.subr.mxu0 %v2306
        %2583 = vmatpush2.msra.mxu0 %v2305
        %2584 = vmatprep.subr.mxu0 %v2304
        %2585 = vmatpush2.msra.mxu0 %v2303
        %2586 = vmatprep.subr.mxu0 %v2302
        %2587 = vmatpush2.msra.mxu0 %v2301
        %2588 = vmatprep.subr.mxu0 %v2300
        %2589 = vmatpush2.msra.mxu0 %v2299
        %2590 = vmatprep.subr.mxu0 %v2298
        %2591 = vmatpush2.msra.mxu0 %v2297
        %2592 = vmatprep.mubr.f32.mxu0 %v2196
        %2593 = vmatmul.mubr.f32.gmra.mxu0 %v2195
        %v2594 = vpop.f32.mrf.mxu0
        %v2595 = vadd.f32 %v2524, %v2594
        %v2596 = vpop.f32.mrf.mxu0
        %v2597 = vadd.f32 %v2526, %v2596
        %2598 = vdwg.mxu0
        %2599 = vmatprep.subr.mxu0 %v2360
        %2600 = vmatpush1.msra.mxu0 %v2359
        %2601 = vmatprep.subr.mxu0 %v2358
        %2602 = vmatpush1.msra.mxu0 %v2357
        %2603 = vmatprep.subr.mxu0 %v2356
        %2604 = vmatpush1.msra.mxu0 %v2355
        %2605 = vmatprep.subr.mxu0 %v2354
        %2606 = vmatpush1.msra.mxu0 %v2353
        %2607 = vmatprep.subr.mxu0 %v2352
        %2608 = vmatpush1.msra.mxu0 %v2351
        %2609 = vmatprep.subr.mxu0 %v2350
        %2610 = vmatpush1.msra.mxu0 %v2349
        %2611 = vmatprep.subr.mxu0 %v2348
        %2612 = vmatpush1.msra.mxu0 %v2347
        %2613 = vmatprep.subr.mxu0 %v2346
        %2614 = vmatpush1.msra.mxu0 %v2345
        %2615 = vmatprep.subr.mxu0 %v2344
        %2616 = vmatpush1.msra.mxu0 %v2343
        %2617 = vmatprep.subr.mxu0 %v2342
        %2618 = vmatpush1.msra.mxu0 %v2341
        %2619 = vmatprep.subr.mxu0 %v2340
        %2620 = vmatpush1.msra.mxu0 %v2339
        %2621 = vmatprep.subr.mxu0 %v2338
        %2622 = vmatpush1.msra.mxu0 %v2337
        %2623 = vmatprep.subr.mxu0 %v2336
        %2624 = vmatpush1.msra.mxu0 %v2335
        %2625 = vmatprep.subr.mxu0 %v2334
        %2626 = vmatpush1.msra.mxu0 %v2333
        %2627 = vmatprep.subr.mxu0 %v2332
        %2628 = vmatpush1.msra.mxu0 %v2331
        %2629 = vmatprep.subr.mxu0 %v2330
        %2630 = vmatpush1.msra.mxu0 %v2329
        %2631 = vmatprep.subr.mxu0 %v2392
        %2632 = vmatpush2.msra.mxu0 %v2391
        %2633 = vmatprep.subr.mxu0 %v2390
        %2634 = vmatpush2.msra.mxu0 %v2389
        %2635 = vmatprep.subr.mxu0 %v2388
        %2636 = vmatpush2.msra.mxu0 %v2387
        %2637 = vmatprep.subr.mxu0 %v2386
        %2638 = vmatpush2.msra.mxu0 %v2385
        %2639 = vmatprep.subr.mxu0 %v2384
        %2640 = vmatpush2.msra.mxu0 %v2383
        %2641 = vmatprep.subr.mxu0 %v2382
        %2642 = vmatpush2.msra.mxu0 %v2381
        %2643 = vmatprep.subr.mxu0 %v2380
        %2644 = vmatpush2.msra.mxu0 %v2379
        %2645 = vmatprep.subr.mxu0 %v2378
        %2646 = vmatpush2.msra.mxu0 %v2377
        %2647 = vmatprep.subr.mxu0 %v2376
        %2648 = vmatpush2.msra.mxu0 %v2375
        %2649 = vmatprep.subr.mxu0 %v2374
        %2650 = vmatpush2.msra.mxu0 %v2373
        %2651 = vmatprep.subr.mxu0 %v2372
        %2652 = vmatpush2.msra.mxu0 %v2371
        %2653 = vmatprep.subr.mxu0 %v2370
        %2654 = vmatpush2.msra.mxu0 %v2369
        %2655 = vmatprep.subr.mxu0 %v2368
        %2656 = vmatpush2.msra.mxu0 %v2367
        %2657 = vmatprep.subr.mxu0 %v2366
        %2658 = vmatpush2.msra.mxu0 %v2365
        %2659 = vmatprep.subr.mxu0 %v2364
        %2660 = vmatpush2.msra.mxu0 %v2363
        %2661 = vmatprep.subr.mxu0 %v2362
        %2662 = vmatpush2.msra.mxu0 %v2361
        %2663 = vmatprep.mubr.f32.mxu0 %v2198
        %2664 = vmatmul.mubr.f32.gmra.mxu0 %v2197
        %v2665 = vpop.f32.mrf.mxu0
        %v2666 = vadd.f32 %v2595, %v2665
        %v2667 = vpop.f32.mrf.mxu0
        %v2668 = vadd.f32 %v2597, %v2667
        %2669 = vdwg.mxu0
        %2670 = vmatprep.subr.mxu0 %v2424
        %2671 = vmatpush1.msra.mxu0 %v2423
        %2672 = vmatprep.subr.mxu0 %v2422
        %2673 = vmatpush1.msra.mxu0 %v2421
        %2674 = vmatprep.subr.mxu0 %v2420
        %2675 = vmatpush1.msra.mxu0 %v2419
        %2676 = vmatprep.subr.mxu0 %v2418
        %2677 = vmatpush1.msra.mxu0 %v2417
        %2678 = vmatprep.subr.mxu0 %v2416
        %2679 = vmatpush1.msra.mxu0 %v2415
        %2680 = vmatprep.subr.mxu0 %v2414
        %2681 = vmatpush1.msra.mxu0 %v2413
        %2682 = vmatprep.subr.mxu0 %v2412
        %2683 = vmatpush1.msra.mxu0 %v2411
        %2684 = vmatprep.subr.mxu0 %v2410
        %2685 = vmatpush1.msra.mxu0 %v2409
        %2686 = vmatprep.subr.mxu0 %v2408
        %2687 = vmatpush1.msra.mxu0 %v2407
        %2688 = vmatprep.subr.mxu0 %v2406
        %2689 = vmatpush1.msra.mxu0 %v2405
        %2690 = vmatprep.subr.mxu0 %v2404
        %2691 = vmatpush1.msra.mxu0 %v2403
        %2692 = vmatprep.subr.mxu0 %v2402
        %2693 = vmatpush1.msra.mxu0 %v2401
        %2694 = vmatprep.subr.mxu0 %v2400
        %2695 = vmatpush1.msra.mxu0 %v2399
        %2696 = vmatprep.subr.mxu0 %v2398
        %2697 = vmatpush1.msra.mxu0 %v2397
        %2698 = vmatprep.subr.mxu0 %v2396
        %2699 = vmatpush1.msra.mxu0 %v2395
        %2700 = vmatprep.subr.mxu0 %v2394
        %2701 = vmatpush1.msra.mxu0 %v2393
        %2702 = vmatprep.subr.mxu0 %v2456
        %2703 = vmatpush2.msra.mxu0 %v2455
        %2704 = vmatprep.subr.mxu0 %v2454
        %2705 = vmatpush2.msra.mxu0 %v2453
        %2706 = vmatprep.subr.mxu0 %v2452
        %2707 = vmatpush2.msra.mxu0 %v2451
        %2708 = vmatprep.subr.mxu0 %v2450
        %2709 = vmatpush2.msra.mxu0 %v2449
        %2710 = vmatprep.subr.mxu0 %v2448
        %2711 = vmatpush2.msra.mxu0 %v2447
        %2712 = vmatprep.subr.mxu0 %v2446
        %2713 = vmatpush2.msra.mxu0 %v2445
        %2714 = vmatprep.subr.mxu0 %v2444
        %2715 = vmatpush2.msra.mxu0 %v2443
        %2716 = vmatprep.subr.mxu0 %v2442
        %2717 = vmatpush2.msra.mxu0 %v2441
        %2718 = vmatprep.subr.mxu0 %v2440
        %2719 = vmatpush2.msra.mxu0 %v2439
        %2720 = vmatprep.subr.mxu0 %v2438
        %2721 = vmatpush2.msra.mxu0 %v2437
        %2722 = vmatprep.subr.mxu0 %v2436
        %2723 = vmatpush2.msra.mxu0 %v2435
        %2724 = vmatprep.subr.mxu0 %v2434
        %2725 = vmatpush2.msra.mxu0 %v2433
        %2726 = vmatprep.subr.mxu0 %v2432
        %2727 = vmatpush2.msra.mxu0 %v2431
        %2728 = vmatprep.subr.mxu0 %v2430
        %2729 = vmatpush2.msra.mxu0 %v2429
        %2730 = vmatprep.subr.mxu0 %v2428
        %2731 = vmatpush2.msra.mxu0 %v2427
        %2732 = vmatprep.subr.mxu0 %v2426
        %2733 = vmatpush2.msra.mxu0 %v2425
        %2734 = vmatprep.mubr.f32.mxu0 %v2200
        %2735 = vmatmul.mubr.f32.gmra.mxu0 %v2199
        %v2736 = vpop.f32.mrf.mxu0
        %v2737 = vadd.f32 %v2666, %v2736
        %v2738 = vpop.f32.mrf.mxu0
        %v2739 = vadd.f32 %v2668, %v2738
        %2740 = vdwg.mxu0
        %v2741 = vadd.f32 %v1509, %v2737
        %v2742 = vadd.f32 %v1510, %v2739
        %v2743 = vld [vmem:[%s12] sm:$0x3]
        %v2745 = vlaneseq
        %v2746 = vshrl.u32 %v2745, 7
        %v2747 = vsub.s32 0, %v2746
        %v2748 = vrot.slane %v2743, %v2747
        %v2749 = vlaneseq
        %v2750 = vshrl.u32 %v2749, 7
        %v2751 = vsub.s32 1, %v2750
        %v2752 = vrot.slane %v2743, %v2751
        %v2755 = vadd.f32 %v2741, %v2748
        %v2756 = vadd.f32 %v2742, %v2752
        %2757 = vst [vmem:[%s564] sm:$0xff] %v2755
        %2758 = vst [vmem:[%s564 + $0x8] sm:$0xff] %v2756
        %s2759 = sand.u32 %s320, 1
        %s2760 = scalar_lea.sflag [#allocation4], %s2759
        %s2761 = sand.u32 %s320, 1
        %s2762 = smul.addr %s2761, 16
        %s2763 = scalar_lea.vmem [#allocation17], %s2762
        // Predicated region
        $region109: #{tpu_custom_call.1} parent=71 // pred_check
          %p2764 = pneg %p330
        $region110: #{tpu_custom_call.1} parent=71 // pred_check_branch
          %2766 = sbr.rel (%p2764) target = $region112
        $region111: #{tpu_custom_call.1} parent=71 // pred_region
          %s2768 = ssub.s32 256, 256
          %2769 = vsyncadd %s2760, %s2768
          %s2770 = smul.addr %s34, 2
          %s2771 = smul.addr %s2770, 128
          %s2772 = scalar_lea.hbm %s13, %s2771
          %s2774 = sshll.u32 %s2763, 4
          %s2775 = int_to_ptr.vmem [resolvable:$true] %s2774
          %2777 = dma.vmem_to_hbm [thread:$0]  %s2775, 256, %s2772, %s2760
        $region112: #{tpu_custom_call.1} parent=71 // pred_fallthru
          _
      $region72: #{tpu_custom_call.1} parent=5 // pred_fallthru
        _
      %p2778 = scmp.le.s32.totalorder 2, %s29
      // Predicated region
      $region113: #{tpu_custom_call.1} parent=5 // pred_check
        %p2779 = pneg %p2778
      $region114: #{tpu_custom_call.1} parent=5 // pred_check_branch
        %2781 = sbr.rel (%p2779) target = $region116
      $region115: #{tpu_custom_call.1} parent=5 // pred_region
        %s2782 = ssub.s32 %s29, 2
        // Predicated region
        $region117: #{tpu_custom_call.1} parent=115 // pred_check
          %p2783 = pneg %p336
        $region118: #{tpu_custom_call.1} parent=115 // pred_check_branch
          %2785 = sbr.rel (%p2783) target = $region120
        $region119: #{tpu_custom_call.1} parent=115 // pred_region
          %s2786 = sand.u32 %s321, 1
          %s2787 = scalar_lea.sflag [#allocation4], %s2786
          %s2788 = sand.u32 %s321, 1
          %s2789 = smul.addr %s2788, 16
          %s2790 = scalar_lea.vmem [#allocation17], %s2789
          %2791 = dma.done %s2787, 256
        $region120: #{tpu_custom_call.1} parent=115 // pred_fallthru
          _
      $region116: #{tpu_custom_call.1} parent=5 // pred_fallthru
        _
    $region6: #{tpu_custom_call.1} parent=1 // loop_footer
      %s33 = sadd.s32 1, %s29
    $region7: #{tpu_custom_call.1} parent=1 // loop_footer_branch
      %28 = sbr.rel target = $region3
    $region8: #{tpu_custom_call.1} parent=1 // loop_exit
      _
    %2792 = vsyncpa [#allocation3], 1
    %s2793 = scalar_lea.sflag [#allocation3], 1
    %2794 = vsyncpa %s2793, 1
    %2795 = vsyncpa [#allocation6], 1
    %2796 = vsyncpa [#allocation9], 1
    %2797 = vsyncpa [#allocation12], 1
    %2798 = vsyncpa [#allocation15], 1
    %2799 = vsyncpa [#allocation4], 1
    %s2800 = scalar_lea.sflag [#allocation4], 1
    %2801 = vsyncpa %s2800, 1

</llo_original>
